<compile_context>
chip_gen: v7x
topology: tpu7x:2x2x1
jax: 0.10.0
libtpu: 0.0.40
codegen_flags: <defaults>
</compile_context>

<pallas_src>
import functools

import jax
import jax.numpy as jnp
from jax.experimental import pallas as pl
from jax.experimental.pallas import tpu as pltpu

LANE = 128


def _round_up(x, m):
    return ((x + m - 1) // m) * m


# --------------------------------------------------------------------------- #
# Fused bottleneck kernel (one grid step == one image)                         #
# --------------------------------------------------------------------------- #
def _bottleneck_kernel(x_ref, w1_ref, sb1_ref, w2_ref, sb2_ref, w3_ref, sb3_ref,
                       o_ref, o1p_ref, *, h, w, d):
    """conv1(1x1)+BN+ReLU -> conv2(3x3)+BN+ReLU -> conv3(1x1)+BN -> +id -> ReLU.

    x_ref  : (1, H, W, Cin_p)   f32   input block (also the residual)
    w1_ref : (Cin_p, Cp)        bf16
    sb1_ref: (2, Cp)            f32   row0 = BN scale, row1 = BN shift
    w2_ref : (9, Cp, Cp)        bf16  one (Cin, Cout) matrix per 3x3 tap
    sb2_ref: (2, Cp)            f32
    w3_ref : (Cp, Cout_p)       bf16
    sb3_ref: (2, Cout_p)        f32
    o_ref  : (1, H, W, Cout_p)  f32
    o1p_ref: (H+2d, W+2d, Cp)   bf16  VMEM scratch (halo-padded conv1 output)
    """
    cp = w1_ref.shape[1]

    x = x_ref[...].reshape(h * w, x_ref.shape[-1])           # (M, Cin_p) f32

    # ---- conv1: 1x1 -> BN -> ReLU, bf16 into the halo-padded scratch --------
    y1 = jnp.dot(x.astype(jnp.bfloat16), w1_ref[...],
                 preferred_element_type=jnp.float32)
    y1 = jnp.maximum(y1 * sb1_ref[0:1, :] + sb1_ref[1:2, :], 0.0)
    o1p_ref[...] = jnp.zeros_like(o1p_ref)                   # zero the halo
    o1p_ref[d:d + h, d:d + w, :] = y1.astype(jnp.bfloat16).reshape(h, w, cp)

    # ---- conv2: 3x3 (padding=dilation, stride=1) as 9 accumulated matmuls ---
    acc = jnp.zeros((h * w, cp), jnp.float32)
    for kh in range(3):
        for kw in range(3):
            tap = o1p_ref[kh * d:kh * d + h, kw * d:kw * d + w, :]
            acc += jnp.dot(tap.reshape(h * w, cp), w2_ref[kh * 3 + kw],
                           preferred_element_type=jnp.float32)
    y2 = jnp.maximum(acc * sb2_ref[0:1, :] + sb2_ref[1:2, :], 0.0)

    # ---- conv3: 1x1 -> BN, residual add + final ReLU in the same epilogue ---
    y3 = jnp.dot(y2.astype(jnp.bfloat16), w3_ref[...],
                 preferred_element_type=jnp.float32)
    y3 = y3 * sb3_ref[0:1, :] + sb3_ref[1:2, :] + x
    o_ref[...] = jnp.maximum(y3, 0.0).reshape(1, h, w, -1).astype(o_ref.dtype)


# --------------------------------------------------------------------------- #
# Parameter preparation (done once, outside the kernel)                        #
# --------------------------------------------------------------------------- #
def _bn_scale_shift(bn, c_pad, eps=1e-5):
    """Fold eval-mode BatchNorm into a packed (2, c_pad) [scale; shift]."""
    gamma, beta, mean, var = bn
    scale = gamma / jnp.sqrt(var + eps)
    shift = beta - mean * scale
    sb = jnp.stack([scale, shift], axis=0).astype(jnp.float32)     # (2, C)
    return jnp.pad(sb, ((0, 0), (0, c_pad - sb.shape[1])))


def _w_1x1_to_mat(w_oihw, cin_pad, cout_pad):
    cout, cin = w_oihw.shape[0], w_oihw.shape[1]
    wm = w_oihw.reshape(cout, cin).T                               # (Cin, Cout)
    wm = jnp.pad(wm, ((0, cin_pad - cin), (0, cout_pad - cout)))
    return wm.astype(jnp.bfloat16)


def _w_3x3_to_taps(w_oihw, cin_pad, cout_pad):
    cout, cin, kh, kw = w_oihw.shape
    wt = jnp.transpose(w_oihw, (2, 3, 1, 0))                       # (3,3,Cin,Cout)
    wt = jnp.pad(wt, ((0, 0), (0, 0), (0, cin_pad - cin), (0, cout_pad - cout)))
    return wt.reshape(kh * kw, cin_pad, cout_pad).astype(jnp.bfloat16)


# --------------------------------------------------------------------------- #
# Bottleneck forward                                                           #
# --------------------------------------------------------------------------- #
def bottleneck_forward(x_nchw, params, stride=1, dilation=1):
    """Bottleneck.forward(x) (statistic=False path, eval-mode BN fold)."""
    assert stride == 1

    n, cin, h, w = x_nchw.shape
    planes = params["w1"].shape[0]
    cout = params["w3"].shape[0]
    assert cout == cin, "residual add requires inplanes == planes * expansion"

    cin_p = _round_up(cin, LANE)
    cp_p = _round_up(planes, LANE)
    cout_p = _round_up(cout, LANE)
    d = dilation

    # NCHW -> lane-padded NHWC once at the module boundary.
    x = jnp.transpose(x_nchw, (0, 2, 3, 1)).astype(jnp.float32)
    x = jnp.pad(x, ((0, 0), (0, 0), (0, 0), (0, cin_p - cin)))

    w1 = _w_1x1_to_mat(params["w1"], cin_p, cp_p)
    sb1 = _bn_scale_shift(params["bn1"], cp_p)
    w2 = _w_3x3_to_taps(params["w2"], cp_p, cp_p)
    sb2 = _bn_scale_shift(params["bn2"], cp_p)
    w3 = _w_1x1_to_mat(params["w3"], cp_p, cout_p)
    sb3 = _bn_scale_shift(params["bn3"], cout_p)

    kernel = functools.partial(_bottleneck_kernel, h=h, w=w, d=d)

    flops = 2 * n * h * w * (cin_p * cp_p + 9 * cp_p * cp_p + cp_p * cout_p)
    bytes_accessed = (x.size * 4 + n * h * w * cout_p * 4
                      + (w1.size + w2.size + w3.size) * 2
                      + (sb1.size + sb2.size + sb3.size) * 4)

    out = pl.pallas_call(
        kernel,
        out_shape=jax.ShapeDtypeStruct((n, h, w, cout_p), jnp.float32),
        grid_spec=pltpu.PrefetchScalarGridSpec(
            num_scalar_prefetch=0,
            grid=(n,),
            in_specs=[
                pl.BlockSpec((1, h, w, cin_p), lambda i: (i, 0, 0, 0)),   # x
                pl.BlockSpec((cin_p, cp_p), lambda i: (0, 0)),            # w1
                pl.BlockSpec((2, cp_p), lambda i: (0, 0)),                # sb1
                pl.BlockSpec((9, cp_p, cp_p), lambda i: (0, 0, 0)),       # w2
                pl.BlockSpec((2, cp_p), lambda i: (0, 0)),                # sb2
                pl.BlockSpec((cp_p, cout_p), lambda i: (0, 0)),           # w3
                pl.BlockSpec((2, cout_p), lambda i: (0, 0)),              # sb3
            ],
            out_specs=pl.BlockSpec((1, h, w, cout_p), lambda i: (i, 0, 0, 0)),
            scratch_shapes=[
                pltpu.VMEM((h + 2 * d, w + 2 * d, cp_p), jnp.bfloat16)],
        ),
        compiler_params=pltpu.CompilerParams(
            dimension_semantics=("parallel",)),
        cost_estimate=pl.CostEstimate(
            flops=int(flops), transcendentals=0,
            bytes_accessed=int(bytes_accessed)),
    )(x, w1, sb1, w2, sb2, w3, sb3)

    out = out[..., :cout]
    return jnp.transpose(out, (0, 3, 1, 2))                  # back to NCHW


if __name__ == "__main__":
    # Bottleneck(inplanes=16, planes=4): out channels = planes*4 = 16 == inplanes,
    # so downsample=None and the identity residual is valid.
    N, H, W = 2, 16, 16
    inplanes, planes, expansion = 16, 4, 4

    key = jax.random.PRNGKey(0)
    ks = jax.random.split(key, 16)

    x = jax.random.normal(ks[0], (N, inplanes, H, W), jnp.float32)

    def kaiming(k, shape):
        # kaiming_init(mode='fan_out', nonlinearity='relu', distribution='normal')
        fan_out = shape[0] * shape[2] * shape[3]
        return ((2.0 / fan_out) ** 0.5) * jax.random.normal(k, shape, jnp.float32)

    def bn_params(kg, kb, km, kv, c):
        gamma = 1.0 + 0.1 * jax.random.normal(kg, (c,), jnp.float32)
        beta = 0.1 * jax.random.normal(kb, (c,), jnp.float32)
        mean = 0.1 * jax.random.normal(km, (c,), jnp.float32)
        var = 0.5 + jax.random.uniform(kv, (c,), jnp.float32)
        return (gamma, beta, mean, var)

    params = {
        "w1": kaiming(ks[1], (planes, inplanes, 1, 1)),
        "bn1": bn_params(ks[2], ks[3], ks[4], ks[5], planes),
        "w2": kaiming(ks[6], (planes, planes, 3, 3)),
        "bn2": bn_params(ks[7], ks[8], ks[9], ks[10], planes),
        "w3": kaiming(ks[11], (planes * expansion, planes, 1, 1)),
        "bn3": bn_params(ks[12], ks[13], ks[14], ks[15], planes * expansion),
    }

    out = jax.block_until_ready(bottleneck_forward(x, params))

    # Pure-JAX reference: same eval-mode BN fold; matmul operands rounded to
    # bf16 (matching the MXU inputs) with f32 accumulation.
    def _bf16(v):
        return v.astype(jnp.bfloat16).astype(jnp.float32)

    def ref_conv_bn(hx, wgt, bnp, padding=0, dilation=1, relu=True, eps=1e-5):
        y = jax.lax.conv_general_dilated(
            _bf16(hx), _bf16(wgt), window_strides=(1, 1),
            padding=((padding, padding), (padding, padding)),
            rhs_dilation=(dilation, dilation),
            dimension_numbers=("NCHW", "OIHW", "NCHW"))
        g, b, mu, var = bnp
        s = g / jnp.sqrt(var + eps)
        y = y * s[None, :, None, None] + (b - mu * s)[None, :, None, None]
        return jnp.maximum(y, 0.0) if relu else y

    ref = ref_conv_bn(x, params["w1"], params["bn1"])
    ref = ref_conv_bn(ref, params["w2"], params["bn2"], padding=1)
    ref = ref_conv_bn(ref, params["w3"], params["bn3"], relu=False)
    ref = jnp.maximum(ref + x, 0.0)

    assert out.shape == (N, planes * expansion, H, W)
    assert jnp.allclose(out, ref, atol=2e-2, rtol=2e-2), \
        float(jnp.max(jnp.abs(out - ref)))
    print("KERNEL_OK")
</pallas_src>

<mosaic_0001>
module attributes {stable_mosaic.version = 11 : i64} {
  func.func @_bottleneck_kernel(%arg0: i32, %arg1: memref<1x16x16x128xf32, #tpu.memory_space<vmem>>, %arg2: memref<128x128xbf16, #tpu.memory_space<vmem>>, %arg3: memref<2x128xf32, #tpu.memory_space<vmem>>, %arg4: memref<9x128x128xbf16, #tpu.memory_space<vmem>>, %arg5: memref<2x128xf32, #tpu.memory_space<vmem>>, %arg6: memref<128x128xbf16, #tpu.memory_space<vmem>>, %arg7: memref<2x128xf32, #tpu.memory_space<vmem>>, %arg8: memref<1x16x16x128xf32, #tpu.memory_space<vmem>>, %arg9: memref<18x18x128xbf16, #tpu.memory_space<vmem>>) attributes {dimension_semantics = [#tpu.dimension_semantics<parallel>], iteration_bounds = array<i64: 2>, scalar_prefetch = 0 : i64, scratch_operands = 1 : i64, tpu.core_type = #tpu.core_type<tc>, window_params = [{transform_indices = @transform_0, window_bounds = array<i64: 1, 16, 16, 128>}, {pipeline_mode = #tpu.pipeline_mode<synchronous>, transform_indices = @transform_1, window_bounds = array<i64: 128, 128>}, {pipeline_mode = #tpu.pipeline_mode<synchronous>, transform_indices = @transform_2, window_bounds = array<i64: 2, 128>}, {pipeline_mode = #tpu.pipeline_mode<synchronous>, transform_indices = @transform_3, window_bounds = array<i64: 9, 128, 128>}, {pipeline_mode = #tpu.pipeline_mode<synchronous>, transform_indices = @transform_4, window_bounds = array<i64: 2, 128>}, {pipeline_mode = #tpu.pipeline_mode<synchronous>, transform_indices = @transform_5, window_bounds = array<i64: 128, 128>}, {pipeline_mode = #tpu.pipeline_mode<synchronous>, transform_indices = @transform_6, window_bounds = array<i64: 2, 128>}, {transform_indices = @transform_7, window_bounds = array<i64: 1, 16, 16, 128>}]} {
    %c0 = arith.constant 0 : index
    %c0_0 = arith.constant 0 : index
    %c0_1 = arith.constant 0 : index
    %c0_2 = arith.constant 0 : index
    %0 = vector.load %arg1[%c0, %c0_0, %c0_1, %c0_2] : memref<1x16x16x128xf32, #tpu.memory_space<vmem>>, vector<1x16x16x128xf32>
    %1 = vector.shape_cast %0 : vector<1x16x16x128xf32> to vector<256x128xf32>
    %2 = arith.truncf %1 : vector<256x128xf32> to vector<256x128xbf16>
    %c0_3 = arith.constant 0 : index
    %c0_4 = arith.constant 0 : index
    %3 = vector.load %arg2[%c0_3, %c0_4] : memref<128x128xbf16, #tpu.memory_space<vmem>>, vector<128x128xbf16>
    %cst = arith.constant dense<0.000000e+00> : vector<256x128xf32>
    %4 = tpu.matmul %2, %3, %cst {dimension_numbers = #tpu.dot_dimension_numbers<[1], [0], [0], [1], [0, 0, 1, 1], [], []>} : vector<256x128xbf16>, vector<128x128xbf16>, vector<256x128xf32> -> vector<256x128xf32>
    %c0_5 = arith.constant 0 : index
    %c0_6 = arith.constant 0 : index
    %5 = vector.load %arg3[%c0_5, %c0_6] : memref<2x128xf32, #tpu.memory_space<vmem>>, vector<1x128xf32>
    %6 = vector.broadcast %5 : vector<1x128xf32> to vector<256x128xf32>
    %7 = arith.mulf %4, %6 : vector<256x128xf32>
    %c1 = arith.constant 1 : index
    %c0_7 = arith.constant 0 : index
    %8 = vector.load %arg3[%c1, %c0_7] : memref<2x128xf32, #tpu.memory_space<vmem>>, vector<1x128xf32>
    %9 = vector.broadcast %8 : vector<1x128xf32> to vector<256x128xf32>
    %10 = arith.addf %7, %9 : vector<256x128xf32>
    %cst_8 = arith.constant 0.000000e+00 : f32
    %11 = vector.broadcast %cst_8 : f32 to vector<256x128xf32>
    %12 = arith.maximumf %10, %11 : vector<256x128xf32>
    %cst_9 = arith.constant 0.000000e+00 : bf16
    %13 = vector.broadcast %cst_9 : bf16 to vector<18x18x128xbf16>
    %c0_10 = arith.constant 0 : index
    %c0_11 = arith.constant 0 : index
    %c0_12 = arith.constant 0 : index
    %14 = vector.load %arg9[%c0_10, %c0_11, %c0_12] : memref<18x18x128xbf16, #tpu.memory_space<vmem>>, vector<18x18x128xbf16>
    tpu.vector_store %arg9[%c0_10, %c0_11, %c0_12], %13 {strides = array<i32>} : memref<18x18x128xbf16, #tpu.memory_space<vmem>>, vector<18x18x128xbf16>,
    %15 = arith.truncf %12 : vector<256x128xf32> to vector<256x128xbf16>
    %16 = vector.shape_cast %15 : vector<256x128xbf16> to vector<16x16x128xbf16>
    %c1_13 = arith.constant 1 : index
    %c1_14 = arith.constant 1 : index
    %c0_15 = arith.constant 0 : index
    %17 = vector.load %arg9[%c1_13, %c1_14, %c0_15] : memref<18x18x128xbf16, #tpu.memory_space<vmem>>, vector<16x16x128xbf16>
    tpu.vector_store %arg9[%c1_13, %c1_14, %c0_15], %16 {strides = array<i32>} : memref<18x18x128xbf16, #tpu.memory_space<vmem>>, vector<16x16x128xbf16>,
    %cst_16 = arith.constant 0.000000e+00 : f32
    %18 = vector.broadcast %cst_16 : f32 to vector<256x128xf32>
    %c0_17 = arith.constant 0 : index
    %c0_18 = arith.constant 0 : index
    %c0_19 = arith.constant 0 : index
    %19 = vector.load %arg9[%c0_17, %c0_18, %c0_19] : memref<18x18x128xbf16, #tpu.memory_space<vmem>>, vector<16x16x128xbf16>
    %20 = vector.shape_cast %19 : vector<16x16x128xbf16> to vector<256x128xbf16>
    %c0_20 = arith.constant 0 : index
    %c0_21 = arith.constant 0 : index
    %c0_22 = arith.constant 0 : index
    %21 = vector.load %arg4[%c0_20, %c0_21, %c0_22] : memref<9x128x128xbf16, #tpu.memory_space<vmem>>, vector<1x128x128xbf16>
    %22 = vector.shape_cast %21 : vector<1x128x128xbf16> to vector<128x128xbf16>
    %cst_23 = arith.constant dense<0.000000e+00> : vector<256x128xf32>
    %23 = tpu.matmul %20, %22, %cst_23 {dimension_numbers = #tpu.dot_dimension_numbers<[1], [0], [0], [1], [0, 0, 1, 1], [], []>} : vector<256x128xbf16>, vector<128x128xbf16>, vector<256x128xf32> -> vector<256x128xf32>
    %24 = arith.addf %18, %23 : vector<256x128xf32>
    %c0_24 = arith.constant 0 : index
    %c1_25 = arith.constant 1 : index
    %c0_26 = arith.constant 0 : index
    %25 = vector.load %arg9[%c0_24, %c1_25, %c0_26] : memref<18x18x128xbf16, #tpu.memory_space<vmem>>, vector<16x16x128xbf16>
    %26 = vector.shape_cast %25 : vector<16x16x128xbf16> to vector<256x128xbf16>
    %c1_27 = arith.constant 1 : index
    %c0_28 = arith.constant 0 : index
    %c0_29 = arith.constant 0 : index
    %27 = vector.load %arg4[%c1_27, %c0_28, %c0_29] : memref<9x128x128xbf16, #tpu.memory_space<vmem>>, vector<1x128x128xbf16>
    %28 = vector.shape_cast %27 : vector<1x128x128xbf16> to vector<128x128xbf16>
    %cst_30 = arith.constant dense<0.000000e+00> : vector<256x128xf32>
    %29 = tpu.matmul %26, %28, %cst_30 {dimension_numbers = #tpu.dot_dimension_numbers<[1], [0], [0], [1], [0, 0, 1, 1], [], []>} : vector<256x128xbf16>, vector<128x128xbf16>, vector<256x128xf32> -> vector<256x128xf32>
    %30 = arith.addf %24, %29 : vector<256x128xf32>
    %c0_31 = arith.constant 0 : index
    %c2 = arith.constant 2 : index
    %c0_32 = arith.constant 0 : index
    %31 = vector.load %arg9[%c0_31, %c2, %c0_32] : memref<18x18x128xbf16, #tpu.memory_space<vmem>>, vector<16x16x128xbf16>
    %32 = vector.shape_cast %31 : vector<16x16x128xbf16> to vector<256x128xbf16>
    %c2_33 = arith.constant 2 : index
    %c0_34 = arith.constant 0 : index
    %c0_35 = arith.constant 0 : index
    %33 = vector.load %arg4[%c2_33, %c0_34, %c0_35] : memref<9x128x128xbf16, #tpu.memory_space<vmem>>, vector<1x128x128xbf16>
    %34 = vector.shape_cast %33 : vector<1x128x128xbf16> to vector<128x128xbf16>
    %cst_36 = arith.constant dense<0.000000e+00> : vector<256x128xf32>
    %35 = tpu.matmul %32, %34, %cst_36 {dimension_numbers = #tpu.dot_dimension_numbers<[1], [0], [0], [1], [0, 0, 1, 1], [], []>} : vector<256x128xbf16>, vector<128x128xbf16>, vector<256x128xf32> -> vector<256x128xf32>
    %36 = arith.addf %30, %35 : vector<256x128xf32>
    %c1_37 = arith.constant 1 : index
    %c0_38 = arith.constant 0 : index
    %c0_39 = arith.constant 0 : index
    %37 = vector.load %arg9[%c1_37, %c0_38, %c0_39] : memref<18x18x128xbf16, #tpu.memory_space<vmem>>, vector<16x16x128xbf16>
    %38 = vector.shape_cast %37 : vector<16x16x128xbf16> to vector<256x128xbf16>
    %c3 = arith.constant 3 : index
    %c0_40 = arith.constant 0 : index
    %c0_41 = arith.constant 0 : index
    %39 = vector.load %arg4[%c3, %c0_40, %c0_41] : memref<9x128x128xbf16, #tpu.memory_space<vmem>>, vector<1x128x128xbf16>
    %40 = vector.shape_cast %39 : vector<1x128x128xbf16> to vector<128x128xbf16>
    %cst_42 = arith.constant dense<0.000000e+00> : vector<256x128xf32>
    %41 = tpu.matmul %38, %40, %cst_42 {dimension_numbers = #tpu.dot_dimension_numbers<[1], [0], [0], [1], [0, 0, 1, 1], [], []>} : vector<256x128xbf16>, vector<128x128xbf16>, vector<256x128xf32> -> vector<256x128xf32>
    %42 = arith.addf %36, %41 : vector<256x128xf32>
    %c1_43 = arith.constant 1 : index
    %c1_44 = arith.constant 1 : index
    %c0_45 = arith.constant 0 : index
    %43 = vector.load %arg9[%c1_43, %c1_44, %c0_45] : memref<18x18x128xbf16, #tpu.memory_space<vmem>>, vector<16x16x128xbf16>
    %44 = vector.shape_cast %43 : vector<16x16x128xbf16> to vector<256x128xbf16>
    %c4 = arith.constant 4 : index
    %c0_46 = arith.constant 0 : index
    %c0_47 = arith.constant 0 : index
    %45 = vector.load %arg4[%c4, %c0_46, %c0_47] : memref<9x128x128xbf16, #tpu.memory_space<vmem>>, vector<1x128x128xbf16>
    %46 = vector.shape_cast %45 : vector<1x128x128xbf16> to vector<128x128xbf16>
    %cst_48 = arith.constant dense<0.000000e+00> : vector<256x128xf32>
    %47 = tpu.matmul %44, %46, %cst_48 {dimension_numbers = #tpu.dot_dimension_numbers<[1], [0], [0], [1], [0, 0, 1, 1], [], []>} : vector<256x128xbf16>, vector<128x128xbf16>, vector<256x128xf32> -> vector<256x128xf32>
    %48 = arith.addf %42, %47 : vector<256x128xf32>
    %c1_49 = arith.constant 1 : index
    %c2_50 = arith.constant 2 : index
    %c0_51 = arith.constant 0 : index
    %49 = vector.load %arg9[%c1_49, %c2_50, %c0_51] : memref<18x18x128xbf16, #tpu.memory_space<vmem>>, vector<16x16x128xbf16>
    %50 = vector.shape_cast %49 : vector<16x16x128xbf16> to vector<256x128xbf16>
    %c5 = arith.constant 5 : index
    %c0_52 = arith.constant 0 : index
    %c0_53 = arith.constant 0 : index
    %51 = vector.load %arg4[%c5, %c0_52, %c0_53] : memref<9x128x128xbf16, #tpu.memory_space<vmem>>, vector<1x128x128xbf16>
    %52 = vector.shape_cast %51 : vector<1x128x128xbf16> to vector<128x128xbf16>
    %cst_54 = arith.constant dense<0.000000e+00> : vector<256x128xf32>
    %53 = tpu.matmul %50, %52, %cst_54 {dimension_numbers = #tpu.dot_dimension_numbers<[1], [0], [0], [1], [0, 0, 1, 1], [], []>} : vector<256x128xbf16>, vector<128x128xbf16>, vector<256x128xf32> -> vector<256x128xf32>
    %54 = arith.addf %48, %53 : vector<256x128xf32>
    %c2_55 = arith.constant 2 : index
    %c0_56 = arith.constant 0 : index
    %c0_57 = arith.constant 0 : index
    %55 = vector.load %arg9[%c2_55, %c0_56, %c0_57] : memref<18x18x128xbf16, #tpu.memory_space<vmem>>, vector<16x16x128xbf16>
    %56 = vector.shape_cast %55 : vector<16x16x128xbf16> to vector<256x128xbf16>
    %c6 = arith.constant 6 : index
    %c0_58 = arith.constant 0 : index
    %c0_59 = arith.constant 0 : index
    %57 = vector.load %arg4[%c6, %c0_58, %c0_59] : memref<9x128x128xbf16, #tpu.memory_space<vmem>>, vector<1x128x128xbf16>
    %58 = vector.shape_cast %57 : vector<1x128x128xbf16> to vector<128x128xbf16>
    %cst_60 = arith.constant dense<0.000000e+00> : vector<256x128xf32>
    %59 = tpu.matmul %56, %58, %cst_60 {dimension_numbers = #tpu.dot_dimension_numbers<[1], [0], [0], [1], [0, 0, 1, 1], [], []>} : vector<256x128xbf16>, vector<128x128xbf16>, vector<256x128xf32> -> vector<256x128xf32>
    %60 = arith.addf %54, %59 : vector<256x128xf32>
    %c2_61 = arith.constant 2 : index
    %c1_62 = arith.constant 1 : index
    %c0_63 = arith.constant 0 : index
    %61 = vector.load %arg9[%c2_61, %c1_62, %c0_63] : memref<18x18x128xbf16, #tpu.memory_space<vmem>>, vector<16x16x128xbf16>
    %62 = vector.shape_cast %61 : vector<16x16x128xbf16> to vector<256x128xbf16>
    %c7 = arith.constant 7 : index
    %c0_64 = arith.constant 0 : index
    %c0_65 = arith.constant 0 : index
    %63 = vector.load %arg4[%c7, %c0_64, %c0_65] : memref<9x128x128xbf16, #tpu.memory_space<vmem>>, vector<1x128x128xbf16>
    %64 = vector.shape_cast %63 : vector<1x128x128xbf16> to vector<128x128xbf16>
    %cst_66 = arith.constant dense<0.000000e+00> : vector<256x128xf32>
    %65 = tpu.matmul %62, %64, %cst_66 {dimension_numbers = #tpu.dot_dimension_numbers<[1], [0], [0], [1], [0, 0, 1, 1], [], []>} : vector<256x128xbf16>, vector<128x128xbf16>, vector<256x128xf32> -> vector<256x128xf32>
    %66 = arith.addf %60, %65 : vector<256x128xf32>
    %c2_67 = arith.constant 2 : index
    %c2_68 = arith.constant 2 : index
    %c0_69 = arith.constant 0 : index
    %67 = vector.load %arg9[%c2_67, %c2_68, %c0_69] : memref<18x18x128xbf16, #tpu.memory_space<vmem>>, vector<16x16x128xbf16>
    %68 = vector.shape_cast %67 : vector<16x16x128xbf16> to vector<256x128xbf16>
    %c8 = arith.constant 8 : index
    %c0_70 = arith.constant 0 : index
    %c0_71 = arith.constant 0 : index
    %69 = vector.load %arg4[%c8, %c0_70, %c0_71] : memref<9x128x128xbf16, #tpu.memory_space<vmem>>, vector<1x128x128xbf16>
    %70 = vector.shape_cast %69 : vector<1x128x128xbf16> to vector<128x128xbf16>
    %cst_72 = arith.constant dense<0.000000e+00> : vector<256x128xf32>
    %71 = tpu.matmul %68, %70, %cst_72 {dimension_numbers = #tpu.dot_dimension_numbers<[1], [0], [0], [1], [0, 0, 1, 1], [], []>} : vector<256x128xbf16>, vector<128x128xbf16>, vector<256x128xf32> -> vector<256x128xf32>
    %72 = arith.addf %66, %71 : vector<256x128xf32>
    %c0_73 = arith.constant 0 : index
    %c0_74 = arith.constant 0 : index
    %73 = vector.load %arg5[%c0_73, %c0_74] : memref<2x128xf32, #tpu.memory_space<vmem>>, vector<1x128xf32>
    %74 = vector.broadcast %73 : vector<1x128xf32> to vector<256x128xf32>
    %75 = arith.mulf %72, %74 : vector<256x128xf32>
    %c1_75 = arith.constant 1 : index
    %c0_76 = arith.constant 0 : index
    %76 = vector.load %arg5[%c1_75, %c0_76] : memref<2x128xf32, #tpu.memory_space<vmem>>, vector<1x128xf32>
    %77 = vector.broadcast %76 : vector<1x128xf32> to vector<256x128xf32>
    %78 = arith.addf %75, %77 : vector<256x128xf32>
    %cst_77 = arith.constant 0.000000e+00 : f32
    %79 = vector.broadcast %cst_77 : f32 to vector<256x128xf32>
    %80 = arith.maximumf %78, %79 : vector<256x128xf32>
    %81 = arith.truncf %80 : vector<256x128xf32> to vector<256x128xbf16>
    %c0_78 = arith.constant 0 : index
    %c0_79 = arith.constant 0 : index
    %82 = vector.load %arg6[%c0_78, %c0_79] : memref<128x128xbf16, #tpu.memory_space<vmem>>, vector<128x128xbf16>
    %cst_80 = arith.constant dense<0.000000e+00> : vector<256x128xf32>
    %83 = tpu.matmul %81, %82, %cst_80 {dimension_numbers = #tpu.dot_dimension_numbers<[1], [0], [0], [1], [0, 0, 1, 1], [], []>} : vector<256x128xbf16>, vector<128x128xbf16>, vector<256x128xf32> -> vector<256x128xf32>
    %c0_81 = arith.constant 0 : index
    %c0_82 = arith.constant 0 : index
    %84 = vector.load %arg7[%c0_81, %c0_82] : memref<2x128xf32, #tpu.memory_space<vmem>>, vector<1x128xf32>
    %85 = vector.broadcast %84 : vector<1x128xf32> to vector<256x128xf32>
    %86 = arith.mulf %83, %85 : vector<256x128xf32>
    %c1_83 = arith.constant 1 : index
    %c0_84 = arith.constant 0 : index
    %87 = vector.load %arg7[%c1_83, %c0_84] : memref<2x128xf32, #tpu.memory_space<vmem>>, vector<1x128xf32>
    %88 = vector.broadcast %87 : vector<1x128xf32> to vector<256x128xf32>
    %89 = arith.addf %86, %88 : vector<256x128xf32>
    %90 = arith.addf %89, %1 : vector<256x128xf32>
    %cst_85 = arith.constant 0.000000e+00 : f32
    %91 = vector.broadcast %cst_85 : f32 to vector<256x128xf32>
    %92 = arith.maximumf %90, %91 : vector<256x128xf32>
    %93 = vector.shape_cast %92 : vector<256x128xf32> to vector<1x16x16x128xf32>
    %c0_86 = arith.constant 0 : index
    %c0_87 = arith.constant 0 : index
    %c0_88 = arith.constant 0 : index
    %c0_89 = arith.constant 0 : index
    %94 = vector.load %arg8[%c0_86, %c0_87, %c0_88, %c0_89] : memref<1x16x16x128xf32, #tpu.memory_space<vmem>>, vector<1x16x16x128xf32>
    tpu.vector_store %arg8[%c0_86, %c0_87, %c0_88, %c0_89], %93 {strides = array<i32>} : memref<1x16x16x128xf32, #tpu.memory_space<vmem>>, vector<1x16x16x128xf32>,
    return
  }
  func.func @transform_0(%arg0: i32) -> (i32, i32, i32, i32) {
    %c0_i32 = arith.constant 0 : i32
    %c0_i32_0 = arith.constant 0 : i32
    %c0_i32_1 = arith.constant 0 : i32
    %c0_i32_2 = arith.constant 0 : i32
    return %arg0, %c0_i32, %c0_i32_0, %c0_i32_1 : i32, i32, i32, i32
  }
  func.func @transform_1(%arg0: i32) -> (i32, i32) {
    %c0_i32 = arith.constant 0 : i32
    %c0_i32_0 = arith.constant 0 : i32
    %c0_i32_1 = arith.constant 0 : i32
    return %c0_i32, %c0_i32_0 : i32, i32
  }
  func.func @transform_2(%arg0: i32) -> (i32, i32) {
    %c0_i32 = arith.constant 0 : i32
    %c0_i32_0 = arith.constant 0 : i32
    %c0_i32_1 = arith.constant 0 : i32
    return %c0_i32, %c0_i32_0 : i32, i32
  }
  func.func @transform_3(%arg0: i32) -> (i32, i32, i32) {
    %c0_i32 = arith.constant 0 : i32
    %c0_i32_0 = arith.constant 0 : i32
    %c0_i32_1 = arith.constant 0 : i32
    %c0_i32_2 = arith.constant 0 : i32
    return %c0_i32, %c0_i32_0, %c0_i32_1 : i32, i32, i32
  }
  func.func @transform_4(%arg0: i32) -> (i32, i32) {
    %c0_i32 = arith.constant 0 : i32
    %c0_i32_0 = arith.constant 0 : i32
    %c0_i32_1 = arith.constant 0 : i32
    return %c0_i32, %c0_i32_0 : i32, i32
  }
  func.func @transform_5(%arg0: i32) -> (i32, i32) {
    %c0_i32 = arith.constant 0 : i32
    %c0_i32_0 = arith.constant 0 : i32
    %c0_i32_1 = arith.constant 0 : i32
    return %c0_i32, %c0_i32_0 : i32, i32
  }
  func.func @transform_6(%arg0: i32) -> (i32, i32) {
    %c0_i32 = arith.constant 0 : i32
    %c0_i32_0 = arith.constant 0 : i32
    %c0_i32_1 = arith.constant 0 : i32
    return %c0_i32, %c0_i32_0 : i32, i32
  }
  func.func @transform_7(%arg0: i32) -> (i32, i32, i32, i32) {
    %c0_i32 = arith.constant 0 : i32
    %c0_i32_0 = arith.constant 0 : i32
    %c0_i32_1 = arith.constant 0 : i32
    %c0_i32_2 = arith.constant 0 : i32
    return %arg0, %c0_i32, %c0_i32_0, %c0_i32_1 : i32, i32, i32, i32
  }
}

</mosaic_0001>

<llo_original>
// kernel: tpu_custom_call.1
$region0: #{tpu_custom_call.1}
  #allocation0 [shape = 'u32[]', space=smem, size = 0x4, offset = 0x4, fixed_abs, tag = 'smem constant byte address 0x4 - core index']
  #allocation1 [shape = 'u32[144,128]{1,0:T(1,128)}', space=vmem, size = 0x12000, scoped, tag = 'internal scratch']
  #allocation2 [shape = 'bf16[18,18,128]{2,1,0:T(8,128)(2,1)}', space=vmem, size = 0x1b000, scoped, tag = 'scratch operand']
  %s0 = inlined_call_operand.hbm [shape: f32[2,16,16,128], index: 0, kind: input, shape index: {}]
  %s1 = inlined_call_operand.hbm [shape: bf16[128,128], index: 1, kind: input, shape index: {}]
  %s2 = inlined_call_operand.vmem [shape: f32[2,128], index: 2, kind: input, shape index: {}]
  %s3 = inlined_call_operand.hbm [shape: bf16[9,128,128], index: 3, kind: input, shape index: {}]
  %s4 = inlined_call_operand.vmem [shape: f32[2,128], index: 4, kind: input, shape index: {}]
  %s5 = inlined_call_operand.hbm [shape: bf16[128,128], index: 5, kind: input, shape index: {}]
  %s6 = inlined_call_operand.vmem [shape: f32[2,128], index: 6, kind: input, shape index: {}]
  %s7 = inlined_call_operand.hbm [shape: f32[2,16,16,128], index: 7, kind: output, shape index: {}]
  %s8 = sld [smem:[#allocation0]]
  $region77: #{tpu_custom_call.1} parent=0
    _
  %s10 = ssub.s32 1, %s8
  %s11 = scalar_select 0, %s10, %s8
  $region1: #{tpu_custom_call.1} parent=0
    #allocation3 [shape = 'u8[262144]{0}', space=vmem, size = 0x40000, scoped, tag = 'input window, operand 0']
    #allocation4 [shape = 's32[2]{0}', space=sflag, size = 0x8, scoped, tag = 'scoped memory for tpu_custom_call.1']
    #allocation5 [shape = 's32[2]{0}', space=sflag, size = 0x8, scoped, tag = 'scoped memory for tpu_custom_call.1']
    #allocation6 [shape = 'u8[32768]{0}', space=vmem, size = 0x8000, scoped, tag = 'input window, operand 1, single buffered']
    #allocation7 [shape = 's32[1]{0}', space=sflag, size = 0x4, scoped, tag = 'scoped memory for tpu_custom_call.1']
    #allocation8 [shape = 'u8[294912]{0}', space=vmem, size = 0x48000, scoped, tag = 'input window, operand 3, single buffered']
    #allocation9 [shape = 'u8[32768]{0}', space=vmem, size = 0x8000, scoped, tag = 'input window, operand 5, single buffered']
    #allocation10 [shape = 's32[1]{0}', space=sflag, size = 0x4, scoped, tag = 'scoped memory for tpu_custom_call.1']
    #allocation11 [shape = 'u8[262144]{0}', space=vmem, size = 0x40000, scoped, tag = 'output window, operand 0']
    %12 = vsyncpa [#allocation4], 0
    %s13 = scalar_lea.sflag [#allocation4], 1
    %14 = vsyncpa %s13, 0
    %15 = vsyncpa [#allocation7], 0
    %16 = vsyncpa [#allocation10], 0
    %17 = vsyncpa [#allocation5], 0
    %s18 = scalar_lea.sflag [#allocation5], 1
    %19 = vsyncpa %s18, 0
    loop: start=0, step=1, limit=4
    $region2: #{tpu_custom_call.1} parent=1 // loop_pre_header
      _
    $region3: #{tpu_custom_call.1} parent=1 // loop_header
      %s21 = sphi 0, %s25
      %p22 = scmp.ge.s32.totalorder %s21, 4
      %s31 = sphi 0, %s33
      %s34 = sphi 0, %s31
      %s35 = sphi 0, %s34
      %s51 = sphi 0, %s35
      %s55 = sphi 0, %s55
      %s57 = sphi 0, %s55
      %s58 = sphi 0, %s57
      %s72 = sphi 0, %s58
      %s76 = sphi 0, %s76
      %s78 = sphi 0, %s76
      %s79 = sphi 0, %s78
      %s93 = sphi 0, %s79
      %s97 = sphi 0, %s97
      %s99 = sphi 0, %s97
      %s100 = sphi 0, %s99
      %s114 = sphi 0, %s100
      %s118 = sphi 0, %s118
      %s120 = sphi 0, %s118
      %s121 = sphi 0, %s120
      %s135 = sphi 0, %s121
      %s139 = sphi 0, %s139
      %s141 = sphi 0, %s139
      %s142 = sphi 0, %s141
      %s156 = sphi 0, %s142
      %s160 = sphi 0, %s160
      %s162 = sphi 0, %s160
      %s163 = sphi 0, %s162
      %s177 = sphi 0, %s163
      %s183 = sphi 0, %s185
      %s186 = sphi 0, %s183
      %s187 = sphi 0, %s186
      %s203 = sphi 0, %s187
    $region4: #{tpu_custom_call.1} parent=1 // loop_header_branch
      %24 = sbr.rel (%p22) target = $region8
    $region5: #{tpu_custom_call.1} parent=1 // loop_body
      %s26 = ssub.s32 %s21, 1
      %s27 = ssub.s32 %s21, 2
      %s28 = sadd.s32 %s21, 1
      %s29 = ssub.s32 %s21, %s28
      %p30 = scmp.eq.s32.totalorder %s29, 0
      %s32 = sadd.s32 %s31, 1
      %s33 = scalar_select %p30, %s31, %s32
      %p36 = pneg %p30
      %p37 = scmp.eq.s32.totalorder %s21, 1
      %p38 = por %p36, %p37
      %p39 = scmp.ne.s32.totalorder %s31, %s34
      %p40 = scmp.eq.s32.totalorder %s21, 0
      %p41 = por %p39, %p40
      %p42 = scmp.ne.s32.totalorder %s31, %s34
      %p43 = scmp.eq.s32.totalorder %s26, 1
      %p44 = por %p42, %p43
      %p45 = scmp.ne.s32.totalorder %s34, %s35
      %p46 = scmp.eq.s32.totalorder %s26, 0
      %p47 = por %p45, %p46
      %p48 = scmp.ne.s32.totalorder %s34, %s35
      %p49 = scmp.eq.s32.totalorder %s27, 1
      %p50 = por %p48, %p49
      %p52 = scmp.ne.s32.totalorder %s35, %s51
      %p53 = scmp.eq.s32.totalorder %s27, 0
      %p54 = por %p52, %p53
      %s56 = sadd.s32 %s55, 1
      %p59 = scmp.eq.s32.totalorder %s21, 1
      %p60 = scmp.ne.s32.totalorder %s55, %s57
      %p61 = scmp.eq.s32.totalorder %s21, 0
      %p62 = por %p60, %p61
      %p63 = scmp.ne.s32.totalorder %s55, %s57
      %p64 = scmp.eq.s32.totalorder %s26, 1
      %p65 = por %p63, %p64
      %p66 = scmp.ne.s32.totalorder %s57, %s58
      %p67 = scmp.eq.s32.totalorder %s26, 0
      %p68 = por %p66, %p67
      %p69 = scmp.ne.s32.totalorder %s57, %s58
      %p70 = scmp.eq.s32.totalorder %s27, 1
      %p71 = por %p69, %p70
      %p73 = scmp.ne.s32.totalorder %s58, %s72
      %p74 = scmp.eq.s32.totalorder %s27, 0
      %p75 = por %p73, %p74
      %s77 = sadd.s32 %s76, 1
      %p80 = scmp.eq.s32.totalorder %s21, 1
      %p81 = scmp.ne.s32.totalorder %s76, %s78
      %p82 = scmp.eq.s32.totalorder %s21, 0
      %p83 = por %p81, %p82
      %p84 = scmp.ne.s32.totalorder %s76, %s78
      %p85 = scmp.eq.s32.totalorder %s26, 1
      %p86 = por %p84, %p85
      %p87 = scmp.ne.s32.totalorder %s78, %s79
      %p88 = scmp.eq.s32.totalorder %s26, 0
      %p89 = por %p87, %p88
      %p90 = scmp.ne.s32.totalorder %s78, %s79
      %p91 = scmp.eq.s32.totalorder %s27, 1
      %p92 = por %p90, %p91
      %p94 = scmp.ne.s32.totalorder %s79, %s93
      %p95 = scmp.eq.s32.totalorder %s27, 0
      %p96 = por %p94, %p95
      %s98 = sadd.s32 %s97, 1
      %p101 = scmp.eq.s32.totalorder %s21, 1
      %p102 = scmp.ne.s32.totalorder %s97, %s99
      %p103 = scmp.eq.s32.totalorder %s21, 0
      %p104 = por %p102, %p103
      %p105 = scmp.ne.s32.totalorder %s97, %s99
      %p106 = scmp.eq.s32.totalorder %s26, 1
      %p107 = por %p105, %p106
      %p108 = scmp.ne.s32.totalorder %s99, %s100
      %p109 = scmp.eq.s32.totalorder %s26, 0
      %p110 = por %p108, %p109
      %p111 = scmp.ne.s32.totalorder %s99, %s100
      %p112 = scmp.eq.s32.totalorder %s27, 1
      %p113 = por %p111, %p112
      %p115 = scmp.ne.s32.totalorder %s100, %s114
      %p116 = scmp.eq.s32.totalorder %s27, 0
      %p117 = por %p115, %p116
      %s119 = sadd.s32 %s118, 1
      %p122 = scmp.eq.s32.totalorder %s21, 1
      %p123 = scmp.ne.s32.totalorder %s118, %s120
      %p124 = scmp.eq.s32.totalorder %s21, 0
      %p125 = por %p123, %p124
      %p126 = scmp.ne.s32.totalorder %s118, %s120
      %p127 = scmp.eq.s32.totalorder %s26, 1
      %p128 = por %p126, %p127
      %p129 = scmp.ne.s32.totalorder %s120, %s121
      %p130 = scmp.eq.s32.totalorder %s26, 0
      %p131 = por %p129, %p130
      %p132 = scmp.ne.s32.totalorder %s120, %s121
      %p133 = scmp.eq.s32.totalorder %s27, 1
      %p134 = por %p132, %p133
      %p136 = scmp.ne.s32.totalorder %s121, %s135
      %p137 = scmp.eq.s32.totalorder %s27, 0
      %p138 = por %p136, %p137
      %s140 = sadd.s32 %s139, 1
      %p143 = scmp.eq.s32.totalorder %s21, 1
      %p144 = scmp.ne.s32.totalorder %s139, %s141
      %p145 = scmp.eq.s32.totalorder %s21, 0
      %p146 = por %p144, %p145
      %p147 = scmp.ne.s32.totalorder %s139, %s141
      %p148 = scmp.eq.s32.totalorder %s26, 1
      %p149 = por %p147, %p148
      %p150 = scmp.ne.s32.totalorder %s141, %s142
      %p151 = scmp.eq.s32.totalorder %s26, 0
      %p152 = por %p150, %p151
      %p153 = scmp.ne.s32.totalorder %s141, %s142
      %p154 = scmp.eq.s32.totalorder %s27, 1
      %p155 = por %p153, %p154
      %p157 = scmp.ne.s32.totalorder %s142, %s156
      %p158 = scmp.eq.s32.totalorder %s27, 0
      %p159 = por %p157, %p158
      %s161 = sadd.s32 %s160, 1
      %p164 = scmp.eq.s32.totalorder %s21, 1
      %p165 = scmp.ne.s32.totalorder %s160, %s162
      %p166 = scmp.eq.s32.totalorder %s21, 0
      %p167 = por %p165, %p166
      %p168 = scmp.ne.s32.totalorder %s160, %s162
      %p169 = scmp.eq.s32.totalorder %s26, 1
      %p170 = por %p168, %p169
      %p171 = scmp.ne.s32.totalorder %s162, %s163
      %p172 = scmp.eq.s32.totalorder %s26, 0
      %p173 = por %p171, %p172
      %p174 = scmp.ne.s32.totalorder %s162, %s163
      %p175 = scmp.eq.s32.totalorder %s27, 1
      %p176 = por %p174, %p175
      %p178 = scmp.ne.s32.totalorder %s163, %s177
      %p179 = scmp.eq.s32.totalorder %s27, 0
      %p180 = por %p178, %p179
      %s181 = ssub.s32 %s21, %s28
      %p182 = scmp.eq.s32.totalorder %s181, 0
      %s184 = sadd.s32 %s183, 1
      %s185 = scalar_select %p182, %s183, %s184
      %p188 = pneg %p182
      %p189 = scmp.eq.s32.totalorder %s21, 1
      %p190 = por %p188, %p189
      %p191 = scmp.ne.s32.totalorder %s183, %s186
      %p192 = scmp.eq.s32.totalorder %s21, 0
      %p193 = por %p191, %p192
      %p194 = scmp.ne.s32.totalorder %s183, %s186
      %p195 = scmp.eq.s32.totalorder %s26, 1
      %p196 = por %p194, %p195
      %p197 = scmp.ne.s32.totalorder %s186, %s187
      %p198 = scmp.eq.s32.totalorder %s26, 0
      %p199 = por %p197, %p198
      %p200 = scmp.ne.s32.totalorder %s186, %s187
      %p201 = scmp.eq.s32.totalorder %s27, 1
      %p202 = por %p200, %p201
      %p204 = scmp.ne.s32.totalorder %s187, %s203
      %p205 = scmp.eq.s32.totalorder %s27, 0
      %p206 = por %p204, %p205
      %p207 = scmp.le.s32.totalorder 1, %s21
      %p208 = scmp.lt.s32.totalorder %s21, 3
      %p209 = pnand %p207, %p208
      %p210 = pneg %p209
      // Predicated region
      $region9: #{tpu_custom_call.1} parent=5 // pred_check
        _
      $region10: #{tpu_custom_call.1} parent=5 // pred_check_branch
        %212 = sbr.rel (%p209) target = $region12
      $region11: #{tpu_custom_call.1} parent=5 // pred_region
        %s213 = ssub.s32 %s21, 1
        // Predicated region
        $region13: #{tpu_custom_call.1} parent=11 // pred_check
          %p214 = pneg %p68
        $region14: #{tpu_custom_call.1} parent=11 // pred_check_branch
          %216 = sbr.rel (%p214) target = $region16
        $region15: #{tpu_custom_call.1} parent=11 // pred_region
          %s218 = ssub.s32 1024, 1024
          %219 = vsyncadd [#allocation7], %s218
          %s220 = sshll.u32 [#allocation6], 4
          %s221 = int_to_ptr.vmem [resolvable:$true] %s220
          %226 = dma.hbm_to_vmem [thread:$0]  %s1, 1024, %s221, [#allocation7], 64, 64, 4
        $region16: #{tpu_custom_call.1} parent=11 // pred_fallthru
          _
        // Predicated region
        $region17: #{tpu_custom_call.1} parent=11 // pred_check
          %p227 = pneg %p89
        $region18: #{tpu_custom_call.1} parent=11 // pred_check_branch
          %229 = sbr.rel (%p227) target = $region20
        $region19: #{tpu_custom_call.1} parent=11 // pred_region
          _
        $region20: #{tpu_custom_call.1} parent=11 // pred_fallthru
          _
        // Predicated region
        $region21: #{tpu_custom_call.1} parent=11 // pred_check
          %p230 = pneg %p110
        $region22: #{tpu_custom_call.1} parent=11 // pred_check_branch
          %232 = sbr.rel (%p230) target = $region24
        $region23: #{tpu_custom_call.1} parent=11 // pred_region
          %s234 = ssub.s32 9216, 9216
          %235 = vsyncadd [#allocation7], %s234
          %s236 = sshll.u32 [#allocation8], 4
          %s237 = int_to_ptr.vmem [resolvable:$true] %s236
          %242 = dma.hbm_to_vmem [thread:$0]  %s3, 9216, %s237, [#allocation7], 64, 64, 4
        $region24: #{tpu_custom_call.1} parent=11 // pred_fallthru
          _
        // Predicated region
        $region25: #{tpu_custom_call.1} parent=11 // pred_check
          %p243 = pneg %p131
        $region26: #{tpu_custom_call.1} parent=11 // pred_check_branch
          %245 = sbr.rel (%p243) target = $region28
        $region27: #{tpu_custom_call.1} parent=11 // pred_region
          _
        $region28: #{tpu_custom_call.1} parent=11 // pred_fallthru
          _
        // Predicated region
        $region29: #{tpu_custom_call.1} parent=11 // pred_check
          %p246 = pneg %p152
        $region30: #{tpu_custom_call.1} parent=11 // pred_check_branch
          %248 = sbr.rel (%p246) target = $region32
        $region31: #{tpu_custom_call.1} parent=11 // pred_region
          %s250 = ssub.s32 1024, 1024
          %251 = vsyncadd [#allocation10], %s250
          %s252 = sshll.u32 [#allocation9], 4
          %s253 = int_to_ptr.vmem [resolvable:$true] %s252
          %258 = dma.hbm_to_vmem [thread:$0]  %s5, 1024, %s253, [#allocation10], 64, 64, 4
        $region32: #{tpu_custom_call.1} parent=11 // pred_fallthru
          _
        // Predicated region
        $region33: #{tpu_custom_call.1} parent=11 // pred_check
          %p259 = pneg %p173
        $region34: #{tpu_custom_call.1} parent=11 // pred_check_branch
          %261 = sbr.rel (%p259) target = $region36
        $region35: #{tpu_custom_call.1} parent=11 // pred_region
          _
        $region36: #{tpu_custom_call.1} parent=11 // pred_fallthru
          _
      $region12: #{tpu_custom_call.1} parent=5 // pred_fallthru
        _
      %p262 = scmp.lt.s32.totalorder %s21, 2
      // Predicated region
      $region37: #{tpu_custom_call.1} parent=5 // pred_check
        %p263 = pneg %p262
      $region38: #{tpu_custom_call.1} parent=5 // pred_check_branch
        %265 = sbr.rel (%p263) target = $region40
      $region39: #{tpu_custom_call.1} parent=5 // pred_region
        // Predicated region
        $region41: #{tpu_custom_call.1} parent=39 // pred_check
          %p266 = pneg %p41
        $region42: #{tpu_custom_call.1} parent=39 // pred_check_branch
          %268 = sbr.rel (%p266) target = $region44
        $region43: #{tpu_custom_call.1} parent=39 // pred_region
          %s269 = sand.u32 %s31, 1
          %s270 = scalar_lea.sflag [#allocation4], %s269
          %s271 = sand.u32 %s31, 1
          %s272 = smul.addr %s271, 256
          %s273 = scalar_lea.vmem [#allocation3], %s272
          %s275 = ssub.s32 4096, 4096
          %276 = vsyncadd %s270, %s275
          %s277 = smul.addr %s21, 32
          %s278 = smul.addr %s277, 128
          %s279 = scalar_lea.hbm %s0, %s278
          %s280 = sshll.u32 %s273, 4
          %s281 = int_to_ptr.vmem [resolvable:$true] %s280
          %286 = dma.hbm_to_vmem [thread:$0]  %s279, 4096, %s281, %s270, 128, 128, 8
        $region44: #{tpu_custom_call.1} parent=39 // pred_fallthru
          _
      $region40: #{tpu_custom_call.1} parent=5 // pred_fallthru
        _
      %p287 = scmp.le.s32.totalorder 1, %s21
      %p288 = scmp.lt.s32.totalorder %s21, 3
      %p289 = pnand %p287, %p288
      %p290 = pneg %p289
      // Predicated region
      $region45: #{tpu_custom_call.1} parent=5 // pred_check
        _
      $region46: #{tpu_custom_call.1} parent=5 // pred_check_branch
        %292 = sbr.rel (%p289) target = $region48
      $region47: #{tpu_custom_call.1} parent=5 // pred_region
        %s293 = ssub.s32 %s21, 1
        %s294 = sand.u32 %s34, 1
        %s295 = scalar_lea.sflag [#allocation4], %s294
        %s296 = sand.u32 %s34, 1
        %s297 = smul.addr %s296, 256
        %s298 = scalar_lea.vmem [#allocation3], %s297
        // Predicated region
        $region49: #{tpu_custom_call.1} parent=47 // pred_check
          %p299 = pneg %p47
        $region50: #{tpu_custom_call.1} parent=47 // pred_check_branch
          %301 = sbr.rel (%p299) target = $region52
        $region51: #{tpu_custom_call.1} parent=47 // pred_region
          %302 = dma.done %s295, 4096
        $region52: #{tpu_custom_call.1} parent=47 // pred_fallthru
          _
        // Predicated region
        $region53: #{tpu_custom_call.1} parent=47 // pred_check
          %p303 = pneg %p68
        $region54: #{tpu_custom_call.1} parent=47 // pred_check_branch
          %305 = sbr.rel (%p303) target = $region56
        $region55: #{tpu_custom_call.1} parent=47 // pred_region
          %306 = dma.done [#allocation7], 1024
        $region56: #{tpu_custom_call.1} parent=47 // pred_fallthru
          _
        // Predicated region
        $region57: #{tpu_custom_call.1} parent=47 // pred_check
          %p307 = pneg %p110
        $region58: #{tpu_custom_call.1} parent=47 // pred_check_branch
          %309 = sbr.rel (%p307) target = $region60
        $region59: #{tpu_custom_call.1} parent=47 // pred_region
          %310 = dma.done [#allocation7], 9216
        $region60: #{tpu_custom_call.1} parent=47 // pred_fallthru
          _
        // Predicated region
        $region61: #{tpu_custom_call.1} parent=47 // pred_check
          %p311 = pneg %p152
        $region62: #{tpu_custom_call.1} parent=47 // pred_check_branch
          %313 = sbr.rel (%p311) target = $region64
        $region63: #{tpu_custom_call.1} parent=47 // pred_region
          %314 = dma.done [#allocation10], 1024
        $region64: #{tpu_custom_call.1} parent=47 // pred_fallthru
          _
        %s315 = sand.u32 %s34, 1
        %s316 = scalar_lea.sflag [#allocation4], %s315
        %s317 = sand.u32 %s34, 1
        %s318 = smul.addr %s317, 256
        %s319 = scalar_lea.vmem [#allocation3], %s318
        %p320 = pneg %p47
        %p321 = pneg %p44
        %p322 = pneg %p68
        %p323 = pneg %p65
        %p324 = pneg %p89
        %p325 = pneg %p86
        %p326 = pneg %p110
        %p327 = pneg %p107
        %p328 = pneg %p131
        %p329 = pneg %p128
        %p330 = pneg %p152
        %p331 = pneg %p149
        %p332 = pneg %p173
        %p333 = pneg %p170
        %p334 = pneg %p199
        %p335 = pneg %p196
        %s336 = sand.u32 %s186, 1
        %s337 = scalar_lea.sflag [#allocation5], %s336
        %s338 = sand.u32 %s186, 1
        %s339 = smul.addr %s338, 256
        %s340 = scalar_lea.vmem [#allocation11], %s339
        %v342 = vld [vmem:[%s298] sm:$0xff]
        %v343 = vld [vmem:[%s298 + $0x8] sm:$0xff]
        %v344 = vld [vmem:[%s298 + $0x10] sm:$0xff]
        %v345 = vld [vmem:[%s298 + $0x18] sm:$0xff]
        %v346 = vld [vmem:[%s298 + $0x20] sm:$0xff]
        %v347 = vld [vmem:[%s298 + $0x28] sm:$0xff]
        %v348 = vld [vmem:[%s298 + $0x30] sm:$0xff]
        %v349 = vld [vmem:[%s298 + $0x38] sm:$0xff]
        %v350 = vld [vmem:[%s298 + $0x40] sm:$0xff]
        %v351 = vld [vmem:[%s298 + $0x48] sm:$0xff]
        %v352 = vld [vmem:[%s298 + $0x50] sm:$0xff]
        %v353 = vld [vmem:[%s298 + $0x58] sm:$0xff]
        %v354 = vld [vmem:[%s298 + $0x60] sm:$0xff]
        %v355 = vld [vmem:[%s298 + $0x68] sm:$0xff]
        %v356 = vld [vmem:[%s298 + $0x70] sm:$0xff]
        %v357 = vld [vmem:[%s298 + $0x78] sm:$0xff]
        %v358 = vld [vmem:[%s298 + $0x80] sm:$0xff]
        %v359 = vld [vmem:[%s298 + $0x88] sm:$0xff]
        %v360 = vld [vmem:[%s298 + $0x90] sm:$0xff]
        %v361 = vld [vmem:[%s298 + $0x98] sm:$0xff]
        %v362 = vld [vmem:[%s298 + $0xa0] sm:$0xff]
        %v363 = vld [vmem:[%s298 + $0xa8] sm:$0xff]
        %v364 = vld [vmem:[%s298 + $0xb0] sm:$0xff]
        %v365 = vld [vmem:[%s298 + $0xb8] sm:$0xff]
        %v366 = vld [vmem:[%s298 + $0xc0] sm:$0xff]
        %v367 = vld [vmem:[%s298 + $0xc8] sm:$0xff]
        %v368 = vld [vmem:[%s298 + $0xd0] sm:$0xff]
        %v369 = vld [vmem:[%s298 + $0xd8] sm:$0xff]
        %v370 = vld [vmem:[%s298 + $0xe0] sm:$0xff]
        %v371 = vld [vmem:[%s298 + $0xe8] sm:$0xff]
        %v372 = vld [vmem:[%s298 + $0xf0] sm:$0xff]
        %v373 = vld [vmem:[%s298 + $0xf8] sm:$0xff]
        %v374 = vpack.c.bf16 %v343, %v342
        %v375 = vpack.c.bf16 %v345, %v344
        %v376 = vpack.c.bf16 %v347, %v346
        %v377 = vpack.c.bf16 %v349, %v348
        %v378 = vpack.c.bf16 %v351, %v350
        %v379 = vpack.c.bf16 %v353, %v352
        %v380 = vpack.c.bf16 %v355, %v354
        %v381 = vpack.c.bf16 %v357, %v356
        %v382 = vpack.c.bf16 %v359, %v358
        %v383 = vpack.c.bf16 %v361, %v360
        %v384 = vpack.c.bf16 %v363, %v362
        %v385 = vpack.c.bf16 %v365, %v364
        %v386 = vpack.c.bf16 %v367, %v366
        %v387 = vpack.c.bf16 %v369, %v368
        %v388 = vpack.c.bf16 %v371, %v370
        %v389 = vpack.c.bf16 %v373, %v372
        %v390 = vld [vmem:[#allocation6] sm:$0xf]
        %v391 = vld [vmem:[#allocation6 + $0x4] sm:$0xf]
        %v392 = vld [vmem:[#allocation6 + $0x8] sm:$0xf]
        %v393 = vld [vmem:[#allocation6 + $0xc] sm:$0xf]
        %v394 = vld [vmem:[#allocation6 + $0x10] sm:$0xf]
        %v395 = vld [vmem:[#allocation6 + $0x14] sm:$0xf]
        %v396 = vld [vmem:[#allocation6 + $0x18] sm:$0xf]
        %v397 = vld [vmem:[#allocation6 + $0x1c] sm:$0xf]
        %v398 = vld [vmem:[#allocation6 + $0x20] sm:$0xf]
        %v399 = vld [vmem:[#allocation6 + $0x24] sm:$0xf]
        %v400 = vld [vmem:[#allocation6 + $0x28] sm:$0xf]
        %v401 = vld [vmem:[#allocation6 + $0x2c] sm:$0xf]
        %v402 = vld [vmem:[#allocation6 + $0x30] sm:$0xf]
        %v403 = vld [vmem:[#allocation6 + $0x34] sm:$0xf]
        %v404 = vld [vmem:[#allocation6 + $0x38] sm:$0xf]
        %v405 = vld [vmem:[#allocation6 + $0x3c] sm:$0xf]
        %v422 = vunpack.c.l.b16 %v390
        %v423 = vunpack.c.l.b16 %v391
        %v424 = vunpack.c.l.b16 %v392
        %v425 = vunpack.c.l.b16 %v393
        %v426 = vunpack.c.l.b16 %v394
        %v427 = vunpack.c.l.b16 %v395
        %v428 = vunpack.c.l.b16 %v396
        %v429 = vunpack.c.l.b16 %v397
        %v430 = vunpack.c.l.b16 %v398
        %v431 = vunpack.c.l.b16 %v399
        %v432 = vunpack.c.l.b16 %v400
        %v433 = vunpack.c.l.b16 %v401
        %v434 = vunpack.c.l.b16 %v402
        %v435 = vunpack.c.l.b16 %v403
        %v436 = vunpack.c.l.b16 %v404
        %v437 = vunpack.c.l.b16 %v405
        %v438 = vpack.c.b16 %v423, %v422
        %v439 = vpack.c.b16 %v425, %v424
        %v440 = vpack.c.b16 %v427, %v426
        %v441 = vpack.c.b16 %v429, %v428
        %v442 = vpack.c.b16 %v431, %v430
        %v443 = vpack.c.b16 %v433, %v432
        %v444 = vpack.c.b16 %v435, %v434
        %v445 = vpack.c.b16 %v437, %v436
        %454 = vmatprep.subr.bf16.mxu0 0
        %455 = vmatpush1.bf16.msra.mxu0 %v438
        %456 = vmatprep.subr.bf16.mxu0 0
        %457 = vmatpush1.bf16.msra.mxu0 %v439
        %458 = vmatprep.subr.bf16.mxu0 0
        %459 = vmatpush1.bf16.msra.mxu0 %v440
        %460 = vmatprep.subr.bf16.mxu0 0
        %461 = vmatpush1.bf16.msra.mxu0 %v441
        %462 = vmatprep.subr.bf16.mxu0 0
        %463 = vmatpush1.bf16.msra.mxu0 %v442
        %464 = vmatprep.subr.bf16.mxu0 0
        %465 = vmatpush1.bf16.msra.mxu0 %v443
        %466 = vmatprep.subr.bf16.mxu0 0
        %467 = vmatpush1.bf16.msra.mxu0 %v444
        %468 = vmatprep.subr.bf16.mxu0 0
        %469 = vmatpush1.bf16.msra.mxu0 %v445
        %470 = vmatprep.subr.bf16.mxu0 0
        %471 = vmatpush1.bf16.msra.mxu0 0
        %472 = vmatprep.subr.bf16.mxu0 0
        %473 = vmatpush1.bf16.msra.mxu0 0
        %474 = vmatprep.subr.bf16.mxu0 0
        %475 = vmatpush1.bf16.msra.mxu0 0
        %476 = vmatprep.subr.bf16.mxu0 0
        %477 = vmatpush1.bf16.msra.mxu0 0
        %478 = vmatprep.subr.bf16.mxu0 0
        %479 = vmatpush1.bf16.msra.mxu0 0
        %480 = vmatprep.subr.bf16.mxu0 0
        %481 = vmatpush1.bf16.msra.mxu0 0
        %482 = vmatprep.subr.bf16.mxu0 0
        %483 = vmatpush1.bf16.msra.mxu0 0
        %484 = vmatprep.subr.bf16.mxu0 0
        %485 = vmatpush1.bf16.msra.mxu0 0
        %486 = vmatprep.mubr.bf16.mxu0 0
        %487 = vmatmul.mubr.bf16.gmra.mrb[0].mxu0 %v374
        %v488 = vpop.f32.mrb[0].mxu0
        %v489 = vadd.f32 0.0, %v488
        %v490 = vpop.f32.mrb[0].mxu0
        %v491 = vpop.f32.mrb[0].mxu0
        %v492 = vadd.f32 0.0, %v491
        %v493 = vpop.f32.mrb[0].mxu0
        %494 = vmatprep.mubr.bf16.mxu0 0
        %495 = vmatmul.mubr.bf16.gmra.mrb[0].mxu0 %v375
        %v496 = vpop.f32.mrb[0].mxu0
        %v497 = vadd.f32 0.0, %v496
        %v498 = vpop.f32.mrb[0].mxu0
        %v499 = vpop.f32.mrb[0].mxu0
        %v500 = vadd.f32 0.0, %v499
        %v501 = vpop.f32.mrb[0].mxu0
        %502 = vmatprep.mubr.bf16.mxu0 0
        %503 = vmatmul.mubr.bf16.gmra.mrb[0].mxu0 %v376
        %v504 = vpop.f32.mrb[0].mxu0
        %v505 = vadd.f32 0.0, %v504
        %v506 = vpop.f32.mrb[0].mxu0
        %v507 = vpop.f32.mrb[0].mxu0
        %v508 = vadd.f32 0.0, %v507
        %v509 = vpop.f32.mrb[0].mxu0
        %510 = vmatprep.mubr.bf16.mxu0 0
        %511 = vmatmul.mubr.bf16.gmra.mrb[0].mxu0 %v377
        %v512 = vpop.f32.mrb[0].mxu0
        %v513 = vadd.f32 0.0, %v512
        %v514 = vpop.f32.mrb[0].mxu0
        %v515 = vpop.f32.mrb[0].mxu0
        %v516 = vadd.f32 0.0, %v515
        %v517 = vpop.f32.mrb[0].mxu0
        %518 = vmatprep.mubr.bf16.mxu0 0
        %519 = vmatmul.mubr.bf16.gmra.mrb[0].mxu0 %v378
        %v520 = vpop.f32.mrb[0].mxu0
        %v521 = vadd.f32 0.0, %v520
        %v522 = vpop.f32.mrb[0].mxu0
        %v523 = vpop.f32.mrb[0].mxu0
        %v524 = vadd.f32 0.0, %v523
        %v525 = vpop.f32.mrb[0].mxu0
        %526 = vmatprep.mubr.bf16.mxu0 0
        %527 = vmatmul.mubr.bf16.gmra.mrb[0].mxu0 %v379
        %v528 = vpop.f32.mrb[0].mxu0
        %v529 = vadd.f32 0.0, %v528
        %v530 = vpop.f32.mrb[0].mxu0
        %v531 = vpop.f32.mrb[0].mxu0
        %v532 = vadd.f32 0.0, %v531
        %v533 = vpop.f32.mrb[0].mxu0
        %534 = vmatprep.mubr.bf16.mxu0 0
        %535 = vmatmul.mubr.bf16.gmra.mrb[0].mxu0 %v380
        %v536 = vpop.f32.mrb[0].mxu0
        %v537 = vadd.f32 0.0, %v536
        %v538 = vpop.f32.mrb[0].mxu0
        %v539 = vpop.f32.mrb[0].mxu0
        %v540 = vadd.f32 0.0, %v539
        %v541 = vpop.f32.mrb[0].mxu0
        %542 = vmatprep.mubr.bf16.mxu0 0
        %543 = vmatmul.mubr.bf16.gmra.mrb[0].mxu0 %v381
        %v544 = vpop.f32.mrb[0].mxu0
        %v545 = vadd.f32 0.0, %v544
        %v546 = vpop.f32.mrb[0].mxu0
        %v547 = vpop.f32.mrb[0].mxu0
        %v548 = vadd.f32 0.0, %v547
        %v549 = vpop.f32.mrb[0].mxu0
        %550 = vmatprep.mubr.bf16.mxu0 0
        %551 = vmatmul.mubr.bf16.gmra.mrb[0].mxu0 %v382
        %v552 = vpop.f32.mrb[0].mxu0
        %v553 = vadd.f32 0.0, %v552
        %v554 = vpop.f32.mrb[0].mxu0
        %v555 = vpop.f32.mrb[0].mxu0
        %v556 = vadd.f32 0.0, %v555
        %v557 = vpop.f32.mrb[0].mxu0
        %558 = vmatprep.mubr.bf16.mxu0 0
        %559 = vmatmul.mubr.bf16.gmra.mrb[0].mxu0 %v383
        %v560 = vpop.f32.mrb[0].mxu0
        %v561 = vadd.f32 0.0, %v560
        %v562 = vpop.f32.mrb[0].mxu0
        %v563 = vpop.f32.mrb[0].mxu0
        %v564 = vadd.f32 0.0, %v563
        %v565 = vpop.f32.mrb[0].mxu0
        %566 = vmatprep.mubr.bf16.mxu0 0
        %567 = vmatmul.mubr.bf16.gmra.mrb[0].mxu0 %v384
        %v568 = vpop.f32.mrb[0].mxu0
        %v569 = vadd.f32 0.0, %v568
        %v570 = vpop.f32.mrb[0].mxu0
        %v571 = vpop.f32.mrb[0].mxu0
        %v572 = vadd.f32 0.0, %v571
        %v573 = vpop.f32.mrb[0].mxu0
        %574 = vmatprep.mubr.bf16.mxu0 0
        %575 = vmatmul.mubr.bf16.gmra.mrb[0].mxu0 %v385
        %v576 = vpop.f32.mrb[0].mxu0
        %v577 = vadd.f32 0.0, %v576
        %v578 = vpop.f32.mrb[0].mxu0
        %v579 = vpop.f32.mrb[0].mxu0
        %v580 = vadd.f32 0.0, %v579
        %v581 = vpop.f32.mrb[0].mxu0
        %582 = vmatprep.mubr.bf16.mxu0 0
        %583 = vmatmul.mubr.bf16.gmra.mrb[0].mxu0 %v386
        %v584 = vpop.f32.mrb[0].mxu0
        %v585 = vadd.f32 0.0, %v584
        %v586 = vpop.f32.mrb[0].mxu0
        %v587 = vpop.f32.mrb[0].mxu0
        %v588 = vadd.f32 0.0, %v587
        %v589 = vpop.f32.mrb[0].mxu0
        %590 = vmatprep.mubr.bf16.mxu0 0
        %591 = vmatmul.mubr.bf16.gmra.mrb[0].mxu0 %v387
        %v592 = vpop.f32.mrb[0].mxu0
        %v593 = vadd.f32 0.0, %v592
        %v594 = vpop.f32.mrb[0].mxu0
        %v595 = vpop.f32.mrb[0].mxu0
        %v596 = vadd.f32 0.0, %v595
        %v597 = vpop.f32.mrb[0].mxu0
        %598 = vmatprep.mubr.bf16.mxu0 0
        %599 = vmatmul.mubr.bf16.gmra.mrb[0].mxu0 %v388
        %v600 = vpop.f32.mrb[0].mxu0
        %v601 = vadd.f32 0.0, %v600
        %v602 = vpop.f32.mrb[0].mxu0
        %v603 = vpop.f32.mrb[0].mxu0
        %v604 = vadd.f32 0.0, %v603
        %v605 = vpop.f32.mrb[0].mxu0
        %606 = vmatprep.mubr.bf16.mxu0 0
        %607 = vmatmul.mubr.bf16.gmra.mrb[0].mxu0 %v389
        %v608 = vpop.f32.mrb[0].mxu0
        %v609 = vadd.f32 0.0, %v608
        %v610 = vpop.f32.mrb[0].mxu0
        %v611 = vpop.f32.mrb[0].mxu0
        %v612 = vadd.f32 0.0, %v611
        %v613 = vpop.f32.mrb[0].mxu0
        %614 = vdwg.mxu0
        %v615 = vld [vmem:[%s2] sm:$0x1]
        %v616 = vlaneseq
        %v617 = vshrl.u32 %v616, 7
        %v618 = vsub.s32 0, %v617
        %v619 = vrot.slane %v615, %v618
        %v620 = vmul.f32 %v489, %v619
        %v621 = vmul.f32 %v492, %v619
        %v622 = vmul.f32 %v497, %v619
        %v623 = vmul.f32 %v500, %v619
        %v624 = vmul.f32 %v505, %v619
        %v625 = vmul.f32 %v508, %v619
        %v626 = vmul.f32 %v513, %v619
        %v627 = vmul.f32 %v516, %v619
        %v628 = vmul.f32 %v521, %v619
        %v629 = vmul.f32 %v524, %v619
        %v630 = vmul.f32 %v529, %v619
        %v631 = vmul.f32 %v532, %v619
        %v632 = vmul.f32 %v537, %v619
        %v633 = vmul.f32 %v540, %v619
        %v634 = vmul.f32 %v545, %v619
        %v635 = vmul.f32 %v548, %v619
        %v636 = vmul.f32 %v553, %v619
        %v637 = vmul.f32 %v556, %v619
        %v638 = vmul.f32 %v561, %v619
        %v639 = vmul.f32 %v564, %v619
        %v640 = vmul.f32 %v569, %v619
        %v641 = vmul.f32 %v572, %v619
        %v642 = vmul.f32 %v577, %v619
        %v643 = vmul.f32 %v580, %v619
        %v644 = vmul.f32 %v585, %v619
        %v645 = vmul.f32 %v588, %v619
        %v646 = vmul.f32 %v593, %v619
        %v647 = vmul.f32 %v596, %v619
        %v648 = vmul.f32 %v601, %v619
        %v649 = vmul.f32 %v604, %v619
        %v650 = vmul.f32 %v609, %v619
        %v651 = vmul.f32 %v612, %v619
        %v652 = vld [vmem:[%s2 + $0x1] sm:$0x1]
        %v653 = vlaneseq
        %v654 = vshrl.u32 %v653, 7
        %v655 = vsub.s32 0, %v654
        %v656 = vrot.slane %v652, %v655
        %v657 = vadd.f32 %v620, %v656
        %v658 = vadd.f32 %v621, %v656
        %v659 = vadd.f32 %v622, %v656
        %v660 = vadd.f32 %v623, %v656
        %v661 = vadd.f32 %v624, %v656
        %v662 = vadd.f32 %v625, %v656
        %v663 = vadd.f32 %v626, %v656
        %v664 = vadd.f32 %v627, %v656
        %v665 = vadd.f32 %v628, %v656
        %v666 = vadd.f32 %v629, %v656
        %v667 = vadd.f32 %v630, %v656
        %v668 = vadd.f32 %v631, %v656
        %v669 = vadd.f32 %v632, %v656
        %v670 = vadd.f32 %v633, %v656
        %v671 = vadd.f32 %v634, %v656
        %v672 = vadd.f32 %v635, %v656
        %v673 = vadd.f32 %v636, %v656
        %v674 = vadd.f32 %v637, %v656
        %v675 = vadd.f32 %v638, %v656
        %v676 = vadd.f32 %v639, %v656
        %v677 = vadd.f32 %v640, %v656
        %v678 = vadd.f32 %v641, %v656
        %v679 = vadd.f32 %v642, %v656
        %v680 = vadd.f32 %v643, %v656
        %v681 = vadd.f32 %v644, %v656
        %v682 = vadd.f32 %v645, %v656
        %v683 = vadd.f32 %v646, %v656
        %v684 = vadd.f32 %v647, %v656
        %v685 = vadd.f32 %v648, %v656
        %v686 = vadd.f32 %v649, %v656
        %v687 = vadd.f32 %v650, %v656
        %v688 = vadd.f32 %v651, %v656
        %v689 = vmax.f32 %v657, 0.0
        %v690 = vmax.f32 %v658, 0.0
        %v691 = vmax.f32 %v659, 0.0
        %v692 = vmax.f32 %v660, 0.0
        %v693 = vmax.f32 %v661, 0.0
        %v694 = vmax.f32 %v662, 0.0
        %v695 = vmax.f32 %v663, 0.0
        %v696 = vmax.f32 %v664, 0.0
        %v697 = vmax.f32 %v665, 0.0
        %v698 = vmax.f32 %v666, 0.0
        %v699 = vmax.f32 %v667, 0.0
        %v700 = vmax.f32 %v668, 0.0
        %v701 = vmax.f32 %v669, 0.0
        %v702 = vmax.f32 %v670, 0.0
        %v703 = vmax.f32 %v671, 0.0
        %v704 = vmax.f32 %v672, 0.0
        %v705 = vmax.f32 %v673, 0.0
        %v706 = vmax.f32 %v674, 0.0
        %v707 = vmax.f32 %v675, 0.0
        %v708 = vmax.f32 %v676, 0.0
        %v709 = vmax.f32 %v677, 0.0
        %v710 = vmax.f32 %v678, 0.0
        %v711 = vmax.f32 %v679, 0.0
        %v712 = vmax.f32 %v680, 0.0
        %v713 = vmax.f32 %v681, 0.0
        %v714 = vmax.f32 %v682, 0.0
        %v715 = vmax.f32 %v683, 0.0
        %v716 = vmax.f32 %v684, 0.0
        %v717 = vmax.f32 %v685, 0.0
        %v718 = vmax.f32 %v686, 0.0
        %v719 = vmax.f32 %v687, 0.0
        %v720 = vmax.f32 %v688, 0.0
        %721 = vst [vmem:[#allocation2] sm:$0xf] 0
        %722 = vst [vmem:[#allocation2 + $0x4] sm:$0xf] 0
        %723 = vst [vmem:[#allocation2 + $0x8] sm:$0x1] 0
        %724 = vst [vmem:[#allocation2 + $0xc] sm:$0xf] 0
        %725 = vst [vmem:[#allocation2 + $0x10] sm:$0xf] 0
        %726 = vst [vmem:[#allocation2 + $0x14] sm:$0x1] 0
        %727 = vst [vmem:[#allocation2 + $0x18] sm:$0xf] 0
        %728 = vst [vmem:[#allocation2 + $0x1c] sm:$0xf] 0
        %729 = vst [vmem:[#allocation2 + $0x20] sm:$0x1] 0
        %730 = vst [vmem:[#allocation2 + $0x24] sm:$0xf] 0
        %731 = vst [vmem:[#allocation2 + $0x28] sm:$0xf] 0
        %732 = vst [vmem:[#allocation2 + $0x2c] sm:$0x1] 0
        %733 = vst [vmem:[#allocation2 + $0x30] sm:$0xf] 0
        %734 = vst [vmem:[#allocation2 + $0x34] sm:$0xf] 0
        %735 = vst [vmem:[#allocation2 + $0x38] sm:$0x1] 0
        %736 = vst [vmem:[#allocation2 + $0x3c] sm:$0xf] 0
        %737 = vst [vmem:[#allocation2 + $0x40] sm:$0xf] 0
        %738 = vst [vmem:[#allocation2 + $0x44] sm:$0x1] 0
        %739 = vst [vmem:[#allocation2 + $0x48] sm:$0xf] 0
        %740 = vst [vmem:[#allocation2 + $0x4c] sm:$0xf] 0
        %741 = vst [vmem:[#allocation2 + $0x50] sm:$0x1] 0
        %742 = vst [vmem:[#allocation2 + $0x54] sm:$0xf] 0
        %743 = vst [vmem:[#allocation2 + $0x58] sm:$0xf] 0
        %744 = vst [vmem:[#allocation2 + $0x5c] sm:$0x1] 0
        %745 = vst [vmem:[#allocation2 + $0x60] sm:$0xf] 0
        %746 = vst [vmem:[#allocation2 + $0x64] sm:$0xf] 0
        %747 = vst [vmem:[#allocation2 + $0x68] sm:$0x1] 0
        %748 = vst [vmem:[#allocation2 + $0x6c] sm:$0xf] 0
        %749 = vst [vmem:[#allocation2 + $0x70] sm:$0xf] 0
        %750 = vst [vmem:[#allocation2 + $0x74] sm:$0x1] 0
        %751 = vst [vmem:[#allocation2 + $0x78] sm:$0xf] 0
        %752 = vst [vmem:[#allocation2 + $0x7c] sm:$0xf] 0
        %753 = vst [vmem:[#allocation2 + $0x80] sm:$0x1] 0
        %754 = vst [vmem:[#allocation2 + $0x84] sm:$0xf] 0
        %755 = vst [vmem:[#allocation2 + $0x88] sm:$0xf] 0
        %756 = vst [vmem:[#allocation2 + $0x8c] sm:$0x1] 0
        %757 = vst [vmem:[#allocation2 + $0x90] sm:$0xf] 0
        %758 = vst [vmem:[#allocation2 + $0x94] sm:$0xf] 0
        %759 = vst [vmem:[#allocation2 + $0x98] sm:$0x1] 0
        %760 = vst [vmem:[#allocation2 + $0x9c] sm:$0xf] 0
        %761 = vst [vmem:[#allocation2 + $0xa0] sm:$0xf] 0
        %762 = vst [vmem:[#allocation2 + $0xa4] sm:$0x1] 0
        %763 = vst [vmem:[#allocation2 + $0xa8] sm:$0xf] 0
        %764 = vst [vmem:[#allocation2 + $0xac] sm:$0xf] 0
        %765 = vst [vmem:[#allocation2 + $0xb0] sm:$0x1] 0
        %766 = vst [vmem:[#allocation2 + $0xb4] sm:$0xf] 0
        %767 = vst [vmem:[#allocation2 + $0xb8] sm:$0xf] 0
        %768 = vst [vmem:[#allocation2 + $0xbc] sm:$0x1] 0
        %769 = vst [vmem:[#allocation2 + $0xc0] sm:$0xf] 0
        %770 = vst [vmem:[#allocation2 + $0xc4] sm:$0xf] 0
        %771 = vst [vmem:[#allocation2 + $0xc8] sm:$0x1] 0
        %772 = vst [vmem:[#allocation2 + $0xcc] sm:$0xf] 0
        %773 = vst [vmem:[#allocation2 + $0xd0] sm:$0xf] 0
        %774 = vst [vmem:[#allocation2 + $0xd4] sm:$0x1] 0
        %v775 = vpack.c.bf16 %v690, %v689
        %v776 = vpack.c.bf16 %v692, %v691
        %v777 = vpack.c.bf16 %v694, %v693
        %v778 = vpack.c.bf16 %v696, %v695
        %v779 = vpack.c.bf16 %v698, %v697
        %v780 = vpack.c.bf16 %v700, %v699
        %v781 = vpack.c.bf16 %v702, %v701
        %v782 = vpack.c.bf16 %v704, %v703
        %v783 = vpack.c.bf16 %v706, %v705
        %v784 = vpack.c.bf16 %v708, %v707
        %v785 = vpack.c.bf16 %v710, %v709
        %v786 = vpack.c.bf16 %v712, %v711
        %v787 = vpack.c.bf16 %v714, %v713
        %v788 = vpack.c.bf16 %v716, %v715
        %v789 = vpack.c.bf16 %v718, %v717
        %v790 = vpack.c.bf16 %v720, %v719
        %v807 = vunpack.c.l.b16 %v775
        %v808 = vunpack.c.h.b16 %v775
        %v809 = vunpack.c.l.b16 %v776
        %v810 = vunpack.c.h.b16 %v776
        %v811 = vunpack.c.l.b16 %v777
        %v812 = vunpack.c.h.b16 %v777
        %v813 = vunpack.c.l.b16 %v778
        %v814 = vunpack.c.h.b16 %v778
        %v815 = vunpack.c.l.b16 %v779
        %v816 = vunpack.c.h.b16 %v779
        %v817 = vunpack.c.l.b16 %v780
        %v818 = vunpack.c.h.b16 %v780
        %v819 = vunpack.c.l.b16 %v781
        %v820 = vunpack.c.h.b16 %v781
        %v821 = vunpack.c.l.b16 %v782
        %v822 = vunpack.c.h.b16 %v782
        %v823 = vunpack.c.l.b16 %v783
        %v824 = vunpack.c.h.b16 %v783
        %v825 = vunpack.c.l.b16 %v784
        %v826 = vunpack.c.h.b16 %v784
        %v827 = vunpack.c.l.b16 %v785
        %v828 = vunpack.c.h.b16 %v785
        %v829 = vunpack.c.l.b16 %v786
        %v830 = vunpack.c.h.b16 %v786
        %v831 = vunpack.c.l.b16 %v787
        %v832 = vunpack.c.h.b16 %v787
        %v833 = vunpack.c.l.b16 %v788
        %v834 = vunpack.c.h.b16 %v788
        %v835 = vunpack.c.l.b16 %v789
        %v836 = vunpack.c.h.b16 %v789
        %v837 = vunpack.c.l.b16 %v790
        %v838 = vunpack.c.h.b16 %v790
        %v839 = vpack.c.b16 %v807, %v807
        %v840 = vpack.c.b16 %v808, %v808
        %v841 = vpack.c.b16 %v809, %v809
        %v842 = vpack.c.b16 %v810, %v810
        %v843 = vpack.c.b16 %v811, %v811
        %v844 = vpack.c.b16 %v812, %v812
        %v845 = vpack.c.b16 %v813, %v813
        %v846 = vpack.c.b16 %v814, %v814
        %v847 = vpack.c.b16 %v815, %v815
        %v848 = vpack.c.b16 %v816, %v816
        %v849 = vpack.c.b16 %v817, %v817
        %v850 = vpack.c.b16 %v818, %v818
        %v851 = vpack.c.b16 %v819, %v819
        %v852 = vpack.c.b16 %v820, %v820
        %v853 = vpack.c.b16 %v821, %v821
        %v854 = vpack.c.b16 %v822, %v822
        %v855 = vpack.c.b16 %v823, %v823
        %v856 = vpack.c.b16 %v824, %v824
        %v857 = vpack.c.b16 %v825, %v825
        %v858 = vpack.c.b16 %v826, %v826
        %v859 = vpack.c.b16 %v827, %v827
        %v860 = vpack.c.b16 %v828, %v828
        %v861 = vpack.c.b16 %v829, %v829
        %v862 = vpack.c.b16 %v830, %v830
        %v863 = vpack.c.b16 %v831, %v831
        %v864 = vpack.c.b16 %v832, %v832
        %v865 = vpack.c.b16 %v833, %v833
        %v866 = vpack.c.b16 %v834, %v834
        %v867 = vpack.c.b16 %v835, %v835
        %v868 = vpack.c.b16 %v836, %v836
        %v869 = vpack.c.b16 %v837, %v837
        %v870 = vpack.c.b16 %v838, %v838
        %vm871 = vsmask.f32 256
        %vm872 = vsmask.f32 4368
        %vm873 = vmor %vm871, %vm872
        %v875 = vshrl.u32 %v839, 16
        %v877 = vrot.slane %v875, 7
        %v878 = vshll.u32 %v839, 16
        %v880 = vor.u32 %v877, %v878
        %v881 = vrot.slane %v877, 4
        %v883 = vshrl.u32 %v840, 16
        %v885 = vrot.slane %v883, 7
        %v886 = vshll.u32 %v840, 16
        %v888 = vor.u32 %v885, %v886
        %v889 = vsel %vm873, %v881, %v888
        %v890 = vrot.slane %v885, 4
        %v892 = vshrl.u32 %v841, 16
        %v894 = vrot.slane %v892, 7
        %v895 = vshll.u32 %v841, 16
        %v897 = vor.u32 %v894, %v895
        %v898 = vrot.slane %v894, 4
        %v900 = vshrl.u32 %v842, 16
        %v902 = vrot.slane %v900, 7
        %v903 = vshll.u32 %v842, 16
        %v905 = vor.u32 %v902, %v903
        %v906 = vsel %vm873, %v898, %v905
        %v907 = vrot.slane %v902, 4
        %v909 = vshrl.u32 %v843, 16
        %v911 = vrot.slane %v909, 7
        %v912 = vshll.u32 %v843, 16
        %v914 = vor.u32 %v911, %v912
        %v915 = vrot.slane %v911, 4
        %v917 = vshrl.u32 %v844, 16
        %v919 = vrot.slane %v917, 7
        %v920 = vshll.u32 %v844, 16
        %v922 = vor.u32 %v919, %v920
        %v923 = vsel %vm873, %v915, %v922
        %v924 = vrot.slane %v919, 4
        %v926 = vshrl.u32 %v845, 16
        %v928 = vrot.slane %v926, 7
        %v929 = vshll.u32 %v845, 16
        %v931 = vor.u32 %v928, %v929
        %v932 = vrot.slane %v928, 4
        %v934 = vshrl.u32 %v846, 16
        %v936 = vrot.slane %v934, 7
        %v937 = vshll.u32 %v846, 16
        %v939 = vor.u32 %v936, %v937
        %v940 = vsel %vm873, %v932, %v939
        %v941 = vrot.slane %v936, 4
        %v943 = vshrl.u32 %v847, 16
        %v945 = vrot.slane %v943, 7
        %v946 = vshll.u32 %v847, 16
        %v948 = vor.u32 %v945, %v946
        %v949 = vrot.slane %v945, 4
        %v951 = vshrl.u32 %v848, 16
        %v953 = vrot.slane %v951, 7
        %v954 = vshll.u32 %v848, 16
        %v956 = vor.u32 %v953, %v954
        %v957 = vsel %vm873, %v949, %v956
        %v958 = vrot.slane %v953, 4
        %v960 = vshrl.u32 %v849, 16
        %v962 = vrot.slane %v960, 7
        %v963 = vshll.u32 %v849, 16
        %v965 = vor.u32 %v962, %v963
        %v966 = vrot.slane %v962, 4
        %v968 = vshrl.u32 %v850, 16
        %v970 = vrot.slane %v968, 7
        %v971 = vshll.u32 %v850, 16
        %v973 = vor.u32 %v970, %v971
        %v974 = vsel %vm873, %v966, %v973
        %v975 = vrot.slane %v970, 4
        %v977 = vshrl.u32 %v851, 16
        %v979 = vrot.slane %v977, 7
        %v980 = vshll.u32 %v851, 16
        %v982 = vor.u32 %v979, %v980
        %v983 = vrot.slane %v979, 4
        %v985 = vshrl.u32 %v852, 16
        %v987 = vrot.slane %v985, 7
        %v988 = vshll.u32 %v852, 16
        %v990 = vor.u32 %v987, %v988
        %v991 = vsel %vm873, %v983, %v990
        %v992 = vrot.slane %v987, 4
        %v994 = vshrl.u32 %v853, 16
        %v996 = vrot.slane %v994, 7
        %v997 = vshll.u32 %v853, 16
        %v999 = vor.u32 %v996, %v997
        %v1000 = vrot.slane %v996, 4
        %v1002 = vshrl.u32 %v854, 16
        %v1004 = vrot.slane %v1002, 7
        %v1005 = vshll.u32 %v854, 16
        %v1007 = vor.u32 %v1004, %v1005
        %v1008 = vsel %vm873, %v1000, %v1007
        %v1009 = vrot.slane %v1004, 4
        %v1011 = vshrl.u32 %v855, 16
        %v1013 = vrot.slane %v1011, 7
        %v1014 = vshll.u32 %v855, 16
        %v1016 = vor.u32 %v1013, %v1014
        %v1017 = vrot.slane %v1013, 4
        %v1019 = vshrl.u32 %v856, 16
        %v1021 = vrot.slane %v1019, 7
        %v1022 = vshll.u32 %v856, 16
        %v1024 = vor.u32 %v1021, %v1022
        %v1025 = vsel %vm873, %v1017, %v1024
        %v1026 = vrot.slane %v1021, 4
        %v1028 = vshrl.u32 %v857, 16
        %v1030 = vrot.slane %v1028, 7
        %v1031 = vshll.u32 %v857, 16
        %v1033 = vor.u32 %v1030, %v1031
        %v1034 = vrot.slane %v1030, 4
        %v1036 = vshrl.u32 %v858, 16
        %v1038 = vrot.slane %v1036, 7
        %v1039 = vshll.u32 %v858, 16
        %v1041 = vor.u32 %v1038, %v1039
        %v1042 = vsel %vm873, %v1034, %v1041
        %v1043 = vrot.slane %v1038, 4
        %v1045 = vshrl.u32 %v859, 16
        %v1047 = vrot.slane %v1045, 7
        %v1048 = vshll.u32 %v859, 16
        %v1050 = vor.u32 %v1047, %v1048
        %v1051 = vrot.slane %v1047, 4
        %v1053 = vshrl.u32 %v860, 16
        %v1055 = vrot.slane %v1053, 7
        %v1056 = vshll.u32 %v860, 16
        %v1058 = vor.u32 %v1055, %v1056
        %v1059 = vsel %vm873, %v1051, %v1058
        %v1060 = vrot.slane %v1055, 4
        %v1062 = vshrl.u32 %v861, 16
        %v1064 = vrot.slane %v1062, 7
        %v1065 = vshll.u32 %v861, 16
        %v1067 = vor.u32 %v1064, %v1065
        %v1068 = vrot.slane %v1064, 4
        %v1070 = vshrl.u32 %v862, 16
        %v1072 = vrot.slane %v1070, 7
        %v1073 = vshll.u32 %v862, 16
        %v1075 = vor.u32 %v1072, %v1073
        %v1076 = vsel %vm873, %v1068, %v1075
        %v1077 = vrot.slane %v1072, 4
        %v1079 = vshrl.u32 %v863, 16
        %v1081 = vrot.slane %v1079, 7
        %v1082 = vshll.u32 %v863, 16
        %v1084 = vor.u32 %v1081, %v1082
        %v1085 = vrot.slane %v1081, 4
        %v1087 = vshrl.u32 %v864, 16
        %v1089 = vrot.slane %v1087, 7
        %v1090 = vshll.u32 %v864, 16
        %v1092 = vor.u32 %v1089, %v1090
        %v1093 = vsel %vm873, %v1085, %v1092
        %v1094 = vrot.slane %v1089, 4
        %v1096 = vshrl.u32 %v865, 16
        %v1098 = vrot.slane %v1096, 7
        %v1099 = vshll.u32 %v865, 16
        %v1101 = vor.u32 %v1098, %v1099
        %v1102 = vrot.slane %v1098, 4
        %v1104 = vshrl.u32 %v866, 16
        %v1106 = vrot.slane %v1104, 7
        %v1107 = vshll.u32 %v866, 16
        %v1109 = vor.u32 %v1106, %v1107
        %v1110 = vsel %vm873, %v1102, %v1109
        %v1111 = vrot.slane %v1106, 4
        %v1113 = vshrl.u32 %v867, 16
        %v1115 = vrot.slane %v1113, 7
        %v1116 = vshll.u32 %v867, 16
        %v1118 = vor.u32 %v1115, %v1116
        %v1119 = vrot.slane %v1115, 4
        %v1121 = vshrl.u32 %v868, 16
        %v1123 = vrot.slane %v1121, 7
        %v1124 = vshll.u32 %v868, 16
        %v1126 = vor.u32 %v1123, %v1124
        %v1127 = vsel %vm873, %v1119, %v1126
        %v1128 = vrot.slane %v1123, 4
        %v1130 = vshrl.u32 %v869, 16
        %v1132 = vrot.slane %v1130, 7
        %v1133 = vshll.u32 %v869, 16
        %v1135 = vor.u32 %v1132, %v1133
        %v1136 = vrot.slane %v1132, 4
        %v1138 = vshrl.u32 %v870, 16
        %v1140 = vrot.slane %v1138, 7
        %v1141 = vshll.u32 %v870, 16
        %v1143 = vor.u32 %v1140, %v1141
        %v1144 = vsel %vm873, %v1136, %v1143
        %v1145 = vrot.slane %v1140, 4
        %s1194 = scalar_lea.vmem [#allocation2], 12
        %vm1195 = vcmask 1043456
        %vm1196 = vsmask.f32 7938
        %vm1197 = vmand %vm1195, %vm1196
        %v1198 = vld [vmem:[%s1194] sm:$0xf]
        %v1199 = vsel %vm1197, %v880, %v1198
        %1200 = vst [vmem:[%s1194] sm:$0xf] %v1199
        %1201 = vst [vmem:[%s1194 + $0x4] sm:$0xf] %v889
        %vm1202 = vcmask 1040384
        %vm1203 = vmand %vm1202, %vm871
        %v1204 = vld [vmem:[%s1194 + $0x8] sm:$0x1]
        %v1205 = vsel %vm1203, %v890, %v1204
        %1206 = vst [vmem:[%s1194 + $0x8] sm:$0x1] %v1205
        %v1207 = vld [vmem:[%s1194 + $0xc] sm:$0xf]
        %v1208 = vsel %vm1197, %v897, %v1207
        %1209 = vst [vmem:[%s1194 + $0xc] sm:$0xf] %v1208
        %1210 = vst [vmem:[%s1194 + $0x10] sm:$0xf] %v906
        %v1211 = vld [vmem:[%s1194 + $0x14] sm:$0x1]
        %v1212 = vsel %vm1203, %v907, %v1211
        %1213 = vst [vmem:[%s1194 + $0x14] sm:$0x1] %v1212
        %v1214 = vld [vmem:[%s1194 + $0x18] sm:$0xf]
        %v1215 = vsel %vm1197, %v914, %v1214
        %1216 = vst [vmem:[%s1194 + $0x18] sm:$0xf] %v1215
        %1217 = vst [vmem:[%s1194 + $0x1c] sm:$0xf] %v923
        %v1218 = vld [vmem:[%s1194 + $0x20] sm:$0x1]
        %v1219 = vsel %vm1203, %v924, %v1218
        %1220 = vst [vmem:[%s1194 + $0x20] sm:$0x1] %v1219
        %v1221 = vld [vmem:[%s1194 + $0x24] sm:$0xf]
        %v1222 = vsel %vm1197, %v931, %v1221
        %1223 = vst [vmem:[%s1194 + $0x24] sm:$0xf] %v1222
        %1224 = vst [vmem:[%s1194 + $0x28] sm:$0xf] %v940
        %v1225 = vld [vmem:[%s1194 + $0x2c] sm:$0x1]
        %v1226 = vsel %vm1203, %v941, %v1225
        %1227 = vst [vmem:[%s1194 + $0x2c] sm:$0x1] %v1226
        %v1228 = vld [vmem:[%s1194 + $0x30] sm:$0xf]
        %v1229 = vsel %vm1197, %v948, %v1228
        %1230 = vst [vmem:[%s1194 + $0x30] sm:$0xf] %v1229
        %1231 = vst [vmem:[%s1194 + $0x34] sm:$0xf] %v957
        %v1232 = vld [vmem:[%s1194 + $0x38] sm:$0x1]
        %v1233 = vsel %vm1203, %v958, %v1232
        %1234 = vst [vmem:[%s1194 + $0x38] sm:$0x1] %v1233
        %v1235 = vld [vmem:[%s1194 + $0x3c] sm:$0xf]
        %v1236 = vsel %vm1197, %v965, %v1235
        %1237 = vst [vmem:[%s1194 + $0x3c] sm:$0xf] %v1236
        %1238 = vst [vmem:[%s1194 + $0x40] sm:$0xf] %v974
        %v1239 = vld [vmem:[%s1194 + $0x44] sm:$0x1]
        %v1240 = vsel %vm1203, %v975, %v1239
        %1241 = vst [vmem:[%s1194 + $0x44] sm:$0x1] %v1240
        %v1242 = vld [vmem:[%s1194 + $0x48] sm:$0xf]
        %v1243 = vsel %vm1197, %v982, %v1242
        %1244 = vst [vmem:[%s1194 + $0x48] sm:$0xf] %v1243
        %1245 = vst [vmem:[%s1194 + $0x4c] sm:$0xf] %v991
        %v1246 = vld [vmem:[%s1194 + $0x50] sm:$0x1]
        %v1247 = vsel %vm1203, %v992, %v1246
        %1248 = vst [vmem:[%s1194 + $0x50] sm:$0x1] %v1247
        %v1249 = vld [vmem:[%s1194 + $0x54] sm:$0xf]
        %v1250 = vsel %vm1197, %v999, %v1249
        %1251 = vst [vmem:[%s1194 + $0x54] sm:$0xf] %v1250
        %1252 = vst [vmem:[%s1194 + $0x58] sm:$0xf] %v1008
        %v1253 = vld [vmem:[%s1194 + $0x5c] sm:$0x1]
        %v1254 = vsel %vm1203, %v1009, %v1253
        %1255 = vst [vmem:[%s1194 + $0x5c] sm:$0x1] %v1254
        %v1256 = vld [vmem:[%s1194 + $0x60] sm:$0xf]
        %v1257 = vsel %vm1197, %v1016, %v1256
        %1258 = vst [vmem:[%s1194 + $0x60] sm:$0xf] %v1257
        %1259 = vst [vmem:[%s1194 + $0x64] sm:$0xf] %v1025
        %v1260 = vld [vmem:[%s1194 + $0x68] sm:$0x1]
        %v1261 = vsel %vm1203, %v1026, %v1260
        %1262 = vst [vmem:[%s1194 + $0x68] sm:$0x1] %v1261
        %v1263 = vld [vmem:[%s1194 + $0x6c] sm:$0xf]
        %v1264 = vsel %vm1197, %v1033, %v1263
        %1265 = vst [vmem:[%s1194 + $0x6c] sm:$0xf] %v1264
        %1266 = vst [vmem:[%s1194 + $0x70] sm:$0xf] %v1042
        %v1267 = vld [vmem:[%s1194 + $0x74] sm:$0x1]
        %v1268 = vsel %vm1203, %v1043, %v1267
        %1269 = vst [vmem:[%s1194 + $0x74] sm:$0x1] %v1268
        %v1270 = vld [vmem:[%s1194 + $0x78] sm:$0xf]
        %v1271 = vsel %vm1197, %v1050, %v1270
        %1272 = vst [vmem:[%s1194 + $0x78] sm:$0xf] %v1271
        %1273 = vst [vmem:[%s1194 + $0x7c] sm:$0xf] %v1059
        %v1274 = vld [vmem:[%s1194 + $0x80] sm:$0x1]
        %v1275 = vsel %vm1203, %v1060, %v1274
        %1276 = vst [vmem:[%s1194 + $0x80] sm:$0x1] %v1275
        %v1277 = vld [vmem:[%s1194 + $0x84] sm:$0xf]
        %v1278 = vsel %vm1197, %v1067, %v1277
        %1279 = vst [vmem:[%s1194 + $0x84] sm:$0xf] %v1278
        %1280 = vst [vmem:[%s1194 + $0x88] sm:$0xf] %v1076
        %v1281 = vld [vmem:[%s1194 + $0x8c] sm:$0x1]
        %v1282 = vsel %vm1203, %v1077, %v1281
        %1283 = vst [vmem:[%s1194 + $0x8c] sm:$0x1] %v1282
        %v1284 = vld [vmem:[%s1194 + $0x90] sm:$0xf]
        %v1285 = vsel %vm1197, %v1084, %v1284
        %1286 = vst [vmem:[%s1194 + $0x90] sm:$0xf] %v1285
        %1287 = vst [vmem:[%s1194 + $0x94] sm:$0xf] %v1093
        %v1288 = vld [vmem:[%s1194 + $0x98] sm:$0x1]
        %v1289 = vsel %vm1203, %v1094, %v1288
        %1290 = vst [vmem:[%s1194 + $0x98] sm:$0x1] %v1289
        %v1291 = vld [vmem:[%s1194 + $0x9c] sm:$0xf]
        %v1292 = vsel %vm1197, %v1101, %v1291
        %1293 = vst [vmem:[%s1194 + $0x9c] sm:$0xf] %v1292
        %1294 = vst [vmem:[%s1194 + $0xa0] sm:$0xf] %v1110
        %v1295 = vld [vmem:[%s1194 + $0xa4] sm:$0x1]
        %v1296 = vsel %vm1203, %v1111, %v1295
        %1297 = vst [vmem:[%s1194 + $0xa4] sm:$0x1] %v1296
        %v1298 = vld [vmem:[%s1194 + $0xa8] sm:$0xf]
        %v1299 = vsel %vm1197, %v1118, %v1298
        %1300 = vst [vmem:[%s1194 + $0xa8] sm:$0xf] %v1299
        %1301 = vst [vmem:[%s1194 + $0xac] sm:$0xf] %v1127
        %v1302 = vld [vmem:[%s1194 + $0xb0] sm:$0x1]
        %v1303 = vsel %vm1203, %v1128, %v1302
        %1304 = vst [vmem:[%s1194 + $0xb0] sm:$0x1] %v1303
        %v1305 = vld [vmem:[%s1194 + $0xb4] sm:$0xf]
        %v1306 = vsel %vm1197, %v1135, %v1305
        %1307 = vst [vmem:[%s1194 + $0xb4] sm:$0xf] %v1306
        %1308 = vst [vmem:[%s1194 + $0xb8] sm:$0xf] %v1144
        %v1309 = vld [vmem:[%s1194 + $0xbc] sm:$0x1]
        %v1310 = vsel %vm1203, %v1145, %v1309
        %1311 = vst [vmem:[%s1194 + $0xbc] sm:$0x1] %v1310
        %v1312 = vld [vmem:[#allocation2] sm:$0xf]
        %v1313 = vld [vmem:[#allocation2 + $0x4] sm:$0xf]
        %v1314 = vld [vmem:[#allocation2 + $0xc] sm:$0xf]
        %v1315 = vld [vmem:[#allocation2 + $0x10] sm:$0xf]
        %v1316 = vld [vmem:[#allocation2 + $0x18] sm:$0xf]
        %v1317 = vld [vmem:[#allocation2 + $0x1c] sm:$0xf]
        %v1318 = vld [vmem:[#allocation2 + $0x24] sm:$0xf]
        %v1319 = vld [vmem:[#allocation2 + $0x28] sm:$0xf]
        %v1320 = vld [vmem:[#allocation2 + $0x30] sm:$0xf]
        %v1321 = vld [vmem:[#allocation2 + $0x34] sm:$0xf]
        %v1322 = vld [vmem:[#allocation2 + $0x3c] sm:$0xf]
        %v1323 = vld [vmem:[#allocation2 + $0x40] sm:$0xf]
        %v1324 = vld [vmem:[#allocation2 + $0x48] sm:$0xf]
        %v1325 = vld [vmem:[#allocation2 + $0x4c] sm:$0xf]
        %v1326 = vld [vmem:[#allocation2 + $0x54] sm:$0xf]
        %v1327 = vld [vmem:[#allocation2 + $0x58] sm:$0xf]
        %v1328 = vld [vmem:[#allocation2 + $0x60] sm:$0xf]
        %v1329 = vld [vmem:[#allocation2 + $0x64] sm:$0xf]
        %v1330 = vld [vmem:[#allocation2 + $0x6c] sm:$0xf]
        %v1331 = vld [vmem:[#allocation2 + $0x70] sm:$0xf]
        %v1332 = vld [vmem:[#allocation2 + $0x78] sm:$0xf]
        %v1333 = vld [vmem:[#allocation2 + $0x7c] sm:$0xf]
        %v1334 = vld [vmem:[#allocation2 + $0x84] sm:$0xf]
        %v1335 = vld [vmem:[#allocation2 + $0x88] sm:$0xf]
        %v1336 = vld [vmem:[#allocation2 + $0x90] sm:$0xf]
        %v1337 = vld [vmem:[#allocation2 + $0x94] sm:$0xf]
        %v1338 = vld [vmem:[#allocation2 + $0x9c] sm:$0xf]
        %v1339 = vld [vmem:[#allocation2 + $0xa0] sm:$0xf]
        %v1340 = vld [vmem:[#allocation2 + $0xa8] sm:$0xf]
        %v1341 = vld [vmem:[#allocation2 + $0xac] sm:$0xf]
        %v1342 = vld [vmem:[#allocation2 + $0xb4] sm:$0xf]
        %v1343 = vld [vmem:[#allocation2 + $0xb8] sm:$0xf]
        %v1344 = vld [vmem:[#allocation8] sm:$0xf]
        %v1345 = vld [vmem:[#allocation8 + $0x4] sm:$0xf]
        %v1346 = vld [vmem:[#allocation8 + $0x8] sm:$0xf]
        %v1347 = vld [vmem:[#allocation8 + $0xc] sm:$0xf]
        %v1348 = vld [vmem:[#allocation8 + $0x10] sm:$0xf]
        %v1349 = vld [vmem:[#allocation8 + $0x14] sm:$0xf]
        %v1350 = vld [vmem:[#allocation8 + $0x18] sm:$0xf]
        %v1351 = vld [vmem:[#allocation8 + $0x1c] sm:$0xf]
        %v1352 = vld [vmem:[#allocation8 + $0x20] sm:$0xf]
        %v1353 = vld [vmem:[#allocation8 + $0x24] sm:$0xf]
        %v1354 = vld [vmem:[#allocation8 + $0x28] sm:$0xf]
        %v1355 = vld [vmem:[#allocation8 + $0x2c] sm:$0xf]
        %v1356 = vld [vmem:[#allocation8 + $0x30] sm:$0xf]
        %v1357 = vld [vmem:[#allocation8 + $0x34] sm:$0xf]
        %v1358 = vld [vmem:[#allocation8 + $0x38] sm:$0xf]
        %v1359 = vld [vmem:[#allocation8 + $0x3c] sm:$0xf]
        %v1360 = vld [vmem:[#allocation2 + $0x8] sm:$0x1]
        %v1361 = vld [vmem:[#allocation2 + $0x14] sm:$0x1]
        %v1362 = vld [vmem:[#allocation2 + $0x20] sm:$0x1]
        %v1363 = vld [vmem:[#allocation2 + $0x2c] sm:$0x1]
        %v1364 = vld [vmem:[#allocation2 + $0x38] sm:$0x1]
        %v1365 = vld [vmem:[#allocation2 + $0x44] sm:$0x1]
        %v1366 = vld [vmem:[#allocation2 + $0x50] sm:$0x1]
        %v1367 = vld [vmem:[#allocation2 + $0x5c] sm:$0x1]
        %v1368 = vld [vmem:[#allocation2 + $0x68] sm:$0x1]
        %v1369 = vld [vmem:[#allocation2 + $0x74] sm:$0x1]
        %v1370 = vld [vmem:[#allocation2 + $0x80] sm:$0x1]
        %v1371 = vld [vmem:[#allocation2 + $0x8c] sm:$0x1]
        %v1372 = vld [vmem:[#allocation2 + $0x98] sm:$0x1]
        %v1373 = vld [vmem:[#allocation2 + $0xa4] sm:$0x1]
        %v1374 = vld [vmem:[#allocation2 + $0xb0] sm:$0x1]
        %v1375 = vld [vmem:[#allocation2 + $0xbc] sm:$0x1]
        %vm1376 = vsmask.f32 3328
        %vm1377 = vsmask.f32 7440
        %vm1378 = vmor %vm1376, %vm1377
        %v1380 = vshrl.u32 %v1312, 16
        %v1382 = vrot.slane %v1380, 4
        %v1383 = vshll.u32 %v1312, 16
        %v1385 = vrot.slane %v1383, 5
        %v1386 = vor.u32 %v1382, %v1385
        %v1387 = vrot.slane %v1386, 4
        %v1389 = vshll.u32 %v1313, 16
        %v1391 = vrot.slane %v1389, 5
        %v1392 = vsel %vm1378, %v1387, %v1391
        %v1393 = vshrl.u32 %v1313, 16
        %v1395 = vrot.slane %v1393, 4
        %v1396 = vor.u32 %v1395, %v1391
        %v1397 = vrot.slane %v1396, 4
        %v1399 = vshll.u32 %v1360, 16
        %v1401 = vrot.slane %v1399, 5
        %v1402 = vsel %vm1378, %v1397, %v1401
        %v1404 = vshrl.u32 %v1314, 16
        %v1406 = vrot.slane %v1404, 4
        %v1407 = vshll.u32 %v1314, 16
        %v1409 = vrot.slane %v1407, 5
        %v1410 = vor.u32 %v1406, %v1409
        %v1411 = vrot.slane %v1410, 4
        %v1413 = vshll.u32 %v1315, 16
        %v1415 = vrot.slane %v1413, 5
        %v1416 = vsel %vm1378, %v1411, %v1415
        %v1417 = vshrl.u32 %v1315, 16
        %v1419 = vrot.slane %v1417, 4
        %v1420 = vor.u32 %v1419, %v1415
        %v1421 = vrot.slane %v1420, 4
        %v1423 = vshll.u32 %v1361, 16
        %v1425 = vrot.slane %v1423, 5
        %v1426 = vsel %vm1378, %v1421, %v1425
        %v1428 = vshrl.u32 %v1316, 16
        %v1430 = vrot.slane %v1428, 4
        %v1431 = vshll.u32 %v1316, 16
        %v1433 = vrot.slane %v1431, 5
        %v1434 = vor.u32 %v1430, %v1433
        %v1435 = vrot.slane %v1434, 4
        %v1437 = vshll.u32 %v1317, 16
        %v1439 = vrot.slane %v1437, 5
        %v1440 = vsel %vm1378, %v1435, %v1439
        %v1441 = vshrl.u32 %v1317, 16
        %v1443 = vrot.slane %v1441, 4
        %v1444 = vor.u32 %v1443, %v1439
        %v1445 = vrot.slane %v1444, 4
        %v1447 = vshll.u32 %v1362, 16
        %v1449 = vrot.slane %v1447, 5
        %v1450 = vsel %vm1378, %v1445, %v1449
        %v1452 = vshrl.u32 %v1318, 16
        %v1454 = vrot.slane %v1452, 4
        %v1455 = vshll.u32 %v1318, 16
        %v1457 = vrot.slane %v1455, 5
        %v1458 = vor.u32 %v1454, %v1457
        %v1459 = vrot.slane %v1458, 4
        %v1461 = vshll.u32 %v1319, 16
        %v1463 = vrot.slane %v1461, 5
        %v1464 = vsel %vm1378, %v1459, %v1463
        %v1465 = vshrl.u32 %v1319, 16
        %v1467 = vrot.slane %v1465, 4
        %v1468 = vor.u32 %v1467, %v1463
        %v1469 = vrot.slane %v1468, 4
        %v1471 = vshll.u32 %v1363, 16
        %v1473 = vrot.slane %v1471, 5
        %v1474 = vsel %vm1378, %v1469, %v1473
        %v1476 = vshrl.u32 %v1320, 16
        %v1478 = vrot.slane %v1476, 4
        %v1479 = vshll.u32 %v1320, 16
        %v1481 = vrot.slane %v1479, 5
        %v1482 = vor.u32 %v1478, %v1481
        %v1483 = vrot.slane %v1482, 4
        %v1485 = vshll.u32 %v1321, 16
        %v1487 = vrot.slane %v1485, 5
        %v1488 = vsel %vm1378, %v1483, %v1487
        %v1489 = vshrl.u32 %v1321, 16
        %v1491 = vrot.slane %v1489, 4
        %v1492 = vor.u32 %v1491, %v1487
        %v1493 = vrot.slane %v1492, 4
        %v1495 = vshll.u32 %v1364, 16
        %v1497 = vrot.slane %v1495, 5
        %v1498 = vsel %vm1378, %v1493, %v1497
        %v1500 = vshrl.u32 %v1322, 16
        %v1502 = vrot.slane %v1500, 4
        %v1503 = vshll.u32 %v1322, 16
        %v1505 = vrot.slane %v1503, 5
        %v1506 = vor.u32 %v1502, %v1505
        %v1507 = vrot.slane %v1506, 4
        %v1509 = vshll.u32 %v1323, 16
        %v1511 = vrot.slane %v1509, 5
        %v1512 = vsel %vm1378, %v1507, %v1511
        %v1513 = vshrl.u32 %v1323, 16
        %v1515 = vrot.slane %v1513, 4
        %v1516 = vor.u32 %v1515, %v1511
        %v1517 = vrot.slane %v1516, 4
        %v1519 = vshll.u32 %v1365, 16
        %v1521 = vrot.slane %v1519, 5
        %v1522 = vsel %vm1378, %v1517, %v1521
        %v1524 = vshrl.u32 %v1324, 16
        %v1526 = vrot.slane %v1524, 4
        %v1527 = vshll.u32 %v1324, 16
        %v1529 = vrot.slane %v1527, 5
        %v1530 = vor.u32 %v1526, %v1529
        %v1531 = vrot.slane %v1530, 4
        %v1533 = vshll.u32 %v1325, 16
        %v1535 = vrot.slane %v1533, 5
        %v1536 = vsel %vm1378, %v1531, %v1535
        %v1537 = vshrl.u32 %v1325, 16
        %v1539 = vrot.slane %v1537, 4
        %v1540 = vor.u32 %v1539, %v1535
        %v1541 = vrot.slane %v1540, 4
        %v1543 = vshll.u32 %v1366, 16
        %v1545 = vrot.slane %v1543, 5
        %v1546 = vsel %vm1378, %v1541, %v1545
        %v1548 = vshrl.u32 %v1326, 16
        %v1550 = vrot.slane %v1548, 4
        %v1551 = vshll.u32 %v1326, 16
        %v1553 = vrot.slane %v1551, 5
        %v1554 = vor.u32 %v1550, %v1553
        %v1555 = vrot.slane %v1554, 4
        %v1557 = vshll.u32 %v1327, 16
        %v1559 = vrot.slane %v1557, 5
        %v1560 = vsel %vm1378, %v1555, %v1559
        %v1561 = vshrl.u32 %v1327, 16
        %v1563 = vrot.slane %v1561, 4
        %v1564 = vor.u32 %v1563, %v1559
        %v1565 = vrot.slane %v1564, 4
        %v1567 = vshll.u32 %v1367, 16
        %v1569 = vrot.slane %v1567, 5
        %v1570 = vsel %vm1378, %v1565, %v1569
        %v1572 = vshrl.u32 %v1328, 16
        %v1574 = vrot.slane %v1572, 4
        %v1575 = vshll.u32 %v1328, 16
        %v1577 = vrot.slane %v1575, 5
        %v1578 = vor.u32 %v1574, %v1577
        %v1579 = vrot.slane %v1578, 4
        %v1581 = vshll.u32 %v1329, 16
        %v1583 = vrot.slane %v1581, 5
        %v1584 = vsel %vm1378, %v1579, %v1583
        %v1585 = vshrl.u32 %v1329, 16
        %v1587 = vrot.slane %v1585, 4
        %v1588 = vor.u32 %v1587, %v1583
        %v1589 = vrot.slane %v1588, 4
        %v1591 = vshll.u32 %v1368, 16
        %v1593 = vrot.slane %v1591, 5
        %v1594 = vsel %vm1378, %v1589, %v1593
        %v1596 = vshrl.u32 %v1330, 16
        %v1598 = vrot.slane %v1596, 4
        %v1599 = vshll.u32 %v1330, 16
        %v1601 = vrot.slane %v1599, 5
        %v1602 = vor.u32 %v1598, %v1601
        %v1603 = vrot.slane %v1602, 4
        %v1605 = vshll.u32 %v1331, 16
        %v1607 = vrot.slane %v1605, 5
        %v1608 = vsel %vm1378, %v1603, %v1607
        %v1609 = vshrl.u32 %v1331, 16
        %v1611 = vrot.slane %v1609, 4
        %v1612 = vor.u32 %v1611, %v1607
        %v1613 = vrot.slane %v1612, 4
        %v1615 = vshll.u32 %v1369, 16
        %v1617 = vrot.slane %v1615, 5
        %v1618 = vsel %vm1378, %v1613, %v1617
        %v1620 = vshrl.u32 %v1332, 16
        %v1622 = vrot.slane %v1620, 4
        %v1623 = vshll.u32 %v1332, 16
        %v1625 = vrot.slane %v1623, 5
        %v1626 = vor.u32 %v1622, %v1625
        %v1627 = vrot.slane %v1626, 4
        %v1629 = vshll.u32 %v1333, 16
        %v1631 = vrot.slane %v1629, 5
        %v1632 = vsel %vm1378, %v1627, %v1631
        %v1633 = vshrl.u32 %v1333, 16
        %v1635 = vrot.slane %v1633, 4
        %v1636 = vor.u32 %v1635, %v1631
        %v1637 = vrot.slane %v1636, 4
        %v1639 = vshll.u32 %v1370, 16
        %v1641 = vrot.slane %v1639, 5
        %v1642 = vsel %vm1378, %v1637, %v1641
        %v1644 = vshrl.u32 %v1334, 16
        %v1646 = vrot.slane %v1644, 4
        %v1647 = vshll.u32 %v1334, 16
        %v1649 = vrot.slane %v1647, 5
        %v1650 = vor.u32 %v1646, %v1649
        %v1651 = vrot.slane %v1650, 4
        %v1653 = vshll.u32 %v1335, 16
        %v1655 = vrot.slane %v1653, 5
        %v1656 = vsel %vm1378, %v1651, %v1655
        %v1657 = vshrl.u32 %v1335, 16
        %v1659 = vrot.slane %v1657, 4
        %v1660 = vor.u32 %v1659, %v1655
        %v1661 = vrot.slane %v1660, 4
        %v1663 = vshll.u32 %v1371, 16
        %v1665 = vrot.slane %v1663, 5
        %v1666 = vsel %vm1378, %v1661, %v1665
        %v1668 = vshrl.u32 %v1336, 16
        %v1670 = vrot.slane %v1668, 4
        %v1671 = vshll.u32 %v1336, 16
        %v1673 = vrot.slane %v1671, 5
        %v1674 = vor.u32 %v1670, %v1673
        %v1675 = vrot.slane %v1674, 4
        %v1677 = vshll.u32 %v1337, 16
        %v1679 = vrot.slane %v1677, 5
        %v1680 = vsel %vm1378, %v1675, %v1679
        %v1681 = vshrl.u32 %v1337, 16
        %v1683 = vrot.slane %v1681, 4
        %v1684 = vor.u32 %v1683, %v1679
        %v1685 = vrot.slane %v1684, 4
        %v1687 = vshll.u32 %v1372, 16
        %v1689 = vrot.slane %v1687, 5
        %v1690 = vsel %vm1378, %v1685, %v1689
        %v1692 = vshrl.u32 %v1338, 16
        %v1694 = vrot.slane %v1692, 4
        %v1695 = vshll.u32 %v1338, 16
        %v1697 = vrot.slane %v1695, 5
        %v1698 = vor.u32 %v1694, %v1697
        %v1699 = vrot.slane %v1698, 4
        %v1701 = vshll.u32 %v1339, 16
        %v1703 = vrot.slane %v1701, 5
        %v1704 = vsel %vm1378, %v1699, %v1703
        %v1705 = vshrl.u32 %v1339, 16
        %v1707 = vrot.slane %v1705, 4
        %v1708 = vor.u32 %v1707, %v1703
        %v1709 = vrot.slane %v1708, 4
        %v1711 = vshll.u32 %v1373, 16
        %v1713 = vrot.slane %v1711, 5
        %v1714 = vsel %vm1378, %v1709, %v1713
        %v1716 = vshrl.u32 %v1340, 16
        %v1718 = vrot.slane %v1716, 4
        %v1719 = vshll.u32 %v1340, 16
        %v1721 = vrot.slane %v1719, 5
        %v1722 = vor.u32 %v1718, %v1721
        %v1723 = vrot.slane %v1722, 4
        %v1725 = vshll.u32 %v1341, 16
        %v1727 = vrot.slane %v1725, 5
        %v1728 = vsel %vm1378, %v1723, %v1727
        %v1729 = vshrl.u32 %v1341, 16
        %v1731 = vrot.slane %v1729, 4
        %v1732 = vor.u32 %v1731, %v1727
        %v1733 = vrot.slane %v1732, 4
        %v1735 = vshll.u32 %v1374, 16
        %v1737 = vrot.slane %v1735, 5
        %v1738 = vsel %vm1378, %v1733, %v1737
        %v1740 = vshrl.u32 %v1342, 16
        %v1742 = vrot.slane %v1740, 4
        %v1743 = vshll.u32 %v1342, 16
        %v1745 = vrot.slane %v1743, 5
        %v1746 = vor.u32 %v1742, %v1745
        %v1747 = vrot.slane %v1746, 4
        %v1749 = vshll.u32 %v1343, 16
        %v1751 = vrot.slane %v1749, 5
        %v1752 = vsel %vm1378, %v1747, %v1751
        %v1753 = vshrl.u32 %v1343, 16
        %v1755 = vrot.slane %v1753, 4
        %v1756 = vor.u32 %v1755, %v1751
        %v1757 = vrot.slane %v1756, 4
        %v1759 = vshll.u32 %v1375, 16
        %v1761 = vrot.slane %v1759, 5
        %v1762 = vsel %vm1378, %v1757, %v1761
        %s1763 = scalar_lea.vmem [#allocation8], 64
        %v1764 = vld [vmem:[%s1763] sm:$0xf]
        %v1765 = vld [vmem:[%s1763 + $0x4] sm:$0xf]
        %v1766 = vld [vmem:[%s1763 + $0x8] sm:$0xf]
        %v1767 = vld [vmem:[%s1763 + $0xc] sm:$0xf]
        %v1768 = vld [vmem:[%s1763 + $0x10] sm:$0xf]
        %v1769 = vld [vmem:[%s1763 + $0x14] sm:$0xf]
        %v1770 = vld [vmem:[%s1763 + $0x18] sm:$0xf]
        %v1771 = vld [vmem:[%s1763 + $0x1c] sm:$0xf]
        %v1772 = vld [vmem:[%s1763 + $0x20] sm:$0xf]
        %v1773 = vld [vmem:[%s1763 + $0x24] sm:$0xf]
        %v1774 = vld [vmem:[%s1763 + $0x28] sm:$0xf]
        %v1775 = vld [vmem:[%s1763 + $0x2c] sm:$0xf]
        %v1776 = vld [vmem:[%s1763 + $0x30] sm:$0xf]
        %v1777 = vld [vmem:[%s1763 + $0x34] sm:$0xf]
        %v1778 = vld [vmem:[%s1763 + $0x38] sm:$0xf]
        %v1779 = vld [vmem:[%s1763 + $0x3c] sm:$0xf]
        %v1780 = vunpack.c.l.b16 %v1392
        %v1781 = vunpack.c.l.b16 %v1402
        %v1782 = vunpack.c.l.b16 %v1416
        %v1783 = vunpack.c.l.b16 %v1426
        %v1784 = vunpack.c.l.b16 %v1440
        %v1785 = vunpack.c.l.b16 %v1450
        %v1786 = vunpack.c.l.b16 %v1464
        %v1787 = vunpack.c.l.b16 %v1474
        %v1788 = vunpack.c.l.b16 %v1488
        %v1789 = vunpack.c.l.b16 %v1498
        %v1790 = vunpack.c.l.b16 %v1512
        %v1791 = vunpack.c.l.b16 %v1522
        %v1792 = vunpack.c.l.b16 %v1536
        %v1793 = vunpack.c.l.b16 %v1546
        %v1794 = vunpack.c.l.b16 %v1560
        %v1795 = vunpack.c.l.b16 %v1570
        %v1796 = vunpack.c.l.b16 %v1584
        %v1797 = vunpack.c.l.b16 %v1594
        %v1798 = vunpack.c.l.b16 %v1608
        %v1799 = vunpack.c.l.b16 %v1618
        %v1800 = vunpack.c.l.b16 %v1632
        %v1801 = vunpack.c.l.b16 %v1642
        %v1802 = vunpack.c.l.b16 %v1656
        %v1803 = vunpack.c.l.b16 %v1666
        %v1804 = vunpack.c.l.b16 %v1680
        %v1805 = vunpack.c.l.b16 %v1690
        %v1806 = vunpack.c.l.b16 %v1704
        %v1807 = vunpack.c.l.b16 %v1714
        %v1808 = vunpack.c.l.b16 %v1728
        %v1809 = vunpack.c.l.b16 %v1738
        %v1810 = vunpack.c.l.b16 %v1752
        %v1811 = vunpack.c.l.b16 %v1762
        %v1812 = vpack.c.b16 %v1781, %v1780
        %v1813 = vpack.c.b16 %v1783, %v1782
        %v1814 = vpack.c.b16 %v1785, %v1784
        %v1815 = vpack.c.b16 %v1787, %v1786
        %v1816 = vpack.c.b16 %v1789, %v1788
        %v1817 = vpack.c.b16 %v1791, %v1790
        %v1818 = vpack.c.b16 %v1793, %v1792
        %v1819 = vpack.c.b16 %v1795, %v1794
        %v1820 = vpack.c.b16 %v1797, %v1796
        %v1821 = vpack.c.b16 %v1799, %v1798
        %v1822 = vpack.c.b16 %v1801, %v1800
        %v1823 = vpack.c.b16 %v1803, %v1802
        %v1824 = vpack.c.b16 %v1805, %v1804
        %v1825 = vpack.c.b16 %v1807, %v1806
        %v1826 = vpack.c.b16 %v1809, %v1808
        %v1827 = vpack.c.b16 %v1811, %v1810
        %v1860 = vunpack.c.l.b16 %v1764
        %v1861 = vunpack.c.l.b16 %v1765
        %v1862 = vunpack.c.l.b16 %v1766
        %v1863 = vunpack.c.l.b16 %v1767
        %v1864 = vunpack.c.l.b16 %v1768
        %v1865 = vunpack.c.l.b16 %v1769
        %v1866 = vunpack.c.l.b16 %v1770
        %v1867 = vunpack.c.l.b16 %v1771
        %v1868 = vunpack.c.l.b16 %v1772
        %v1869 = vunpack.c.l.b16 %v1773
        %v1870 = vunpack.c.l.b16 %v1774
        %v1871 = vunpack.c.l.b16 %v1775
        %v1872 = vunpack.c.l.b16 %v1776
        %v1873 = vunpack.c.l.b16 %v1777
        %v1874 = vunpack.c.l.b16 %v1778
        %v1875 = vunpack.c.l.b16 %v1779
        %v1876 = vpack.c.b16 %v1861, %v1860
        %v1877 = vpack.c.b16 %v1863, %v1862
        %v1878 = vpack.c.b16 %v1865, %v1864
        %v1879 = vpack.c.b16 %v1867, %v1866
        %v1880 = vpack.c.b16 %v1869, %v1868
        %v1881 = vpack.c.b16 %v1871, %v1870
        %v1882 = vpack.c.b16 %v1873, %v1872
        %v1883 = vpack.c.b16 %v1875, %v1874
        %1892 = vmatprep.subr.bf16.mxu0 0
        %1893 = vmatpush1.bf16.msra.mxu0 %v1876
        %1894 = vmatprep.subr.bf16.mxu0 0
        %1895 = vmatpush1.bf16.msra.mxu0 %v1877
        %1896 = vmatprep.subr.bf16.mxu0 0
        %1897 = vmatpush1.bf16.msra.mxu0 %v1878
        %1898 = vmatprep.subr.bf16.mxu0 0
        %1899 = vmatpush1.bf16.msra.mxu0 %v1879
        %1900 = vmatprep.subr.bf16.mxu0 0
        %1901 = vmatpush1.bf16.msra.mxu0 %v1880
        %1902 = vmatprep.subr.bf16.mxu0 0
        %1903 = vmatpush1.bf16.msra.mxu0 %v1881
        %1904 = vmatprep.subr.bf16.mxu0 0
        %1905 = vmatpush1.bf16.msra.mxu0 %v1882
        %1906 = vmatprep.subr.bf16.mxu0 0
        %1907 = vmatpush1.bf16.msra.mxu0 %v1883
        %1908 = vmatprep.subr.bf16.mxu0 0
        %1909 = vmatpush1.bf16.msra.mxu0 0
        %1910 = vmatprep.subr.bf16.mxu0 0
        %1911 = vmatpush1.bf16.msra.mxu0 0
        %1912 = vmatprep.subr.bf16.mxu0 0
        %1913 = vmatpush1.bf16.msra.mxu0 0
        %1914 = vmatprep.subr.bf16.mxu0 0
        %1915 = vmatpush1.bf16.msra.mxu0 0
        %1916 = vmatprep.subr.bf16.mxu0 0
        %1917 = vmatpush1.bf16.msra.mxu0 0
        %1918 = vmatprep.subr.bf16.mxu0 0
        %1919 = vmatpush1.bf16.msra.mxu0 0
        %1920 = vmatprep.subr.bf16.mxu0 0
        %1921 = vmatpush1.bf16.msra.mxu0 0
        %1922 = vmatprep.subr.bf16.mxu0 0
        %1923 = vmatpush1.bf16.msra.mxu0 0
        %1924 = vmatprep.mubr.bf16.mxu0 0
        %1925 = vmatmul.mubr.bf16.gmra.mrb[0].mxu0 %v1812
        %v1926 = vpop.f32.mrb[0].mxu0
        %v1927 = vadd.f32 0.0, %v1926
        %v1928 = vpop.f32.mrb[0].mxu0
        %v1929 = vpop.f32.mrb[0].mxu0
        %v1930 = vadd.f32 0.0, %v1929
        %v1931 = vpop.f32.mrb[0].mxu0
        %1932 = vmatprep.mubr.bf16.mxu0 0
        %1933 = vmatmul.mubr.bf16.gmra.mrb[0].mxu0 %v1813
        %v1934 = vpop.f32.mrb[0].mxu0
        %v1935 = vadd.f32 0.0, %v1934
        %v1936 = vpop.f32.mrb[0].mxu0
        %v1937 = vpop.f32.mrb[0].mxu0
        %v1938 = vadd.f32 0.0, %v1937
        %v1939 = vpop.f32.mrb[0].mxu0
        %1940 = vmatprep.mubr.bf16.mxu0 0
        %1941 = vmatmul.mubr.bf16.gmra.mrb[0].mxu0 %v1814
        %v1942 = vpop.f32.mrb[0].mxu0
        %v1943 = vadd.f32 0.0, %v1942
        %v1944 = vpop.f32.mrb[0].mxu0
        %v1945 = vpop.f32.mrb[0].mxu0
        %v1946 = vadd.f32 0.0, %v1945
        %v1947 = vpop.f32.mrb[0].mxu0
        %1948 = vmatprep.mubr.bf16.mxu0 0
        %1949 = vmatmul.mubr.bf16.gmra.mrb[0].mxu0 %v1815
        %v1950 = vpop.f32.mrb[0].mxu0
        %v1951 = vadd.f32 0.0, %v1950
        %v1952 = vpop.f32.mrb[0].mxu0
        %v1953 = vpop.f32.mrb[0].mxu0
        %v1954 = vadd.f32 0.0, %v1953
        %v1955 = vpop.f32.mrb[0].mxu0
        %1956 = vmatprep.mubr.bf16.mxu0 0
        %1957 = vmatmul.mubr.bf16.gmra.mrb[0].mxu0 %v1816
        %v1958 = vpop.f32.mrb[0].mxu0
        %v1959 = vadd.f32 0.0, %v1958
        %v1960 = vpop.f32.mrb[0].mxu0
        %v1961 = vpop.f32.mrb[0].mxu0
        %v1962 = vadd.f32 0.0, %v1961
        %v1963 = vpop.f32.mrb[0].mxu0
        %1964 = vmatprep.mubr.bf16.mxu0 0
        %1965 = vmatmul.mubr.bf16.gmra.mrb[0].mxu0 %v1817
        %v1966 = vpop.f32.mrb[0].mxu0
        %v1967 = vadd.f32 0.0, %v1966
        %v1968 = vpop.f32.mrb[0].mxu0
        %v1969 = vpop.f32.mrb[0].mxu0
        %v1970 = vadd.f32 0.0, %v1969
        %v1971 = vpop.f32.mrb[0].mxu0
        %1972 = vmatprep.mubr.bf16.mxu0 0
        %1973 = vmatmul.mubr.bf16.gmra.mrb[0].mxu0 %v1818
        %v1974 = vpop.f32.mrb[0].mxu0
        %v1975 = vadd.f32 0.0, %v1974
        %v1976 = vpop.f32.mrb[0].mxu0
        %v1977 = vpop.f32.mrb[0].mxu0
        %v1978 = vadd.f32 0.0, %v1977
        %v1979 = vpop.f32.mrb[0].mxu0
        %1980 = vmatprep.mubr.bf16.mxu0 0
        %1981 = vmatmul.mubr.bf16.gmra.mrb[0].mxu0 %v1819
        %v1982 = vpop.f32.mrb[0].mxu0
        %v1983 = vadd.f32 0.0, %v1982
        %v1984 = vpop.f32.mrb[0].mxu0
        %v1985 = vpop.f32.mrb[0].mxu0
        %v1986 = vadd.f32 0.0, %v1985
        %v1987 = vpop.f32.mrb[0].mxu0
        %1988 = vmatprep.mubr.bf16.mxu0 0
        %1989 = vmatmul.mubr.bf16.gmra.mrb[0].mxu0 %v1820
        %v1990 = vpop.f32.mrb[0].mxu0
        %v1991 = vadd.f32 0.0, %v1990
        %v1992 = vpop.f32.mrb[0].mxu0
        %v1993 = vpop.f32.mrb[0].mxu0
        %v1994 = vadd.f32 0.0, %v1993
        %v1995 = vpop.f32.mrb[0].mxu0
        %1996 = vmatprep.mubr.bf16.mxu0 0
        %1997 = vmatmul.mubr.bf16.gmra.mrb[0].mxu0 %v1821
        %v1998 = vpop.f32.mrb[0].mxu0
        %v1999 = vadd.f32 0.0, %v1998
        %v2000 = vpop.f32.mrb[0].mxu0
        %v2001 = vpop.f32.mrb[0].mxu0
        %v2002 = vadd.f32 0.0, %v2001
        %v2003 = vpop.f32.mrb[0].mxu0
        %2004 = vmatprep.mubr.bf16.mxu0 0
        %2005 = vmatmul.mubr.bf16.gmra.mrb[0].mxu0 %v1822
        %v2006 = vpop.f32.mrb[0].mxu0
        %v2007 = vadd.f32 0.0, %v2006
        %v2008 = vpop.f32.mrb[0].mxu0
        %v2009 = vpop.f32.mrb[0].mxu0
        %v2010 = vadd.f32 0.0, %v2009
        %v2011 = vpop.f32.mrb[0].mxu0
        %2012 = vmatprep.mubr.bf16.mxu0 0
        %2013 = vmatmul.mubr.bf16.gmra.mrb[0].mxu0 %v1823
        %v2014 = vpop.f32.mrb[0].mxu0
        %v2015 = vadd.f32 0.0, %v2014
        %v2016 = vpop.f32.mrb[0].mxu0
        %v2017 = vpop.f32.mrb[0].mxu0
        %v2018 = vadd.f32 0.0, %v2017
        %v2019 = vpop.f32.mrb[0].mxu0
        %2020 = vmatprep.mubr.bf16.mxu0 0
        %2021 = vmatmul.mubr.bf16.gmra.mrb[0].mxu0 %v1824
        %v2022 = vpop.f32.mrb[0].mxu0
        %v2023 = vadd.f32 0.0, %v2022
        %v2024 = vpop.f32.mrb[0].mxu0
        %v2025 = vpop.f32.mrb[0].mxu0
        %v2026 = vadd.f32 0.0, %v2025
        %v2027 = vpop.f32.mrb[0].mxu0
        %2028 = vmatprep.mubr.bf16.mxu0 0
        %2029 = vmatmul.mubr.bf16.gmra.mrb[0].mxu0 %v1825
        %v2030 = vpop.f32.mrb[0].mxu0
        %v2031 = vadd.f32 0.0, %v2030
        %v2032 = vpop.f32.mrb[0].mxu0
        %v2033 = vpop.f32.mrb[0].mxu0
        %v2034 = vadd.f32 0.0, %v2033
        %v2035 = vpop.f32.mrb[0].mxu0
        %2036 = vmatprep.mubr.bf16.mxu0 0
        %2037 = vmatmul.mubr.bf16.gmra.mrb[0].mxu0 %v1826
        %v2038 = vpop.f32.mrb[0].mxu0
        %v2039 = vadd.f32 0.0, %v2038
        %v2040 = vpop.f32.mrb[0].mxu0
        %v2041 = vpop.f32.mrb[0].mxu0
        %v2042 = vadd.f32 0.0, %v2041
        %v2043 = vpop.f32.mrb[0].mxu0
        %2044 = vmatprep.mubr.bf16.mxu0 0
        %2045 = vmatmul.mubr.bf16.gmra.mrb[0].mxu0 %v1827
        %v2046 = vpop.f32.mrb[0].mxu0
        %v2047 = vadd.f32 0.0, %v2046
        %v2048 = vpop.f32.mrb[0].mxu0
        %v2049 = vpop.f32.mrb[0].mxu0
        %v2050 = vadd.f32 0.0, %v2049
        %v2051 = vpop.f32.mrb[0].mxu0
        %2052 = vdwg.mxu0
        %v2085 = vunpack.c.l.b16 %v1312
        %v2086 = vunpack.c.l.b16 %v1313
        %v2087 = vunpack.c.l.b16 %v1314
        %v2088 = vunpack.c.l.b16 %v1315
        %v2089 = vunpack.c.l.b16 %v1316
        %v2090 = vunpack.c.l.b16 %v1317
        %v2091 = vunpack.c.l.b16 %v1318
        %v2092 = vunpack.c.l.b16 %v1319
        %v2093 = vunpack.c.l.b16 %v1320
        %v2094 = vunpack.c.l.b16 %v1321
        %v2095 = vunpack.c.l.b16 %v1322
        %v2096 = vunpack.c.l.b16 %v1323
        %v2097 = vunpack.c.l.b16 %v1324
        %v2098 = vunpack.c.l.b16 %v1325
        %v2099 = vunpack.c.l.b16 %v1326
        %v2100 = vunpack.c.l.b16 %v1327
        %v2101 = vunpack.c.l.b16 %v1328
        %v2102 = vunpack.c.l.b16 %v1329
        %v2103 = vunpack.c.l.b16 %v1330
        %v2104 = vunpack.c.l.b16 %v1331
        %v2105 = vunpack.c.l.b16 %v1332
        %v2106 = vunpack.c.l.b16 %v1333
        %v2107 = vunpack.c.l.b16 %v1334
        %v2108 = vunpack.c.l.b16 %v1335
        %v2109 = vunpack.c.l.b16 %v1336
        %v2110 = vunpack.c.l.b16 %v1337
        %v2111 = vunpack.c.l.b16 %v1338
        %v2112 = vunpack.c.l.b16 %v1339
        %v2113 = vunpack.c.l.b16 %v1340
        %v2114 = vunpack.c.l.b16 %v1341
        %v2115 = vunpack.c.l.b16 %v1342
        %v2116 = vunpack.c.l.b16 %v1343
        %v2117 = vpack.c.b16 %v2086, %v2085
        %v2118 = vpack.c.b16 %v2088, %v2087
        %v2119 = vpack.c.b16 %v2090, %v2089
        %v2120 = vpack.c.b16 %v2092, %v2091
        %v2121 = vpack.c.b16 %v2094, %v2093
        %v2122 = vpack.c.b16 %v2096, %v2095
        %v2123 = vpack.c.b16 %v2098, %v2097
        %v2124 = vpack.c.b16 %v2100, %v2099
        %v2125 = vpack.c.b16 %v2102, %v2101
        %v2126 = vpack.c.b16 %v2104, %v2103
        %v2127 = vpack.c.b16 %v2106, %v2105
        %v2128 = vpack.c.b16 %v2108, %v2107
        %v2129 = vpack.c.b16 %v2110, %v2109
        %v2130 = vpack.c.b16 %v2112, %v2111
        %v2131 = vpack.c.b16 %v2114, %v2113
        %v2132 = vpack.c.b16 %v2116, %v2115
        %v2165 = vunpack.c.l.b16 %v1344
        %v2166 = vunpack.c.l.b16 %v1345
        %v2167 = vunpack.c.l.b16 %v1346
        %v2168 = vunpack.c.l.b16 %v1347
        %v2169 = vunpack.c.l.b16 %v1348
        %v2170 = vunpack.c.l.b16 %v1349
        %v2171 = vunpack.c.l.b16 %v1350
        %v2172 = vunpack.c.l.b16 %v1351
        %v2173 = vunpack.c.l.b16 %v1352
        %v2174 = vunpack.c.l.b16 %v1353
        %v2175 = vunpack.c.l.b16 %v1354
        %v2176 = vunpack.c.l.b16 %v1355
        %v2177 = vunpack.c.l.b16 %v1356
        %v2178 = vunpack.c.l.b16 %v1357
        %v2179 = vunpack.c.l.b16 %v1358
        %v2180 = vunpack.c.l.b16 %v1359
        %v2181 = vpack.c.b16 %v2166, %v2165
        %v2182 = vpack.c.b16 %v2168, %v2167
        %v2183 = vpack.c.b16 %v2170, %v2169
        %v2184 = vpack.c.b16 %v2172, %v2171
        %v2185 = vpack.c.b16 %v2174, %v2173
        %v2186 = vpack.c.b16 %v2176, %v2175
        %v2187 = vpack.c.b16 %v2178, %v2177
        %v2188 = vpack.c.b16 %v2180, %v2179
        %2197 = vmatprep.subr.bf16.mxu0 0
        %2198 = vmatpush1.bf16.msra.mxu0 %v2181
        %2199 = vmatprep.subr.bf16.mxu0 0
        %2200 = vmatpush1.bf16.msra.mxu0 %v2182
        %2201 = vmatprep.subr.bf16.mxu0 0
        %2202 = vmatpush1.bf16.msra.mxu0 %v2183
        %2203 = vmatprep.subr.bf16.mxu0 0
        %2204 = vmatpush1.bf16.msra.mxu0 %v2184
        %2205 = vmatprep.subr.bf16.mxu0 0
        %2206 = vmatpush1.bf16.msra.mxu0 %v2185
        %2207 = vmatprep.subr.bf16.mxu0 0
        %2208 = vmatpush1.bf16.msra.mxu0 %v2186
        %2209 = vmatprep.subr.bf16.mxu0 0
        %2210 = vmatpush1.bf16.msra.mxu0 %v2187
        %2211 = vmatprep.subr.bf16.mxu0 0
        %2212 = vmatpush1.bf16.msra.mxu0 %v2188
        %2213 = vmatprep.subr.bf16.mxu0 0
        %2214 = vmatpush1.bf16.msra.mxu0 0
        %2215 = vmatprep.subr.bf16.mxu0 0
        %2216 = vmatpush1.bf16.msra.mxu0 0
        %2217 = vmatprep.subr.bf16.mxu0 0
        %2218 = vmatpush1.bf16.msra.mxu0 0
        %2219 = vmatprep.subr.bf16.mxu0 0
        %2220 = vmatpush1.bf16.msra.mxu0 0
        %2221 = vmatprep.subr.bf16.mxu0 0
        %2222 = vmatpush1.bf16.msra.mxu0 0
        %2223 = vmatprep.subr.bf16.mxu0 0
        %2224 = vmatpush1.bf16.msra.mxu0 0
        %2225 = vmatprep.subr.bf16.mxu0 0
        %2226 = vmatpush1.bf16.msra.mxu0 0
        %2227 = vmatprep.subr.bf16.mxu0 0
        %2228 = vmatpush1.bf16.msra.mxu0 0
        %2229 = vmatprep.mubr.bf16.mxu0 0
        %2230 = vmatmul.mubr.bf16.gmra.mrb[0].mxu0 %v2117
        %v2231 = vpop.f32.mrb[0].mxu0
        %v2232 = vadd.f32 %v1927, %v2231
        %v2233 = vpop.f32.mrb[0].mxu0
        %v2234 = vpop.f32.mrb[0].mxu0
        %v2235 = vadd.f32 %v1930, %v2234
        %v2236 = vpop.f32.mrb[0].mxu0
        %2237 = vmatprep.mubr.bf16.mxu0 0
        %2238 = vmatmul.mubr.bf16.gmra.mrb[0].mxu0 %v2118
        %v2239 = vpop.f32.mrb[0].mxu0
        %v2240 = vadd.f32 %v1935, %v2239
        %v2241 = vpop.f32.mrb[0].mxu0
        %v2242 = vpop.f32.mrb[0].mxu0
        %v2243 = vadd.f32 %v1938, %v2242
        %v2244 = vpop.f32.mrb[0].mxu0
        %2245 = vmatprep.mubr.bf16.mxu0 0
        %2246 = vmatmul.mubr.bf16.gmra.mrb[0].mxu0 %v2119
        %v2247 = vpop.f32.mrb[0].mxu0
        %v2248 = vadd.f32 %v1943, %v2247
        %v2249 = vpop.f32.mrb[0].mxu0
        %v2250 = vpop.f32.mrb[0].mxu0
        %v2251 = vadd.f32 %v1946, %v2250
        %v2252 = vpop.f32.mrb[0].mxu0
        %2253 = vmatprep.mubr.bf16.mxu0 0
        %2254 = vmatmul.mubr.bf16.gmra.mrb[0].mxu0 %v2120
        %v2255 = vpop.f32.mrb[0].mxu0
        %v2256 = vadd.f32 %v1951, %v2255
        %v2257 = vpop.f32.mrb[0].mxu0
        %v2258 = vpop.f32.mrb[0].mxu0
        %v2259 = vadd.f32 %v1954, %v2258
        %v2260 = vpop.f32.mrb[0].mxu0
        %2261 = vmatprep.mubr.bf16.mxu0 0
        %2262 = vmatmul.mubr.bf16.gmra.mrb[0].mxu0 %v2121
        %v2263 = vpop.f32.mrb[0].mxu0
        %v2264 = vadd.f32 %v1959, %v2263
        %v2265 = vpop.f32.mrb[0].mxu0
        %v2266 = vpop.f32.mrb[0].mxu0
        %v2267 = vadd.f32 %v1962, %v2266
        %v2268 = vpop.f32.mrb[0].mxu0
        %2269 = vmatprep.mubr.bf16.mxu0 0
        %2270 = vmatmul.mubr.bf16.gmra.mrb[0].mxu0 %v2122
        %v2271 = vpop.f32.mrb[0].mxu0
        %v2272 = vadd.f32 %v1967, %v2271
        %v2273 = vpop.f32.mrb[0].mxu0
        %v2274 = vpop.f32.mrb[0].mxu0
        %v2275 = vadd.f32 %v1970, %v2274
        %v2276 = vpop.f32.mrb[0].mxu0
        %2277 = vmatprep.mubr.bf16.mxu0 0
        %2278 = vmatmul.mubr.bf16.gmra.mrb[0].mxu0 %v2123
        %v2279 = vpop.f32.mrb[0].mxu0
        %v2280 = vadd.f32 %v1975, %v2279
        %v2281 = vpop.f32.mrb[0].mxu0
        %v2282 = vpop.f32.mrb[0].mxu0
        %v2283 = vadd.f32 %v1978, %v2282
        %v2284 = vpop.f32.mrb[0].mxu0
        %2285 = vmatprep.mubr.bf16.mxu0 0
        %2286 = vmatmul.mubr.bf16.gmra.mrb[0].mxu0 %v2124
        %v2287 = vpop.f32.mrb[0].mxu0
        %v2288 = vadd.f32 %v1983, %v2287
        %v2289 = vpop.f32.mrb[0].mxu0
        %v2290 = vpop.f32.mrb[0].mxu0
        %v2291 = vadd.f32 %v1986, %v2290
        %v2292 = vpop.f32.mrb[0].mxu0
        %2293 = vmatprep.mubr.bf16.mxu0 0
        %2294 = vmatmul.mubr.bf16.gmra.mrb[0].mxu0 %v2125
        %v2295 = vpop.f32.mrb[0].mxu0
        %v2296 = vadd.f32 %v1991, %v2295
        %v2297 = vpop.f32.mrb[0].mxu0
        %v2298 = vpop.f32.mrb[0].mxu0
        %v2299 = vadd.f32 %v1994, %v2298
        %v2300 = vpop.f32.mrb[0].mxu0
        %2301 = vmatprep.mubr.bf16.mxu0 0
        %2302 = vmatmul.mubr.bf16.gmra.mrb[0].mxu0 %v2126
        %v2303 = vpop.f32.mrb[0].mxu0
        %v2304 = vadd.f32 %v1999, %v2303
        %v2305 = vpop.f32.mrb[0].mxu0
        %v2306 = vpop.f32.mrb[0].mxu0
        %v2307 = vadd.f32 %v2002, %v2306
        %v2308 = vpop.f32.mrb[0].mxu0
        %2309 = vmatprep.mubr.bf16.mxu0 0
        %2310 = vmatmul.mubr.bf16.gmra.mrb[0].mxu0 %v2127
        %v2311 = vpop.f32.mrb[0].mxu0
        %v2312 = vadd.f32 %v2007, %v2311
        %v2313 = vpop.f32.mrb[0].mxu0
        %v2314 = vpop.f32.mrb[0].mxu0
        %v2315 = vadd.f32 %v2010, %v2314
        %v2316 = vpop.f32.mrb[0].mxu0
        %2317 = vmatprep.mubr.bf16.mxu0 0
        %2318 = vmatmul.mubr.bf16.gmra.mrb[0].mxu0 %v2128
        %v2319 = vpop.f32.mrb[0].mxu0
        %v2320 = vadd.f32 %v2015, %v2319
        %v2321 = vpop.f32.mrb[0].mxu0
        %v2322 = vpop.f32.mrb[0].mxu0
        %v2323 = vadd.f32 %v2018, %v2322
        %v2324 = vpop.f32.mrb[0].mxu0
        %2325 = vmatprep.mubr.bf16.mxu0 0
        %2326 = vmatmul.mubr.bf16.gmra.mrb[0].mxu0 %v2129
        %v2327 = vpop.f32.mrb[0].mxu0
        %v2328 = vadd.f32 %v2023, %v2327
        %v2329 = vpop.f32.mrb[0].mxu0
        %v2330 = vpop.f32.mrb[0].mxu0
        %v2331 = vadd.f32 %v2026, %v2330
        %v2332 = vpop.f32.mrb[0].mxu0
        %2333 = vmatprep.mubr.bf16.mxu0 0
        %2334 = vmatmul.mubr.bf16.gmra.mrb[0].mxu0 %v2130
        %v2335 = vpop.f32.mrb[0].mxu0
        %v2336 = vadd.f32 %v2031, %v2335
        %v2337 = vpop.f32.mrb[0].mxu0
        %v2338 = vpop.f32.mrb[0].mxu0
        %v2339 = vadd.f32 %v2034, %v2338
        %v2340 = vpop.f32.mrb[0].mxu0
        %2341 = vmatprep.mubr.bf16.mxu0 0
        %2342 = vmatmul.mubr.bf16.gmra.mrb[0].mxu0 %v2131
        %v2343 = vpop.f32.mrb[0].mxu0
        %v2344 = vadd.f32 %v2039, %v2343
        %v2345 = vpop.f32.mrb[0].mxu0
        %v2346 = vpop.f32.mrb[0].mxu0
        %v2347 = vadd.f32 %v2042, %v2346
        %v2348 = vpop.f32.mrb[0].mxu0
        %2349 = vmatprep.mubr.bf16.mxu0 0
        %2350 = vmatmul.mubr.bf16.gmra.mrb[0].mxu0 %v2132
        %v2351 = vpop.f32.mrb[0].mxu0
        %v2352 = vadd.f32 %v2047, %v2351
        %v2353 = vpop.f32.mrb[0].mxu0
        %v2354 = vpop.f32.mrb[0].mxu0
        %v2355 = vadd.f32 %v2050, %v2354
        %v2356 = vpop.f32.mrb[0].mxu0
        %2357 = vdwg.mxu0
        %v2358 = vld [vmem:[#allocation2] sm:$0xe]
        %v2359 = vld [vmem:[#allocation2 + $0xc] sm:$0xe]
        %v2360 = vld [vmem:[#allocation2 + $0x18] sm:$0xe]
        %v2361 = vld [vmem:[#allocation2 + $0x24] sm:$0xe]
        %v2362 = vld [vmem:[#allocation2 + $0x30] sm:$0xe]
        %v2363 = vld [vmem:[#allocation2 + $0x3c] sm:$0xe]
        %v2364 = vld [vmem:[#allocation2 + $0x48] sm:$0xe]
        %v2365 = vld [vmem:[#allocation2 + $0x54] sm:$0xe]
        %v2366 = vld [vmem:[#allocation2 + $0x60] sm:$0xe]
        %v2367 = vld [vmem:[#allocation2 + $0x6c] sm:$0xe]
        %v2368 = vld [vmem:[#allocation2 + $0x78] sm:$0xe]
        %v2369 = vld [vmem:[#allocation2 + $0x84] sm:$0xe]
        %v2370 = vld [vmem:[#allocation2 + $0x90] sm:$0xe]
        %v2371 = vld [vmem:[#allocation2 + $0x9c] sm:$0xe]
        %v2372 = vld [vmem:[#allocation2 + $0xa8] sm:$0xe]
        %v2373 = vld [vmem:[#allocation2 + $0xb4] sm:$0xe]
        %vm2406 = vcmask 1042432
        %vm2407 = vcmask 1046532
        %vm2408 = vmor %vm2406, %vm2407
        %v2409 = vrot.slane %v2358, 5
        %v2410 = vrot.slane %v2409, 4
        %v2411 = vrot.slane %v1313, 5
        %v2412 = vsel %vm2408, %v2410, %v2411
        %v2413 = vrot.slane %v2411, 4
        %v2414 = vrot.slane %v1360, 5
        %v2415 = vsel %vm2408, %v2413, %v2414
        %v2416 = vrot.slane %v2359, 5
        %v2417 = vrot.slane %v2416, 4
        %v2418 = vrot.slane %v1315, 5
        %v2419 = vsel %vm2408, %v2417, %v2418
        %v2420 = vrot.slane %v2418, 4
        %v2421 = vrot.slane %v1361, 5
        %v2422 = vsel %vm2408, %v2420, %v2421
        %v2423 = vrot.slane %v2360, 5
        %v2424 = vrot.slane %v2423, 4
        %v2425 = vrot.slane %v1317, 5
        %v2426 = vsel %vm2408, %v2424, %v2425
        %v2427 = vrot.slane %v2425, 4
        %v2428 = vrot.slane %v1362, 5
        %v2429 = vsel %vm2408, %v2427, %v2428
        %v2430 = vrot.slane %v2361, 5
        %v2431 = vrot.slane %v2430, 4
        %v2432 = vrot.slane %v1319, 5
        %v2433 = vsel %vm2408, %v2431, %v2432
        %v2434 = vrot.slane %v2432, 4
        %v2435 = vrot.slane %v1363, 5
        %v2436 = vsel %vm2408, %v2434, %v2435
        %v2437 = vrot.slane %v2362, 5
        %v2438 = vrot.slane %v2437, 4
        %v2439 = vrot.slane %v1321, 5
        %v2440 = vsel %vm2408, %v2438, %v2439
        %v2441 = vrot.slane %v2439, 4
        %v2442 = vrot.slane %v1364, 5
        %v2443 = vsel %vm2408, %v2441, %v2442
        %v2444 = vrot.slane %v2363, 5
        %v2445 = vrot.slane %v2444, 4
        %v2446 = vrot.slane %v1323, 5
        %v2447 = vsel %vm2408, %v2445, %v2446
        %v2448 = vrot.slane %v2446, 4
        %v2449 = vrot.slane %v1365, 5
        %v2450 = vsel %vm2408, %v2448, %v2449
        %v2451 = vrot.slane %v2364, 5
        %v2452 = vrot.slane %v2451, 4
        %v2453 = vrot.slane %v1325, 5
        %v2454 = vsel %vm2408, %v2452, %v2453
        %v2455 = vrot.slane %v2453, 4
        %v2456 = vrot.slane %v1366, 5
        %v2457 = vsel %vm2408, %v2455, %v2456
        %v2458 = vrot.slane %v2365, 5
        %v2459 = vrot.slane %v2458, 4
        %v2460 = vrot.slane %v1327, 5
        %v2461 = vsel %vm2408, %v2459, %v2460
        %v2462 = vrot.slane %v2460, 4
        %v2463 = vrot.slane %v1367, 5
        %v2464 = vsel %vm2408, %v2462, %v2463
        %v2465 = vrot.slane %v2366, 5
        %v2466 = vrot.slane %v2465, 4
        %v2467 = vrot.slane %v1329, 5
        %v2468 = vsel %vm2408, %v2466, %v2467
        %v2469 = vrot.slane %v2467, 4
        %v2470 = vrot.slane %v1368, 5
        %v2471 = vsel %vm2408, %v2469, %v2470
        %v2472 = vrot.slane %v2367, 5
        %v2473 = vrot.slane %v2472, 4
        %v2474 = vrot.slane %v1331, 5
        %v2475 = vsel %vm2408, %v2473, %v2474
        %v2476 = vrot.slane %v2474, 4
        %v2477 = vrot.slane %v1369, 5
        %v2478 = vsel %vm2408, %v2476, %v2477
        %v2479 = vrot.slane %v2368, 5
        %v2480 = vrot.slane %v2479, 4
        %v2481 = vrot.slane %v1333, 5
        %v2482 = vsel %vm2408, %v2480, %v2481
        %v2483 = vrot.slane %v2481, 4
        %v2484 = vrot.slane %v1370, 5
        %v2485 = vsel %vm2408, %v2483, %v2484
        %v2486 = vrot.slane %v2369, 5
        %v2487 = vrot.slane %v2486, 4
        %v2488 = vrot.slane %v1335, 5
        %v2489 = vsel %vm2408, %v2487, %v2488
        %v2490 = vrot.slane %v2488, 4
        %v2491 = vrot.slane %v1371, 5
        %v2492 = vsel %vm2408, %v2490, %v2491
        %v2493 = vrot.slane %v2370, 5
        %v2494 = vrot.slane %v2493, 4
        %v2495 = vrot.slane %v1337, 5
        %v2496 = vsel %vm2408, %v2494, %v2495
        %v2497 = vrot.slane %v2495, 4
        %v2498 = vrot.slane %v1372, 5
        %v2499 = vsel %vm2408, %v2497, %v2498
        %v2500 = vrot.slane %v2371, 5
        %v2501 = vrot.slane %v2500, 4
        %v2502 = vrot.slane %v1339, 5
        %v2503 = vsel %vm2408, %v2501, %v2502
        %v2504 = vrot.slane %v2502, 4
        %v2505 = vrot.slane %v1373, 5
        %v2506 = vsel %vm2408, %v2504, %v2505
        %v2507 = vrot.slane %v2372, 5
        %v2508 = vrot.slane %v2507, 4
        %v2509 = vrot.slane %v1341, 5
        %v2510 = vsel %vm2408, %v2508, %v2509
        %v2511 = vrot.slane %v2509, 4
        %v2512 = vrot.slane %v1374, 5
        %v2513 = vsel %vm2408, %v2511, %v2512
        %v2514 = vrot.slane %v2373, 5
        %v2515 = vrot.slane %v2514, 4
        %v2516 = vrot.slane %v1343, 5
        %v2517 = vsel %vm2408, %v2515, %v2516
        %v2518 = vrot.slane %v2516, 4
        %v2519 = vrot.slane %v1375, 5
        %v2520 = vsel %vm2408, %v2518, %v2519
        %s2521 = scalar_lea.vmem [#allocation8], 128
        %v2522 = vld [vmem:[%s2521] sm:$0xf]
        %v2523 = vld [vmem:[%s2521 + $0x4] sm:$0xf]
        %v2524 = vld [vmem:[%s2521 + $0x8] sm:$0xf]
        %v2525 = vld [vmem:[%s2521 + $0xc] sm:$0xf]
        %v2526 = vld [vmem:[%s2521 + $0x10] sm:$0xf]
        %v2527 = vld [vmem:[%s2521 + $0x14] sm:$0xf]
        %v2528 = vld [vmem:[%s2521 + $0x18] sm:$0xf]
        %v2529 = vld [vmem:[%s2521 + $0x1c] sm:$0xf]
        %v2530 = vld [vmem:[%s2521 + $0x20] sm:$0xf]
        %v2531 = vld [vmem:[%s2521 + $0x24] sm:$0xf]
        %v2532 = vld [vmem:[%s2521 + $0x28] sm:$0xf]
        %v2533 = vld [vmem:[%s2521 + $0x2c] sm:$0xf]
        %v2534 = vld [vmem:[%s2521 + $0x30] sm:$0xf]
        %v2535 = vld [vmem:[%s2521 + $0x34] sm:$0xf]
        %v2536 = vld [vmem:[%s2521 + $0x38] sm:$0xf]
        %v2537 = vld [vmem:[%s2521 + $0x3c] sm:$0xf]
        %v2538 = vunpack.c.l.b16 %v2412
        %v2539 = vunpack.c.l.b16 %v2415
        %v2540 = vunpack.c.l.b16 %v2419
        %v2541 = vunpack.c.l.b16 %v2422
        %v2542 = vunpack.c.l.b16 %v2426
        %v2543 = vunpack.c.l.b16 %v2429
        %v2544 = vunpack.c.l.b16 %v2433
        %v2545 = vunpack.c.l.b16 %v2436
        %v2546 = vunpack.c.l.b16 %v2440
        %v2547 = vunpack.c.l.b16 %v2443
        %v2548 = vunpack.c.l.b16 %v2447
        %v2549 = vunpack.c.l.b16 %v2450
        %v2550 = vunpack.c.l.b16 %v2454
        %v2551 = vunpack.c.l.b16 %v2457
        %v2552 = vunpack.c.l.b16 %v2461
        %v2553 = vunpack.c.l.b16 %v2464
        %v2554 = vunpack.c.l.b16 %v2468
        %v2555 = vunpack.c.l.b16 %v2471
        %v2556 = vunpack.c.l.b16 %v2475
        %v2557 = vunpack.c.l.b16 %v2478
        %v2558 = vunpack.c.l.b16 %v2482
        %v2559 = vunpack.c.l.b16 %v2485
        %v2560 = vunpack.c.l.b16 %v2489
        %v2561 = vunpack.c.l.b16 %v2492
        %v2562 = vunpack.c.l.b16 %v2496
        %v2563 = vunpack.c.l.b16 %v2499
        %v2564 = vunpack.c.l.b16 %v2503
        %v2565 = vunpack.c.l.b16 %v2506
        %v2566 = vunpack.c.l.b16 %v2510
        %v2567 = vunpack.c.l.b16 %v2513
        %v2568 = vunpack.c.l.b16 %v2517
        %v2569 = vunpack.c.l.b16 %v2520
        %v2570 = vpack.c.b16 %v2539, %v2538
        %v2571 = vpack.c.b16 %v2541, %v2540
        %v2572 = vpack.c.b16 %v2543, %v2542
        %v2573 = vpack.c.b16 %v2545, %v2544
        %v2574 = vpack.c.b16 %v2547, %v2546
        %v2575 = vpack.c.b16 %v2549, %v2548
        %v2576 = vpack.c.b16 %v2551, %v2550
        %v2577 = vpack.c.b16 %v2553, %v2552
        %v2578 = vpack.c.b16 %v2555, %v2554
        %v2579 = vpack.c.b16 %v2557, %v2556
        %v2580 = vpack.c.b16 %v2559, %v2558
        %v2581 = vpack.c.b16 %v2561, %v2560
        %v2582 = vpack.c.b16 %v2563, %v2562
        %v2583 = vpack.c.b16 %v2565, %v2564
        %v2584 = vpack.c.b16 %v2567, %v2566
        %v2585 = vpack.c.b16 %v2569, %v2568
        %v2618 = vunpack.c.l.b16 %v2522
        %v2619 = vunpack.c.l.b16 %v2523
        %v2620 = vunpack.c.l.b16 %v2524
        %v2621 = vunpack.c.l.b16 %v2525
        %v2622 = vunpack.c.l.b16 %v2526
        %v2623 = vunpack.c.l.b16 %v2527
        %v2624 = vunpack.c.l.b16 %v2528
        %v2625 = vunpack.c.l.b16 %v2529
        %v2626 = vunpack.c.l.b16 %v2530
        %v2627 = vunpack.c.l.b16 %v2531
        %v2628 = vunpack.c.l.b16 %v2532
        %v2629 = vunpack.c.l.b16 %v2533
        %v2630 = vunpack.c.l.b16 %v2534
        %v2631 = vunpack.c.l.b16 %v2535
        %v2632 = vunpack.c.l.b16 %v2536
        %v2633 = vunpack.c.l.b16 %v2537
        %v2634 = vpack.c.b16 %v2619, %v2618
        %v2635 = vpack.c.b16 %v2621, %v2620
        %v2636 = vpack.c.b16 %v2623, %v2622
        %v2637 = vpack.c.b16 %v2625, %v2624
        %v2638 = vpack.c.b16 %v2627, %v2626
        %v2639 = vpack.c.b16 %v2629, %v2628
        %v2640 = vpack.c.b16 %v2631, %v2630
        %v2641 = vpack.c.b16 %v2633, %v2632
        %2650 = vmatprep.subr.bf16.mxu0 0
        %2651 = vmatpush1.bf16.msra.mxu0 %v2634
        %2652 = vmatprep.subr.bf16.mxu0 0
        %2653 = vmatpush1.bf16.msra.mxu0 %v2635
        %2654 = vmatprep.subr.bf16.mxu0 0
        %2655 = vmatpush1.bf16.msra.mxu0 %v2636
        %2656 = vmatprep.subr.bf16.mxu0 0
        %2657 = vmatpush1.bf16.msra.mxu0 %v2637
        %2658 = vmatprep.subr.bf16.mxu0 0
        %2659 = vmatpush1.bf16.msra.mxu0 %v2638
        %2660 = vmatprep.subr.bf16.mxu0 0
        %2661 = vmatpush1.bf16.msra.mxu0 %v2639
        %2662 = vmatprep.subr.bf16.mxu0 0
        %2663 = vmatpush1.bf16.msra.mxu0 %v2640
        %2664 = vmatprep.subr.bf16.mxu0 0
        %2665 = vmatpush1.bf16.msra.mxu0 %v2641
        %2666 = vmatprep.subr.bf16.mxu0 0
        %2667 = vmatpush1.bf16.msra.mxu0 0
        %2668 = vmatprep.subr.bf16.mxu0 0
        %2669 = vmatpush1.bf16.msra.mxu0 0
        %2670 = vmatprep.subr.bf16.mxu0 0
        %2671 = vmatpush1.bf16.msra.mxu0 0
        %2672 = vmatprep.subr.bf16.mxu0 0
        %2673 = vmatpush1.bf16.msra.mxu0 0
        %2674 = vmatprep.subr.bf16.mxu0 0
        %2675 = vmatpush1.bf16.msra.mxu0 0
        %2676 = vmatprep.subr.bf16.mxu0 0
        %2677 = vmatpush1.bf16.msra.mxu0 0
        %2678 = vmatprep.subr.bf16.mxu0 0
        %2679 = vmatpush1.bf16.msra.mxu0 0
        %2680 = vmatprep.subr.bf16.mxu0 0
        %2681 = vmatpush1.bf16.msra.mxu0 0
        %2682 = vmatprep.mubr.bf16.mxu0 0
        %2683 = vmatmul.mubr.bf16.gmra.mrb[0].mxu0 %v2570
        %v2684 = vpop.f32.mrb[0].mxu0
        %v2685 = vadd.f32 0.0, %v2684
        %v2686 = vpop.f32.mrb[0].mxu0
        %v2687 = vpop.f32.mrb[0].mxu0
        %v2688 = vadd.f32 0.0, %v2687
        %v2689 = vpop.f32.mrb[0].mxu0
        %2690 = vmatprep.mubr.bf16.mxu0 0
        %2691 = vmatmul.mubr.bf16.gmra.mrb[0].mxu0 %v2571
        %v2692 = vpop.f32.mrb[0].mxu0
        %v2693 = vadd.f32 0.0, %v2692
        %v2694 = vpop.f32.mrb[0].mxu0
        %v2695 = vpop.f32.mrb[0].mxu0
        %v2696 = vadd.f32 0.0, %v2695
        %v2697 = vpop.f32.mrb[0].mxu0
        %2698 = vmatprep.mubr.bf16.mxu0 0
        %2699 = vmatmul.mubr.bf16.gmra.mrb[0].mxu0 %v2572
        %v2700 = vpop.f32.mrb[0].mxu0
        %v2701 = vadd.f32 0.0, %v2700
        %v2702 = vpop.f32.mrb[0].mxu0
        %v2703 = vpop.f32.mrb[0].mxu0
        %v2704 = vadd.f32 0.0, %v2703
        %v2705 = vpop.f32.mrb[0].mxu0
        %2706 = vmatprep.mubr.bf16.mxu0 0
        %2707 = vmatmul.mubr.bf16.gmra.mrb[0].mxu0 %v2573
        %v2708 = vpop.f32.mrb[0].mxu0
        %v2709 = vadd.f32 0.0, %v2708
        %v2710 = vpop.f32.mrb[0].mxu0
        %v2711 = vpop.f32.mrb[0].mxu0
        %v2712 = vadd.f32 0.0, %v2711
        %v2713 = vpop.f32.mrb[0].mxu0
        %2714 = vmatprep.mubr.bf16.mxu0 0
        %2715 = vmatmul.mubr.bf16.gmra.mrb[0].mxu0 %v2574
        %v2716 = vpop.f32.mrb[0].mxu0
        %v2717 = vadd.f32 0.0, %v2716
        %v2718 = vpop.f32.mrb[0].mxu0
        %v2719 = vpop.f32.mrb[0].mxu0
        %v2720 = vadd.f32 0.0, %v2719
        %v2721 = vpop.f32.mrb[0].mxu0
        %2722 = vmatprep.mubr.bf16.mxu0 0
        %2723 = vmatmul.mubr.bf16.gmra.mrb[0].mxu0 %v2575
        %v2724 = vpop.f32.mrb[0].mxu0
        %v2725 = vadd.f32 0.0, %v2724
        %v2726 = vpop.f32.mrb[0].mxu0
        %v2727 = vpop.f32.mrb[0].mxu0
        %v2728 = vadd.f32 0.0, %v2727
        %v2729 = vpop.f32.mrb[0].mxu0
        %2730 = vmatprep.mubr.bf16.mxu0 0
        %2731 = vmatmul.mubr.bf16.gmra.mrb[0].mxu0 %v2576
        %v2732 = vpop.f32.mrb[0].mxu0
        %v2733 = vadd.f32 0.0, %v2732
        %v2734 = vpop.f32.mrb[0].mxu0
        %v2735 = vpop.f32.mrb[0].mxu0
        %v2736 = vadd.f32 0.0, %v2735
        %v2737 = vpop.f32.mrb[0].mxu0
        %2738 = vmatprep.mubr.bf16.mxu0 0
        %2739 = vmatmul.mubr.bf16.gmra.mrb[0].mxu0 %v2577
        %v2740 = vpop.f32.mrb[0].mxu0
        %v2741 = vadd.f32 0.0, %v2740
        %v2742 = vpop.f32.mrb[0].mxu0
        %v2743 = vpop.f32.mrb[0].mxu0
        %v2744 = vadd.f32 0.0, %v2743
        %v2745 = vpop.f32.mrb[0].mxu0
        %2746 = vmatprep.mubr.bf16.mxu0 0
        %2747 = vmatmul.mubr.bf16.gmra.mrb[0].mxu0 %v2578
        %v2748 = vpop.f32.mrb[0].mxu0
        %v2749 = vadd.f32 0.0, %v2748
        %v2750 = vpop.f32.mrb[0].mxu0
        %v2751 = vpop.f32.mrb[0].mxu0
        %v2752 = vadd.f32 0.0, %v2751
        %v2753 = vpop.f32.mrb[0].mxu0
        %2754 = vmatprep.mubr.bf16.mxu0 0
        %2755 = vmatmul.mubr.bf16.gmra.mrb[0].mxu0 %v2579
        %v2756 = vpop.f32.mrb[0].mxu0
        %v2757 = vadd.f32 0.0, %v2756
        %v2758 = vpop.f32.mrb[0].mxu0
        %v2759 = vpop.f32.mrb[0].mxu0
        %v2760 = vadd.f32 0.0, %v2759
        %v2761 = vpop.f32.mrb[0].mxu0
        %2762 = vmatprep.mubr.bf16.mxu0 0
        %2763 = vmatmul.mubr.bf16.gmra.mrb[0].mxu0 %v2580
        %v2764 = vpop.f32.mrb[0].mxu0
        %v2765 = vadd.f32 0.0, %v2764
        %v2766 = vpop.f32.mrb[0].mxu0
        %v2767 = vpop.f32.mrb[0].mxu0
        %v2768 = vadd.f32 0.0, %v2767
        %v2769 = vpop.f32.mrb[0].mxu0
        %2770 = vmatprep.mubr.bf16.mxu0 0
        %2771 = vmatmul.mubr.bf16.gmra.mrb[0].mxu0 %v2581
        %v2772 = vpop.f32.mrb[0].mxu0
        %v2773 = vadd.f32 0.0, %v2772
        %v2774 = vpop.f32.mrb[0].mxu0
        %v2775 = vpop.f32.mrb[0].mxu0
        %v2776 = vadd.f32 0.0, %v2775
        %v2777 = vpop.f32.mrb[0].mxu0
        %2778 = vmatprep.mubr.bf16.mxu0 0
        %2779 = vmatmul.mubr.bf16.gmra.mrb[0].mxu0 %v2582
        %v2780 = vpop.f32.mrb[0].mxu0
        %v2781 = vadd.f32 0.0, %v2780
        %v2782 = vpop.f32.mrb[0].mxu0
        %v2783 = vpop.f32.mrb[0].mxu0
        %v2784 = vadd.f32 0.0, %v2783
        %v2785 = vpop.f32.mrb[0].mxu0
        %2786 = vmatprep.mubr.bf16.mxu0 0
        %2787 = vmatmul.mubr.bf16.gmra.mrb[0].mxu0 %v2583
        %v2788 = vpop.f32.mrb[0].mxu0
        %v2789 = vadd.f32 0.0, %v2788
        %v2790 = vpop.f32.mrb[0].mxu0
        %v2791 = vpop.f32.mrb[0].mxu0
        %v2792 = vadd.f32 0.0, %v2791
        %v2793 = vpop.f32.mrb[0].mxu0
        %2794 = vmatprep.mubr.bf16.mxu0 0
        %2795 = vmatmul.mubr.bf16.gmra.mrb[0].mxu0 %v2584
        %v2796 = vpop.f32.mrb[0].mxu0
        %v2797 = vadd.f32 0.0, %v2796
        %v2798 = vpop.f32.mrb[0].mxu0
        %v2799 = vpop.f32.mrb[0].mxu0
        %v2800 = vadd.f32 0.0, %v2799
        %v2801 = vpop.f32.mrb[0].mxu0
        %2802 = vmatprep.mubr.bf16.mxu0 0
        %2803 = vmatmul.mubr.bf16.gmra.mrb[0].mxu0 %v2585
        %v2804 = vpop.f32.mrb[0].mxu0
        %v2805 = vadd.f32 0.0, %v2804
        %v2806 = vpop.f32.mrb[0].mxu0
        %v2807 = vpop.f32.mrb[0].mxu0
        %v2808 = vadd.f32 0.0, %v2807
        %v2809 = vpop.f32.mrb[0].mxu0
        %2810 = vdwg.mxu0
        %v2811 = vadd.f32 %v2232, %v2685
        %v2812 = vadd.f32 %v2235, %v2688
        %v2813 = vadd.f32 %v2240, %v2693
        %v2814 = vadd.f32 %v2243, %v2696
        %v2815 = vadd.f32 %v2248, %v2701
        %v2816 = vadd.f32 %v2251, %v2704
        %v2817 = vadd.f32 %v2256, %v2709
        %v2818 = vadd.f32 %v2259, %v2712
        %v2819 = vadd.f32 %v2264, %v2717
        %v2820 = vadd.f32 %v2267, %v2720
        %v2821 = vadd.f32 %v2272, %v2725
        %v2822 = vadd.f32 %v2275, %v2728
        %v2823 = vadd.f32 %v2280, %v2733
        %v2824 = vadd.f32 %v2283, %v2736
        %v2825 = vadd.f32 %v2288, %v2741
        %v2826 = vadd.f32 %v2291, %v2744
        %v2827 = vadd.f32 %v2296, %v2749
        %v2828 = vadd.f32 %v2299, %v2752
        %v2829 = vadd.f32 %v2304, %v2757
        %v2830 = vadd.f32 %v2307, %v2760
        %v2831 = vadd.f32 %v2312, %v2765
        %v2832 = vadd.f32 %v2315, %v2768
        %v2833 = vadd.f32 %v2320, %v2773
        %v2834 = vadd.f32 %v2323, %v2776
        %v2835 = vadd.f32 %v2328, %v2781
        %v2836 = vadd.f32 %v2331, %v2784
        %v2837 = vadd.f32 %v2336, %v2789
        %v2838 = vadd.f32 %v2339, %v2792
        %v2839 = vadd.f32 %v2344, %v2797
        %v2840 = vadd.f32 %v2347, %v2800
        %v2841 = vadd.f32 %v2352, %v2805
        %v2842 = vadd.f32 %v2355, %v2808
        %v2843 = vld [vmem:[%s1194] sm:$0xf]
        %v2844 = vld [vmem:[%s1194 + $0x4] sm:$0xf]
        %v2845 = vld [vmem:[%s1194 + $0xc] sm:$0xf]
        %v2846 = vld [vmem:[%s1194 + $0x10] sm:$0xf]
        %v2847 = vld [vmem:[%s1194 + $0x18] sm:$0xf]
        %v2848 = vld [vmem:[%s1194 + $0x1c] sm:$0xf]
        %v2849 = vld [vmem:[%s1194 + $0x24] sm:$0xf]
        %v2850 = vld [vmem:[%s1194 + $0x28] sm:$0xf]
        %v2851 = vld [vmem:[%s1194 + $0x30] sm:$0xf]
        %v2852 = vld [vmem:[%s1194 + $0x34] sm:$0xf]
        %v2853 = vld [vmem:[%s1194 + $0x3c] sm:$0xf]
        %v2854 = vld [vmem:[%s1194 + $0x40] sm:$0xf]
        %v2855 = vld [vmem:[%s1194 + $0x48] sm:$0xf]
        %v2856 = vld [vmem:[%s1194 + $0x4c] sm:$0xf]
        %v2857 = vld [vmem:[%s1194 + $0x54] sm:$0xf]
        %v2858 = vld [vmem:[%s1194 + $0x58] sm:$0xf]
        %v2859 = vld [vmem:[%s1194 + $0x60] sm:$0xf]
        %v2860 = vld [vmem:[%s1194 + $0x64] sm:$0xf]
        %v2861 = vld [vmem:[%s1194 + $0x6c] sm:$0xf]
        %v2862 = vld [vmem:[%s1194 + $0x70] sm:$0xf]
        %v2863 = vld [vmem:[%s1194 + $0x78] sm:$0xf]
        %v2864 = vld [vmem:[%s1194 + $0x7c] sm:$0xf]
        %v2865 = vld [vmem:[%s1194 + $0x84] sm:$0xf]
        %v2866 = vld [vmem:[%s1194 + $0x88] sm:$0xf]
        %v2867 = vld [vmem:[%s1194 + $0x90] sm:$0xf]
        %v2868 = vld [vmem:[%s1194 + $0x94] sm:$0xf]
        %v2869 = vld [vmem:[%s1194 + $0x9c] sm:$0xf]
        %v2870 = vld [vmem:[%s1194 + $0xa0] sm:$0xf]
        %v2871 = vld [vmem:[%s1194 + $0xa8] sm:$0xf]
        %v2872 = vld [vmem:[%s1194 + $0xac] sm:$0xf]
        %v2873 = vld [vmem:[%s1194 + $0xb4] sm:$0xf]
        %v2874 = vld [vmem:[%s1194 + $0xb8] sm:$0xf]
        %s2875 = scalar_lea.vmem [#allocation8], 192
        %v2876 = vld [vmem:[%s2875] sm:$0xf]
        %v2877 = vld [vmem:[%s2875 + $0x4] sm:$0xf]
        %v2878 = vld [vmem:[%s2875 + $0x8] sm:$0xf]
        %v2879 = vld [vmem:[%s2875 + $0xc] sm:$0xf]
        %v2880 = vld [vmem:[%s2875 + $0x10] sm:$0xf]
        %v2881 = vld [vmem:[%s2875 + $0x14] sm:$0xf]
        %v2882 = vld [vmem:[%s2875 + $0x18] sm:$0xf]
        %v2883 = vld [vmem:[%s2875 + $0x1c] sm:$0xf]
        %v2884 = vld [vmem:[%s2875 + $0x20] sm:$0xf]
        %v2885 = vld [vmem:[%s2875 + $0x24] sm:$0xf]
        %v2886 = vld [vmem:[%s2875 + $0x28] sm:$0xf]
        %v2887 = vld [vmem:[%s2875 + $0x2c] sm:$0xf]
        %v2888 = vld [vmem:[%s2875 + $0x30] sm:$0xf]
        %v2889 = vld [vmem:[%s2875 + $0x34] sm:$0xf]
        %v2890 = vld [vmem:[%s2875 + $0x38] sm:$0xf]
        %v2891 = vld [vmem:[%s2875 + $0x3c] sm:$0xf]
        %v2924 = vunpack.c.l.b16 %v2843
        %v2925 = vunpack.c.l.b16 %v2844
        %v2926 = vunpack.c.l.b16 %v2845
        %v2927 = vunpack.c.l.b16 %v2846
        %v2928 = vunpack.c.l.b16 %v2847
        %v2929 = vunpack.c.l.b16 %v2848
        %v2930 = vunpack.c.l.b16 %v2849
        %v2931 = vunpack.c.l.b16 %v2850
        %v2932 = vunpack.c.l.b16 %v2851
        %v2933 = vunpack.c.l.b16 %v2852
        %v2934 = vunpack.c.l.b16 %v2853
        %v2935 = vunpack.c.l.b16 %v2854
        %v2936 = vunpack.c.l.b16 %v2855
        %v2937 = vunpack.c.l.b16 %v2856
        %v2938 = vunpack.c.l.b16 %v2857
        %v2939 = vunpack.c.l.b16 %v2858
        %v2940 = vunpack.c.l.b16 %v2859
        %v2941 = vunpack.c.l.b16 %v2860
        %v2942 = vunpack.c.l.b16 %v2861
        %v2943 = vunpack.c.l.b16 %v2862
        %v2944 = vunpack.c.l.b16 %v2863
        %v2945 = vunpack.c.l.b16 %v2864
        %v2946 = vunpack.c.l.b16 %v2865
        %v2947 = vunpack.c.l.b16 %v2866
        %v2948 = vunpack.c.l.b16 %v2867
        %v2949 = vunpack.c.l.b16 %v2868
        %v2950 = vunpack.c.l.b16 %v2869
        %v2951 = vunpack.c.l.b16 %v2870
        %v2952 = vunpack.c.l.b16 %v2871
        %v2953 = vunpack.c.l.b16 %v2872
        %v2954 = vunpack.c.l.b16 %v2873
        %v2955 = vunpack.c.l.b16 %v2874
        %v2956 = vpack.c.b16 %v2925, %v2924
        %v2957 = vpack.c.b16 %v2927, %v2926
        %v2958 = vpack.c.b16 %v2929, %v2928
        %v2959 = vpack.c.b16 %v2931, %v2930
        %v2960 = vpack.c.b16 %v2933, %v2932
        %v2961 = vpack.c.b16 %v2935, %v2934
        %v2962 = vpack.c.b16 %v2937, %v2936
        %v2963 = vpack.c.b16 %v2939, %v2938
        %v2964 = vpack.c.b16 %v2941, %v2940
        %v2965 = vpack.c.b16 %v2943, %v2942
        %v2966 = vpack.c.b16 %v2945, %v2944
        %v2967 = vpack.c.b16 %v2947, %v2946
        %v2968 = vpack.c.b16 %v2949, %v2948
        %v2969 = vpack.c.b16 %v2951, %v2950
        %v2970 = vpack.c.b16 %v2953, %v2952
        %v2971 = vpack.c.b16 %v2955, %v2954
        %v3004 = vunpack.c.l.b16 %v2876
        %v3005 = vunpack.c.l.b16 %v2877
        %v3006 = vunpack.c.l.b16 %v2878
        %v3007 = vunpack.c.l.b16 %v2879
        %v3008 = vunpack.c.l.b16 %v2880
        %v3009 = vunpack.c.l.b16 %v2881
        %v3010 = vunpack.c.l.b16 %v2882
        %v3011 = vunpack.c.l.b16 %v2883
        %v3012 = vunpack.c.l.b16 %v2884
        %v3013 = vunpack.c.l.b16 %v2885
        %v3014 = vunpack.c.l.b16 %v2886
        %v3015 = vunpack.c.l.b16 %v2887
        %v3016 = vunpack.c.l.b16 %v2888
        %v3017 = vunpack.c.l.b16 %v2889
        %v3018 = vunpack.c.l.b16 %v2890
        %v3019 = vunpack.c.l.b16 %v2891
        %v3020 = vpack.c.b16 %v3005, %v3004
        %v3021 = vpack.c.b16 %v3007, %v3006
        %v3022 = vpack.c.b16 %v3009, %v3008
        %v3023 = vpack.c.b16 %v3011, %v3010
        %v3024 = vpack.c.b16 %v3013, %v3012
        %v3025 = vpack.c.b16 %v3015, %v3014
        %v3026 = vpack.c.b16 %v3017, %v3016
        %v3027 = vpack.c.b16 %v3019, %v3018
        %3036 = vmatprep.subr.bf16.mxu0 0
        %3037 = vmatpush1.bf16.msra.mxu0 %v3020
        %3038 = vmatprep.subr.bf16.mxu0 0
        %3039 = vmatpush1.bf16.msra.mxu0 %v3021
        %3040 = vmatprep.subr.bf16.mxu0 0
        %3041 = vmatpush1.bf16.msra.mxu0 %v3022
        %3042 = vmatprep.subr.bf16.mxu0 0
        %3043 = vmatpush1.bf16.msra.mxu0 %v3023
        %3044 = vmatprep.subr.bf16.mxu0 0
        %3045 = vmatpush1.bf16.msra.mxu0 %v3024
        %3046 = vmatprep.subr.bf16.mxu0 0
        %3047 = vmatpush1.bf16.msra.mxu0 %v3025
        %3048 = vmatprep.subr.bf16.mxu0 0
        %3049 = vmatpush1.bf16.msra.mxu0 %v3026
        %3050 = vmatprep.subr.bf16.mxu0 0
        %3051 = vmatpush1.bf16.msra.mxu0 %v3027
        %3052 = vmatprep.subr.bf16.mxu0 0
        %3053 = vmatpush1.bf16.msra.mxu0 0
        %3054 = vmatprep.subr.bf16.mxu0 0
        %3055 = vmatpush1.bf16.msra.mxu0 0
        %3056 = vmatprep.subr.bf16.mxu0 0
        %3057 = vmatpush1.bf16.msra.mxu0 0
        %3058 = vmatprep.subr.bf16.mxu0 0
        %3059 = vmatpush1.bf16.msra.mxu0 0
        %3060 = vmatprep.subr.bf16.mxu0 0
        %3061 = vmatpush1.bf16.msra.mxu0 0
        %3062 = vmatprep.subr.bf16.mxu0 0
        %3063 = vmatpush1.bf16.msra.mxu0 0
        %3064 = vmatprep.subr.bf16.mxu0 0
        %3065 = vmatpush1.bf16.msra.mxu0 0
        %3066 = vmatprep.subr.bf16.mxu0 0
        %3067 = vmatpush1.bf16.msra.mxu0 0
        %3068 = vmatprep.mubr.bf16.mxu0 0
        %3069 = vmatmul.mubr.bf16.gmra.mrb[0].mxu0 %v2956
        %v3070 = vpop.f32.mrb[0].mxu0
        %v3071 = vadd.f32 0.0, %v3070
        %v3072 = vpop.f32.mrb[0].mxu0
        %v3073 = vpop.f32.mrb[0].mxu0
        %v3074 = vadd.f32 0.0, %v3073
        %v3075 = vpop.f32.mrb[0].mxu0
        %3076 = vmatprep.mubr.bf16.mxu0 0
        %3077 = vmatmul.mubr.bf16.gmra.mrb[0].mxu0 %v2957
        %v3078 = vpop.f32.mrb[0].mxu0
        %v3079 = vadd.f32 0.0, %v3078
        %v3080 = vpop.f32.mrb[0].mxu0
        %v3081 = vpop.f32.mrb[0].mxu0
        %v3082 = vadd.f32 0.0, %v3081
        %v3083 = vpop.f32.mrb[0].mxu0
        %3084 = vmatprep.mubr.bf16.mxu0 0
        %3085 = vmatmul.mubr.bf16.gmra.mrb[0].mxu0 %v2958
        %v3086 = vpop.f32.mrb[0].mxu0
        %v3087 = vadd.f32 0.0, %v3086
        %v3088 = vpop.f32.mrb[0].mxu0
        %v3089 = vpop.f32.mrb[0].mxu0
        %v3090 = vadd.f32 0.0, %v3089
        %v3091 = vpop.f32.mrb[0].mxu0
        %3092 = vmatprep.mubr.bf16.mxu0 0
        %3093 = vmatmul.mubr.bf16.gmra.mrb[0].mxu0 %v2959
        %v3094 = vpop.f32.mrb[0].mxu0
        %v3095 = vadd.f32 0.0, %v3094
        %v3096 = vpop.f32.mrb[0].mxu0
        %v3097 = vpop.f32.mrb[0].mxu0
        %v3098 = vadd.f32 0.0, %v3097
        %v3099 = vpop.f32.mrb[0].mxu0
        %3100 = vmatprep.mubr.bf16.mxu0 0
        %3101 = vmatmul.mubr.bf16.gmra.mrb[0].mxu0 %v2960
        %v3102 = vpop.f32.mrb[0].mxu0
        %v3103 = vadd.f32 0.0, %v3102
        %v3104 = vpop.f32.mrb[0].mxu0
        %v3105 = vpop.f32.mrb[0].mxu0
        %v3106 = vadd.f32 0.0, %v3105
        %v3107 = vpop.f32.mrb[0].mxu0
        %3108 = vmatprep.mubr.bf16.mxu0 0
        %3109 = vmatmul.mubr.bf16.gmra.mrb[0].mxu0 %v2961
        %v3110 = vpop.f32.mrb[0].mxu0
        %v3111 = vadd.f32 0.0, %v3110
        %v3112 = vpop.f32.mrb[0].mxu0
        %v3113 = vpop.f32.mrb[0].mxu0
        %v3114 = vadd.f32 0.0, %v3113
        %v3115 = vpop.f32.mrb[0].mxu0
        %3116 = vmatprep.mubr.bf16.mxu0 0
        %3117 = vmatmul.mubr.bf16.gmra.mrb[0].mxu0 %v2962
        %v3118 = vpop.f32.mrb[0].mxu0
        %v3119 = vadd.f32 0.0, %v3118
        %v3120 = vpop.f32.mrb[0].mxu0
        %v3121 = vpop.f32.mrb[0].mxu0
        %v3122 = vadd.f32 0.0, %v3121
        %v3123 = vpop.f32.mrb[0].mxu0
        %3124 = vmatprep.mubr.bf16.mxu0 0
        %3125 = vmatmul.mubr.bf16.gmra.mrb[0].mxu0 %v2963
        %v3126 = vpop.f32.mrb[0].mxu0
        %v3127 = vadd.f32 0.0, %v3126
        %v3128 = vpop.f32.mrb[0].mxu0
        %v3129 = vpop.f32.mrb[0].mxu0
        %v3130 = vadd.f32 0.0, %v3129
        %v3131 = vpop.f32.mrb[0].mxu0
        %3132 = vmatprep.mubr.bf16.mxu0 0
        %3133 = vmatmul.mubr.bf16.gmra.mrb[0].mxu0 %v2964
        %v3134 = vpop.f32.mrb[0].mxu0
        %v3135 = vadd.f32 0.0, %v3134
        %v3136 = vpop.f32.mrb[0].mxu0
        %v3137 = vpop.f32.mrb[0].mxu0
        %v3138 = vadd.f32 0.0, %v3137
        %v3139 = vpop.f32.mrb[0].mxu0
        %3140 = vmatprep.mubr.bf16.mxu0 0
        %3141 = vmatmul.mubr.bf16.gmra.mrb[0].mxu0 %v2965
        %v3142 = vpop.f32.mrb[0].mxu0
        %v3143 = vadd.f32 0.0, %v3142
        %v3144 = vpop.f32.mrb[0].mxu0
        %v3145 = vpop.f32.mrb[0].mxu0
        %v3146 = vadd.f32 0.0, %v3145
        %v3147 = vpop.f32.mrb[0].mxu0
        %3148 = vmatprep.mubr.bf16.mxu0 0
        %3149 = vmatmul.mubr.bf16.gmra.mrb[0].mxu0 %v2966
        %v3150 = vpop.f32.mrb[0].mxu0
        %v3151 = vadd.f32 0.0, %v3150
        %v3152 = vpop.f32.mrb[0].mxu0
        %v3153 = vpop.f32.mrb[0].mxu0
        %v3154 = vadd.f32 0.0, %v3153
        %v3155 = vpop.f32.mrb[0].mxu0
        %3156 = vmatprep.mubr.bf16.mxu0 0
        %3157 = vmatmul.mubr.bf16.gmra.mrb[0].mxu0 %v2967
        %v3158 = vpop.f32.mrb[0].mxu0
        %v3159 = vadd.f32 0.0, %v3158
        %v3160 = vpop.f32.mrb[0].mxu0
        %v3161 = vpop.f32.mrb[0].mxu0
        %v3162 = vadd.f32 0.0, %v3161
        %v3163 = vpop.f32.mrb[0].mxu0
        %3164 = vmatprep.mubr.bf16.mxu0 0
        %3165 = vmatmul.mubr.bf16.gmra.mrb[0].mxu0 %v2968
        %v3166 = vpop.f32.mrb[0].mxu0
        %v3167 = vadd.f32 0.0, %v3166
        %v3168 = vpop.f32.mrb[0].mxu0
        %v3169 = vpop.f32.mrb[0].mxu0
        %v3170 = vadd.f32 0.0, %v3169
        %v3171 = vpop.f32.mrb[0].mxu0
        %3172 = vmatprep.mubr.bf16.mxu0 0
        %3173 = vmatmul.mubr.bf16.gmra.mrb[0].mxu0 %v2969
        %v3174 = vpop.f32.mrb[0].mxu0
        %v3175 = vadd.f32 0.0, %v3174
        %v3176 = vpop.f32.mrb[0].mxu0
        %v3177 = vpop.f32.mrb[0].mxu0
        %v3178 = vadd.f32 0.0, %v3177
        %v3179 = vpop.f32.mrb[0].mxu0
        %3180 = vmatprep.mubr.bf16.mxu0 0
        %3181 = vmatmul.mubr.bf16.gmra.mrb[0].mxu0 %v2970
        %v3182 = vpop.f32.mrb[0].mxu0
        %v3183 = vadd.f32 0.0, %v3182
        %v3184 = vpop.f32.mrb[0].mxu0
        %v3185 = vpop.f32.mrb[0].mxu0
        %v3186 = vadd.f32 0.0, %v3185
        %v3187 = vpop.f32.mrb[0].mxu0
        %3188 = vmatprep.mubr.bf16.mxu0 0
        %3189 = vmatmul.mubr.bf16.gmra.mrb[0].mxu0 %v2971
        %v3190 = vpop.f32.mrb[0].mxu0
        %v3191 = vadd.f32 0.0, %v3190
        %v3192 = vpop.f32.mrb[0].mxu0
        %v3193 = vpop.f32.mrb[0].mxu0
        %v3194 = vadd.f32 0.0, %v3193
        %v3195 = vpop.f32.mrb[0].mxu0
        %3196 = vdwg.mxu0
        %v3197 = vadd.f32 %v2811, %v3071
        %v3198 = vadd.f32 %v2812, %v3074
        %v3199 = vadd.f32 %v2813, %v3079
        %v3200 = vadd.f32 %v2814, %v3082
        %v3201 = vadd.f32 %v2815, %v3087
        %v3202 = vadd.f32 %v2816, %v3090
        %v3203 = vadd.f32 %v2817, %v3095
        %v3204 = vadd.f32 %v2818, %v3098
        %v3205 = vadd.f32 %v2819, %v3103
        %v3206 = vadd.f32 %v2820, %v3106
        %v3207 = vadd.f32 %v2821, %v3111
        %v3208 = vadd.f32 %v2822, %v3114
        %v3209 = vadd.f32 %v2823, %v3119
        %v3210 = vadd.f32 %v2824, %v3122
        %v3211 = vadd.f32 %v2825, %v3127
        %v3212 = vadd.f32 %v2826, %v3130
        %v3213 = vadd.f32 %v2827, %v3135
        %v3214 = vadd.f32 %v2828, %v3138
        %v3215 = vadd.f32 %v2829, %v3143
        %v3216 = vadd.f32 %v2830, %v3146
        %v3217 = vadd.f32 %v2831, %v3151
        %v3218 = vadd.f32 %v2832, %v3154
        %v3219 = vadd.f32 %v2833, %v3159
        %v3220 = vadd.f32 %v2834, %v3162
        %v3221 = vadd.f32 %v2835, %v3167
        %v3222 = vadd.f32 %v2836, %v3170
        %v3223 = vadd.f32 %v2837, %v3175
        %v3224 = vadd.f32 %v2838, %v3178
        %v3225 = vadd.f32 %v2839, %v3183
        %v3226 = vadd.f32 %v2840, %v3186
        %v3227 = vadd.f32 %v2841, %v3191
        %v3228 = vadd.f32 %v2842, %v3194
        %v3229 = vld [vmem:[%s1194] sm:$0xf]
        %v3230 = vld [vmem:[%s1194 + $0x4] sm:$0xf]
        %v3231 = vld [vmem:[%s1194 + $0x8] sm:$0x1]
        %v3232 = vld [vmem:[%s1194 + $0xc] sm:$0xf]
        %v3233 = vld [vmem:[%s1194 + $0x10] sm:$0xf]
        %v3234 = vld [vmem:[%s1194 + $0x14] sm:$0x1]
        %v3235 = vld [vmem:[%s1194 + $0x18] sm:$0xf]
        %v3236 = vld [vmem:[%s1194 + $0x1c] sm:$0xf]
        %v3237 = vld [vmem:[%s1194 + $0x20] sm:$0x1]
        %v3238 = vld [vmem:[%s1194 + $0x24] sm:$0xf]
        %v3239 = vld [vmem:[%s1194 + $0x28] sm:$0xf]
        %v3240 = vld [vmem:[%s1194 + $0x2c] sm:$0x1]
        %v3241 = vld [vmem:[%s1194 + $0x30] sm:$0xf]
        %v3242 = vld [vmem:[%s1194 + $0x34] sm:$0xf]
        %v3243 = vld [vmem:[%s1194 + $0x38] sm:$0x1]
        %v3244 = vld [vmem:[%s1194 + $0x3c] sm:$0xf]
        %v3245 = vld [vmem:[%s1194 + $0x40] sm:$0xf]
        %v3246 = vld [vmem:[%s1194 + $0x44] sm:$0x1]
        %v3247 = vld [vmem:[%s1194 + $0x48] sm:$0xf]
        %v3248 = vld [vmem:[%s1194 + $0x4c] sm:$0xf]
        %v3249 = vld [vmem:[%s1194 + $0x50] sm:$0x1]
        %v3250 = vld [vmem:[%s1194 + $0x54] sm:$0xf]
        %v3251 = vld [vmem:[%s1194 + $0x58] sm:$0xf]
        %v3252 = vld [vmem:[%s1194 + $0x5c] sm:$0x1]
        %v3253 = vld [vmem:[%s1194 + $0x60] sm:$0xf]
        %v3254 = vld [vmem:[%s1194 + $0x64] sm:$0xf]
        %v3255 = vld [vmem:[%s1194 + $0x68] sm:$0x1]
        %v3256 = vld [vmem:[%s1194 + $0x6c] sm:$0xf]
        %v3257 = vld [vmem:[%s1194 + $0x70] sm:$0xf]
        %v3258 = vld [vmem:[%s1194 + $0x74] sm:$0x1]
        %v3259 = vld [vmem:[%s1194 + $0x78] sm:$0xf]
        %v3260 = vld [vmem:[%s1194 + $0x7c] sm:$0xf]
        %v3261 = vld [vmem:[%s1194 + $0x80] sm:$0x1]
        %v3262 = vld [vmem:[%s1194 + $0x84] sm:$0xf]
        %v3263 = vld [vmem:[%s1194 + $0x88] sm:$0xf]
        %v3264 = vld [vmem:[%s1194 + $0x8c] sm:$0x1]
        %v3265 = vld [vmem:[%s1194 + $0x90] sm:$0xf]
        %v3266 = vld [vmem:[%s1194 + $0x94] sm:$0xf]
        %v3267 = vld [vmem:[%s1194 + $0x98] sm:$0x1]
        %v3268 = vld [vmem:[%s1194 + $0x9c] sm:$0xf]
        %v3269 = vld [vmem:[%s1194 + $0xa0] sm:$0xf]
        %v3270 = vld [vmem:[%s1194 + $0xa4] sm:$0x1]
        %v3271 = vld [vmem:[%s1194 + $0xa8] sm:$0xf]
        %v3272 = vld [vmem:[%s1194 + $0xac] sm:$0xf]
        %v3273 = vld [vmem:[%s1194 + $0xb0] sm:$0x1]
        %v3274 = vld [vmem:[%s1194 + $0xb4] sm:$0xf]
        %v3275 = vld [vmem:[%s1194 + $0xb8] sm:$0xf]
        %v3276 = vld [vmem:[%s1194 + $0xbc] sm:$0x1]
        %v3278 = vshrl.u32 %v3229, 16
        %v3280 = vrot.slane %v3278, 4
        %v3281 = vshll.u32 %v3229, 16
        %v3283 = vrot.slane %v3281, 5
        %v3284 = vor.u32 %v3280, %v3283
        %v3285 = vrot.slane %v3284, 4
        %v3287 = vshll.u32 %v3230, 16
        %v3289 = vrot.slane %v3287, 5
        %v3290 = vsel %vm1378, %v3285, %v3289
        %v3291 = vshrl.u32 %v3230, 16
        %v3293 = vrot.slane %v3291, 4
        %v3294 = vor.u32 %v3293, %v3289
        %v3295 = vrot.slane %v3294, 4
        %v3297 = vshll.u32 %v3231, 16
        %v3299 = vrot.slane %v3297, 5
        %v3300 = vsel %vm1378, %v3295, %v3299
        %v3302 = vshrl.u32 %v3232, 16
        %v3304 = vrot.slane %v3302, 4
        %v3305 = vshll.u32 %v3232, 16
        %v3307 = vrot.slane %v3305, 5
        %v3308 = vor.u32 %v3304, %v3307
        %v3309 = vrot.slane %v3308, 4
        %v3311 = vshll.u32 %v3233, 16
        %v3313 = vrot.slane %v3311, 5
        %v3314 = vsel %vm1378, %v3309, %v3313
        %v3315 = vshrl.u32 %v3233, 16
        %v3317 = vrot.slane %v3315, 4
        %v3318 = vor.u32 %v3317, %v3313
        %v3319 = vrot.slane %v3318, 4
        %v3321 = vshll.u32 %v3234, 16
        %v3323 = vrot.slane %v3321, 5
        %v3324 = vsel %vm1378, %v3319, %v3323
        %v3326 = vshrl.u32 %v3235, 16
        %v3328 = vrot.slane %v3326, 4
        %v3329 = vshll.u32 %v3235, 16
        %v3331 = vrot.slane %v3329, 5
        %v3332 = vor.u32 %v3328, %v3331
        %v3333 = vrot.slane %v3332, 4
        %v3335 = vshll.u32 %v3236, 16
        %v3337 = vrot.slane %v3335, 5
        %v3338 = vsel %vm1378, %v3333, %v3337
        %v3339 = vshrl.u32 %v3236, 16
        %v3341 = vrot.slane %v3339, 4
        %v3342 = vor.u32 %v3341, %v3337
        %v3343 = vrot.slane %v3342, 4
        %v3345 = vshll.u32 %v3237, 16
        %v3347 = vrot.slane %v3345, 5
        %v3348 = vsel %vm1378, %v3343, %v3347
        %v3350 = vshrl.u32 %v3238, 16
        %v3352 = vrot.slane %v3350, 4
        %v3353 = vshll.u32 %v3238, 16
        %v3355 = vrot.slane %v3353, 5
        %v3356 = vor.u32 %v3352, %v3355
        %v3357 = vrot.slane %v3356, 4
        %v3359 = vshll.u32 %v3239, 16
        %v3361 = vrot.slane %v3359, 5
        %v3362 = vsel %vm1378, %v3357, %v3361
        %v3363 = vshrl.u32 %v3239, 16
        %v3365 = vrot.slane %v3363, 4
        %v3366 = vor.u32 %v3365, %v3361
        %v3367 = vrot.slane %v3366, 4
        %v3369 = vshll.u32 %v3240, 16
        %v3371 = vrot.slane %v3369, 5
        %v3372 = vsel %vm1378, %v3367, %v3371
        %v3374 = vshrl.u32 %v3241, 16
        %v3376 = vrot.slane %v3374, 4
        %v3377 = vshll.u32 %v3241, 16
        %v3379 = vrot.slane %v3377, 5
        %v3380 = vor.u32 %v3376, %v3379
        %v3381 = vrot.slane %v3380, 4
        %v3383 = vshll.u32 %v3242, 16
        %v3385 = vrot.slane %v3383, 5
        %v3386 = vsel %vm1378, %v3381, %v3385
        %v3387 = vshrl.u32 %v3242, 16
        %v3389 = vrot.slane %v3387, 4
        %v3390 = vor.u32 %v3389, %v3385
        %v3391 = vrot.slane %v3390, 4
        %v3393 = vshll.u32 %v3243, 16
        %v3395 = vrot.slane %v3393, 5
        %v3396 = vsel %vm1378, %v3391, %v3395
        %v3398 = vshrl.u32 %v3244, 16
        %v3400 = vrot.slane %v3398, 4
        %v3401 = vshll.u32 %v3244, 16
        %v3403 = vrot.slane %v3401, 5
        %v3404 = vor.u32 %v3400, %v3403
        %v3405 = vrot.slane %v3404, 4
        %v3407 = vshll.u32 %v3245, 16
        %v3409 = vrot.slane %v3407, 5
        %v3410 = vsel %vm1378, %v3405, %v3409
        %v3411 = vshrl.u32 %v3245, 16
        %v3413 = vrot.slane %v3411, 4
        %v3414 = vor.u32 %v3413, %v3409
        %v3415 = vrot.slane %v3414, 4
        %v3417 = vshll.u32 %v3246, 16
        %v3419 = vrot.slane %v3417, 5
        %v3420 = vsel %vm1378, %v3415, %v3419
        %v3422 = vshrl.u32 %v3247, 16
        %v3424 = vrot.slane %v3422, 4
        %v3425 = vshll.u32 %v3247, 16
        %v3427 = vrot.slane %v3425, 5
        %v3428 = vor.u32 %v3424, %v3427
        %v3429 = vrot.slane %v3428, 4
        %v3431 = vshll.u32 %v3248, 16
        %v3433 = vrot.slane %v3431, 5
        %v3434 = vsel %vm1378, %v3429, %v3433
        %v3435 = vshrl.u32 %v3248, 16
        %v3437 = vrot.slane %v3435, 4
        %v3438 = vor.u32 %v3437, %v3433
        %v3439 = vrot.slane %v3438, 4
        %v3441 = vshll.u32 %v3249, 16
        %v3443 = vrot.slane %v3441, 5
        %v3444 = vsel %vm1378, %v3439, %v3443
        %v3446 = vshrl.u32 %v3250, 16
        %v3448 = vrot.slane %v3446, 4
        %v3449 = vshll.u32 %v3250, 16
        %v3451 = vrot.slane %v3449, 5
        %v3452 = vor.u32 %v3448, %v3451
        %v3453 = vrot.slane %v3452, 4
        %v3455 = vshll.u32 %v3251, 16
        %v3457 = vrot.slane %v3455, 5
        %v3458 = vsel %vm1378, %v3453, %v3457
        %v3459 = vshrl.u32 %v3251, 16
        %v3461 = vrot.slane %v3459, 4
        %v3462 = vor.u32 %v3461, %v3457
        %v3463 = vrot.slane %v3462, 4
        %v3465 = vshll.u32 %v3252, 16
        %v3467 = vrot.slane %v3465, 5
        %v3468 = vsel %vm1378, %v3463, %v3467
        %v3470 = vshrl.u32 %v3253, 16
        %v3472 = vrot.slane %v3470, 4
        %v3473 = vshll.u32 %v3253, 16
        %v3475 = vrot.slane %v3473, 5
        %v3476 = vor.u32 %v3472, %v3475
        %v3477 = vrot.slane %v3476, 4
        %v3479 = vshll.u32 %v3254, 16
        %v3481 = vrot.slane %v3479, 5
        %v3482 = vsel %vm1378, %v3477, %v3481
        %v3483 = vshrl.u32 %v3254, 16
        %v3485 = vrot.slane %v3483, 4
        %v3486 = vor.u32 %v3485, %v3481
        %v3487 = vrot.slane %v3486, 4
        %v3489 = vshll.u32 %v3255, 16
        %v3491 = vrot.slane %v3489, 5
        %v3492 = vsel %vm1378, %v3487, %v3491
        %v3494 = vshrl.u32 %v3256, 16
        %v3496 = vrot.slane %v3494, 4
        %v3497 = vshll.u32 %v3256, 16
        %v3499 = vrot.slane %v3497, 5
        %v3500 = vor.u32 %v3496, %v3499
        %v3501 = vrot.slane %v3500, 4
        %v3503 = vshll.u32 %v3257, 16
        %v3505 = vrot.slane %v3503, 5
        %v3506 = vsel %vm1378, %v3501, %v3505
        %v3507 = vshrl.u32 %v3257, 16
        %v3509 = vrot.slane %v3507, 4
        %v3510 = vor.u32 %v3509, %v3505
        %v3511 = vrot.slane %v3510, 4
        %v3513 = vshll.u32 %v3258, 16
        %v3515 = vrot.slane %v3513, 5
        %v3516 = vsel %vm1378, %v3511, %v3515
        %v3518 = vshrl.u32 %v3259, 16
        %v3520 = vrot.slane %v3518, 4
        %v3521 = vshll.u32 %v3259, 16
        %v3523 = vrot.slane %v3521, 5
        %v3524 = vor.u32 %v3520, %v3523
        %v3525 = vrot.slane %v3524, 4
        %v3527 = vshll.u32 %v3260, 16
        %v3529 = vrot.slane %v3527, 5
        %v3530 = vsel %vm1378, %v3525, %v3529
        %v3531 = vshrl.u32 %v3260, 16
        %v3533 = vrot.slane %v3531, 4
        %v3534 = vor.u32 %v3533, %v3529
        %v3535 = vrot.slane %v3534, 4
        %v3537 = vshll.u32 %v3261, 16
        %v3539 = vrot.slane %v3537, 5
        %v3540 = vsel %vm1378, %v3535, %v3539
        %v3542 = vshrl.u32 %v3262, 16
        %v3544 = vrot.slane %v3542, 4
        %v3545 = vshll.u32 %v3262, 16
        %v3547 = vrot.slane %v3545, 5
        %v3548 = vor.u32 %v3544, %v3547
        %v3549 = vrot.slane %v3548, 4
        %v3551 = vshll.u32 %v3263, 16
        %v3553 = vrot.slane %v3551, 5
        %v3554 = vsel %vm1378, %v3549, %v3553
        %v3555 = vshrl.u32 %v3263, 16
        %v3557 = vrot.slane %v3555, 4
        %v3558 = vor.u32 %v3557, %v3553
        %v3559 = vrot.slane %v3558, 4
        %v3561 = vshll.u32 %v3264, 16
        %v3563 = vrot.slane %v3561, 5
        %v3564 = vsel %vm1378, %v3559, %v3563
        %v3566 = vshrl.u32 %v3265, 16
        %v3568 = vrot.slane %v3566, 4
        %v3569 = vshll.u32 %v3265, 16
        %v3571 = vrot.slane %v3569, 5
        %v3572 = vor.u32 %v3568, %v3571
        %v3573 = vrot.slane %v3572, 4
        %v3575 = vshll.u32 %v3266, 16
        %v3577 = vrot.slane %v3575, 5
        %v3578 = vsel %vm1378, %v3573, %v3577
        %v3579 = vshrl.u32 %v3266, 16
        %v3581 = vrot.slane %v3579, 4
        %v3582 = vor.u32 %v3581, %v3577
        %v3583 = vrot.slane %v3582, 4
        %v3585 = vshll.u32 %v3267, 16
        %v3587 = vrot.slane %v3585, 5
        %v3588 = vsel %vm1378, %v3583, %v3587
        %v3590 = vshrl.u32 %v3268, 16
        %v3592 = vrot.slane %v3590, 4
        %v3593 = vshll.u32 %v3268, 16
        %v3595 = vrot.slane %v3593, 5
        %v3596 = vor.u32 %v3592, %v3595
        %v3597 = vrot.slane %v3596, 4
        %v3599 = vshll.u32 %v3269, 16
        %v3601 = vrot.slane %v3599, 5
        %v3602 = vsel %vm1378, %v3597, %v3601
        %v3603 = vshrl.u32 %v3269, 16
        %v3605 = vrot.slane %v3603, 4
        %v3606 = vor.u32 %v3605, %v3601
        %v3607 = vrot.slane %v3606, 4
        %v3609 = vshll.u32 %v3270, 16
        %v3611 = vrot.slane %v3609, 5
        %v3612 = vsel %vm1378, %v3607, %v3611
        %v3614 = vshrl.u32 %v3271, 16
        %v3616 = vrot.slane %v3614, 4
        %v3617 = vshll.u32 %v3271, 16
        %v3619 = vrot.slane %v3617, 5
        %v3620 = vor.u32 %v3616, %v3619
        %v3621 = vrot.slane %v3620, 4
        %v3623 = vshll.u32 %v3272, 16
        %v3625 = vrot.slane %v3623, 5
        %v3626 = vsel %vm1378, %v3621, %v3625
        %v3627 = vshrl.u32 %v3272, 16
        %v3629 = vrot.slane %v3627, 4
        %v3630 = vor.u32 %v3629, %v3625
        %v3631 = vrot.slane %v3630, 4
        %v3633 = vshll.u32 %v3273, 16
        %v3635 = vrot.slane %v3633, 5
        %v3636 = vsel %vm1378, %v3631, %v3635
        %v3638 = vshrl.u32 %v3274, 16
        %v3640 = vrot.slane %v3638, 4
        %v3641 = vshll.u32 %v3274, 16
        %v3643 = vrot.slane %v3641, 5
        %v3644 = vor.u32 %v3640, %v3643
        %v3645 = vrot.slane %v3644, 4
        %v3647 = vshll.u32 %v3275, 16
        %v3649 = vrot.slane %v3647, 5
        %v3650 = vsel %vm1378, %v3645, %v3649
        %v3651 = vshrl.u32 %v3275, 16
        %v3653 = vrot.slane %v3651, 4
        %v3654 = vor.u32 %v3653, %v3649
        %v3655 = vrot.slane %v3654, 4
        %v3657 = vshll.u32 %v3276, 16
        %v3659 = vrot.slane %v3657, 5
        %v3660 = vsel %vm1378, %v3655, %v3659
        %s3661 = scalar_lea.vmem [#allocation8], 256
        %v3662 = vld [vmem:[%s3661] sm:$0xf]
        %v3663 = vld [vmem:[%s3661 + $0x4] sm:$0xf]
        %v3664 = vld [vmem:[%s3661 + $0x8] sm:$0xf]
        %v3665 = vld [vmem:[%s3661 + $0xc] sm:$0xf]
        %v3666 = vld [vmem:[%s3661 + $0x10] sm:$0xf]
        %v3667 = vld [vmem:[%s3661 + $0x14] sm:$0xf]
        %v3668 = vld [vmem:[%s3661 + $0x18] sm:$0xf]
        %v3669 = vld [vmem:[%s3661 + $0x1c] sm:$0xf]
        %v3670 = vld [vmem:[%s3661 + $0x20] sm:$0xf]
        %v3671 = vld [vmem:[%s3661 + $0x24] sm:$0xf]
        %v3672 = vld [vmem:[%s3661 + $0x28] sm:$0xf]
        %v3673 = vld [vmem:[%s3661 + $0x2c] sm:$0xf]
        %v3674 = vld [vmem:[%s3661 + $0x30] sm:$0xf]
        %v3675 = vld [vmem:[%s3661 + $0x34] sm:$0xf]
        %v3676 = vld [vmem:[%s3661 + $0x38] sm:$0xf]
        %v3677 = vld [vmem:[%s3661 + $0x3c] sm:$0xf]
        %v3678 = vunpack.c.l.b16 %v3290
        %v3679 = vunpack.c.l.b16 %v3300
        %v3680 = vunpack.c.l.b16 %v3314
        %v3681 = vunpack.c.l.b16 %v3324
        %v3682 = vunpack.c.l.b16 %v3338
        %v3683 = vunpack.c.l.b16 %v3348
        %v3684 = vunpack.c.l.b16 %v3362
        %v3685 = vunpack.c.l.b16 %v3372
        %v3686 = vunpack.c.l.b16 %v3386
        %v3687 = vunpack.c.l.b16 %v3396
        %v3688 = vunpack.c.l.b16 %v3410
        %v3689 = vunpack.c.l.b16 %v3420
        %v3690 = vunpack.c.l.b16 %v3434
        %v3691 = vunpack.c.l.b16 %v3444
        %v3692 = vunpack.c.l.b16 %v3458
        %v3693 = vunpack.c.l.b16 %v3468
        %v3694 = vunpack.c.l.b16 %v3482
        %v3695 = vunpack.c.l.b16 %v3492
        %v3696 = vunpack.c.l.b16 %v3506
        %v3697 = vunpack.c.l.b16 %v3516
        %v3698 = vunpack.c.l.b16 %v3530
        %v3699 = vunpack.c.l.b16 %v3540
        %v3700 = vunpack.c.l.b16 %v3554
        %v3701 = vunpack.c.l.b16 %v3564
        %v3702 = vunpack.c.l.b16 %v3578
        %v3703 = vunpack.c.l.b16 %v3588
        %v3704 = vunpack.c.l.b16 %v3602
        %v3705 = vunpack.c.l.b16 %v3612
        %v3706 = vunpack.c.l.b16 %v3626
        %v3707 = vunpack.c.l.b16 %v3636
        %v3708 = vunpack.c.l.b16 %v3650
        %v3709 = vunpack.c.l.b16 %v3660
        %v3710 = vpack.c.b16 %v3679, %v3678
        %v3711 = vpack.c.b16 %v3681, %v3680
        %v3712 = vpack.c.b16 %v3683, %v3682
        %v3713 = vpack.c.b16 %v3685, %v3684
        %v3714 = vpack.c.b16 %v3687, %v3686
        %v3715 = vpack.c.b16 %v3689, %v3688
        %v3716 = vpack.c.b16 %v3691, %v3690
        %v3717 = vpack.c.b16 %v3693, %v3692
        %v3718 = vpack.c.b16 %v3695, %v3694
        %v3719 = vpack.c.b16 %v3697, %v3696
        %v3720 = vpack.c.b16 %v3699, %v3698
        %v3721 = vpack.c.b16 %v3701, %v3700
        %v3722 = vpack.c.b16 %v3703, %v3702
        %v3723 = vpack.c.b16 %v3705, %v3704
        %v3724 = vpack.c.b16 %v3707, %v3706
        %v3725 = vpack.c.b16 %v3709, %v3708
        %v3758 = vunpack.c.l.b16 %v3662
        %v3759 = vunpack.c.l.b16 %v3663
        %v3760 = vunpack.c.l.b16 %v3664
        %v3761 = vunpack.c.l.b16 %v3665
        %v3762 = vunpack.c.l.b16 %v3666
        %v3763 = vunpack.c.l.b16 %v3667
        %v3764 = vunpack.c.l.b16 %v3668
        %v3765 = vunpack.c.l.b16 %v3669
        %v3766 = vunpack.c.l.b16 %v3670
        %v3767 = vunpack.c.l.b16 %v3671
        %v3768 = vunpack.c.l.b16 %v3672
        %v3769 = vunpack.c.l.b16 %v3673
        %v3770 = vunpack.c.l.b16 %v3674
        %v3771 = vunpack.c.l.b16 %v3675
        %v3772 = vunpack.c.l.b16 %v3676
        %v3773 = vunpack.c.l.b16 %v3677
        %v3774 = vpack.c.b16 %v3759, %v3758
        %v3775 = vpack.c.b16 %v3761, %v3760
        %v3776 = vpack.c.b16 %v3763, %v3762
        %v3777 = vpack.c.b16 %v3765, %v3764
        %v3778 = vpack.c.b16 %v3767, %v3766
        %v3779 = vpack.c.b16 %v3769, %v3768
        %v3780 = vpack.c.b16 %v3771, %v3770
        %v3781 = vpack.c.b16 %v3773, %v3772
        %3790 = vmatprep.subr.bf16.mxu0 0
        %3791 = vmatpush1.bf16.msra.mxu0 %v3774
        %3792 = vmatprep.subr.bf16.mxu0 0
        %3793 = vmatpush1.bf16.msra.mxu0 %v3775
        %3794 = vmatprep.subr.bf16.mxu0 0
        %3795 = vmatpush1.bf16.msra.mxu0 %v3776
        %3796 = vmatprep.subr.bf16.mxu0 0
        %3797 = vmatpush1.bf16.msra.mxu0 %v3777
        %3798 = vmatprep.subr.bf16.mxu0 0
        %3799 = vmatpush1.bf16.msra.mxu0 %v3778
        %3800 = vmatprep.subr.bf16.mxu0 0
        %3801 = vmatpush1.bf16.msra.mxu0 %v3779
        %3802 = vmatprep.subr.bf16.mxu0 0
        %3803 = vmatpush1.bf16.msra.mxu0 %v3780
        %3804 = vmatprep.subr.bf16.mxu0 0
        %3805 = vmatpush1.bf16.msra.mxu0 %v3781
        %3806 = vmatprep.subr.bf16.mxu0 0
        %3807 = vmatpush1.bf16.msra.mxu0 0
        %3808 = vmatprep.subr.bf16.mxu0 0
        %3809 = vmatpush1.bf16.msra.mxu0 0
        %3810 = vmatprep.subr.bf16.mxu0 0
        %3811 = vmatpush1.bf16.msra.mxu0 0
        %3812 = vmatprep.subr.bf16.mxu0 0
        %3813 = vmatpush1.bf16.msra.mxu0 0
        %3814 = vmatprep.subr.bf16.mxu0 0
        %3815 = vmatpush1.bf16.msra.mxu0 0
        %3816 = vmatprep.subr.bf16.mxu0 0
        %3817 = vmatpush1.bf16.msra.mxu0 0
        %3818 = vmatprep.subr.bf16.mxu0 0
        %3819 = vmatpush1.bf16.msra.mxu0 0
        %3820 = vmatprep.subr.bf16.mxu0 0
        %3821 = vmatpush1.bf16.msra.mxu0 0
        %3822 = vmatprep.mubr.bf16.mxu0 0
        %3823 = vmatmul.mubr.bf16.gmra.mrb[0].mxu0 %v3710
        %v3824 = vpop.f32.mrb[0].mxu0
        %v3825 = vadd.f32 0.0, %v3824
        %v3826 = vpop.f32.mrb[0].mxu0
        %v3827 = vpop.f32.mrb[0].mxu0
        %v3828 = vadd.f32 0.0, %v3827
        %v3829 = vpop.f32.mrb[0].mxu0
        %3830 = vmatprep.mubr.bf16.mxu0 0
        %3831 = vmatmul.mubr.bf16.gmra.mrb[0].mxu0 %v3711
        %v3832 = vpop.f32.mrb[0].mxu0
        %v3833 = vadd.f32 0.0, %v3832
        %v3834 = vpop.f32.mrb[0].mxu0
        %v3835 = vpop.f32.mrb[0].mxu0
        %v3836 = vadd.f32 0.0, %v3835
        %v3837 = vpop.f32.mrb[0].mxu0
        %3838 = vmatprep.mubr.bf16.mxu0 0
        %3839 = vmatmul.mubr.bf16.gmra.mrb[0].mxu0 %v3712
        %v3840 = vpop.f32.mrb[0].mxu0
        %v3841 = vadd.f32 0.0, %v3840
        %v3842 = vpop.f32.mrb[0].mxu0
        %v3843 = vpop.f32.mrb[0].mxu0
        %v3844 = vadd.f32 0.0, %v3843
        %v3845 = vpop.f32.mrb[0].mxu0
        %3846 = vmatprep.mubr.bf16.mxu0 0
        %3847 = vmatmul.mubr.bf16.gmra.mrb[0].mxu0 %v3713
        %v3848 = vpop.f32.mrb[0].mxu0
        %v3849 = vadd.f32 0.0, %v3848
        %v3850 = vpop.f32.mrb[0].mxu0
        %v3851 = vpop.f32.mrb[0].mxu0
        %v3852 = vadd.f32 0.0, %v3851
        %v3853 = vpop.f32.mrb[0].mxu0
        %3854 = vmatprep.mubr.bf16.mxu0 0
        %3855 = vmatmul.mubr.bf16.gmra.mrb[0].mxu0 %v3714
        %v3856 = vpop.f32.mrb[0].mxu0
        %v3857 = vadd.f32 0.0, %v3856
        %v3858 = vpop.f32.mrb[0].mxu0
        %v3859 = vpop.f32.mrb[0].mxu0
        %v3860 = vadd.f32 0.0, %v3859
        %v3861 = vpop.f32.mrb[0].mxu0
        %3862 = vmatprep.mubr.bf16.mxu0 0
        %3863 = vmatmul.mubr.bf16.gmra.mrb[0].mxu0 %v3715
        %v3864 = vpop.f32.mrb[0].mxu0
        %v3865 = vadd.f32 0.0, %v3864
        %v3866 = vpop.f32.mrb[0].mxu0
        %v3867 = vpop.f32.mrb[0].mxu0
        %v3868 = vadd.f32 0.0, %v3867
        %v3869 = vpop.f32.mrb[0].mxu0
        %3870 = vmatprep.mubr.bf16.mxu0 0
        %3871 = vmatmul.mubr.bf16.gmra.mrb[0].mxu0 %v3716
        %v3872 = vpop.f32.mrb[0].mxu0
        %v3873 = vadd.f32 0.0, %v3872
        %v3874 = vpop.f32.mrb[0].mxu0
        %v3875 = vpop.f32.mrb[0].mxu0
        %v3876 = vadd.f32 0.0, %v3875
        %v3877 = vpop.f32.mrb[0].mxu0
        %3878 = vmatprep.mubr.bf16.mxu0 0
        %3879 = vmatmul.mubr.bf16.gmra.mrb[0].mxu0 %v3717
        %v3880 = vpop.f32.mrb[0].mxu0
        %v3881 = vadd.f32 0.0, %v3880
        %v3882 = vpop.f32.mrb[0].mxu0
        %v3883 = vpop.f32.mrb[0].mxu0
        %v3884 = vadd.f32 0.0, %v3883
        %v3885 = vpop.f32.mrb[0].mxu0
        %3886 = vmatprep.mubr.bf16.mxu0 0
        %3887 = vmatmul.mubr.bf16.gmra.mrb[0].mxu0 %v3718
        %v3888 = vpop.f32.mrb[0].mxu0
        %v3889 = vadd.f32 0.0, %v3888
        %v3890 = vpop.f32.mrb[0].mxu0
        %v3891 = vpop.f32.mrb[0].mxu0
        %v3892 = vadd.f32 0.0, %v3891
        %v3893 = vpop.f32.mrb[0].mxu0
        %3894 = vmatprep.mubr.bf16.mxu0 0
        %3895 = vmatmul.mubr.bf16.gmra.mrb[0].mxu0 %v3719
        %v3896 = vpop.f32.mrb[0].mxu0
        %v3897 = vadd.f32 0.0, %v3896
        %v3898 = vpop.f32.mrb[0].mxu0
        %v3899 = vpop.f32.mrb[0].mxu0
        %v3900 = vadd.f32 0.0, %v3899
        %v3901 = vpop.f32.mrb[0].mxu0
        %3902 = vmatprep.mubr.bf16.mxu0 0
        %3903 = vmatmul.mubr.bf16.gmra.mrb[0].mxu0 %v3720
        %v3904 = vpop.f32.mrb[0].mxu0
        %v3905 = vadd.f32 0.0, %v3904
        %v3906 = vpop.f32.mrb[0].mxu0
        %v3907 = vpop.f32.mrb[0].mxu0
        %v3908 = vadd.f32 0.0, %v3907
        %v3909 = vpop.f32.mrb[0].mxu0
        %3910 = vmatprep.mubr.bf16.mxu0 0
        %3911 = vmatmul.mubr.bf16.gmra.mrb[0].mxu0 %v3721
        %v3912 = vpop.f32.mrb[0].mxu0
        %v3913 = vadd.f32 0.0, %v3912
        %v3914 = vpop.f32.mrb[0].mxu0
        %v3915 = vpop.f32.mrb[0].mxu0
        %v3916 = vadd.f32 0.0, %v3915
        %v3917 = vpop.f32.mrb[0].mxu0
        %3918 = vmatprep.mubr.bf16.mxu0 0
        %3919 = vmatmul.mubr.bf16.gmra.mrb[0].mxu0 %v3722
        %v3920 = vpop.f32.mrb[0].mxu0
        %v3921 = vadd.f32 0.0, %v3920
        %v3922 = vpop.f32.mrb[0].mxu0
        %v3923 = vpop.f32.mrb[0].mxu0
        %v3924 = vadd.f32 0.0, %v3923
        %v3925 = vpop.f32.mrb[0].mxu0
        %3926 = vmatprep.mubr.bf16.mxu0 0
        %3927 = vmatmul.mubr.bf16.gmra.mrb[0].mxu0 %v3723
        %v3928 = vpop.f32.mrb[0].mxu0
        %v3929 = vadd.f32 0.0, %v3928
        %v3930 = vpop.f32.mrb[0].mxu0
        %v3931 = vpop.f32.mrb[0].mxu0
        %v3932 = vadd.f32 0.0, %v3931
        %v3933 = vpop.f32.mrb[0].mxu0
        %3934 = vmatprep.mubr.bf16.mxu0 0
        %3935 = vmatmul.mubr.bf16.gmra.mrb[0].mxu0 %v3724
        %v3936 = vpop.f32.mrb[0].mxu0
        %v3937 = vadd.f32 0.0, %v3936
        %v3938 = vpop.f32.mrb[0].mxu0
        %v3939 = vpop.f32.mrb[0].mxu0
        %v3940 = vadd.f32 0.0, %v3939
        %v3941 = vpop.f32.mrb[0].mxu0
        %3942 = vmatprep.mubr.bf16.mxu0 0
        %3943 = vmatmul.mubr.bf16.gmra.mrb[0].mxu0 %v3725
        %v3944 = vpop.f32.mrb[0].mxu0
        %v3945 = vadd.f32 0.0, %v3944
        %v3946 = vpop.f32.mrb[0].mxu0
        %v3947 = vpop.f32.mrb[0].mxu0
        %v3948 = vadd.f32 0.0, %v3947
        %v3949 = vpop.f32.mrb[0].mxu0
        %3950 = vdwg.mxu0
        %v3951 = vadd.f32 %v3197, %v3825
        %v3952 = vadd.f32 %v3198, %v3828
        %v3953 = vadd.f32 %v3199, %v3833
        %v3954 = vadd.f32 %v3200, %v3836
        %v3955 = vadd.f32 %v3201, %v3841
        %v3956 = vadd.f32 %v3202, %v3844
        %v3957 = vadd.f32 %v3203, %v3849
        %v3958 = vadd.f32 %v3204, %v3852
        %v3959 = vadd.f32 %v3205, %v3857
        %v3960 = vadd.f32 %v3206, %v3860
        %v3961 = vadd.f32 %v3207, %v3865
        %v3962 = vadd.f32 %v3208, %v3868
        %v3963 = vadd.f32 %v3209, %v3873
        %v3964 = vadd.f32 %v3210, %v3876
        %v3965 = vadd.f32 %v3211, %v3881
        %v3966 = vadd.f32 %v3212, %v3884
        %v3967 = vadd.f32 %v3213, %v3889
        %v3968 = vadd.f32 %v3214, %v3892
        %v3969 = vadd.f32 %v3215, %v3897
        %v3970 = vadd.f32 %v3216, %v3900
        %v3971 = vadd.f32 %v3217, %v3905
        %v3972 = vadd.f32 %v3218, %v3908
        %v3973 = vadd.f32 %v3219, %v3913
        %v3974 = vadd.f32 %v3220, %v3916
        %v3975 = vadd.f32 %v3221, %v3921
        %v3976 = vadd.f32 %v3222, %v3924
        %v3977 = vadd.f32 %v3223, %v3929
        %v3978 = vadd.f32 %v3224, %v3932
        %v3979 = vadd.f32 %v3225, %v3937
        %v3980 = vadd.f32 %v3226, %v3940
        %v3981 = vadd.f32 %v3227, %v3945
        %v3982 = vadd.f32 %v3228, %v3948
        %v3983 = vld [vmem:[%s1194] sm:$0xe]
        %v3984 = vld [vmem:[%s1194 + $0xc] sm:$0xe]
        %v3985 = vld [vmem:[%s1194 + $0x18] sm:$0xe]
        %v3986 = vld [vmem:[%s1194 + $0x24] sm:$0xe]
        %v3987 = vld [vmem:[%s1194 + $0x30] sm:$0xe]
        %v3988 = vld [vmem:[%s1194 + $0x3c] sm:$0xe]
        %v3989 = vld [vmem:[%s1194 + $0x48] sm:$0xe]
        %v3990 = vld [vmem:[%s1194 + $0x54] sm:$0xe]
        %v3991 = vld [vmem:[%s1194 + $0x60] sm:$0xe]
        %v3992 = vld [vmem:[%s1194 + $0x6c] sm:$0xe]
        %v3993 = vld [vmem:[%s1194 + $0x78] sm:$0xe]
        %v3994 = vld [vmem:[%s1194 + $0x84] sm:$0xe]
        %v3995 = vld [vmem:[%s1194 + $0x90] sm:$0xe]
        %v3996 = vld [vmem:[%s1194 + $0x9c] sm:$0xe]
        %v3997 = vld [vmem:[%s1194 + $0xa8] sm:$0xe]
        %v3998 = vld [vmem:[%s1194 + $0xb4] sm:$0xe]
        %v4047 = vrot.slane %v3983, 5
        %v4048 = vrot.slane %v4047, 4
        %v4049 = vrot.slane %v3230, 5
        %v4050 = vsel %vm2408, %v4048, %v4049
        %v4051 = vrot.slane %v4049, 4
        %v4052 = vrot.slane %v3231, 5
        %v4053 = vsel %vm2408, %v4051, %v4052
        %v4054 = vrot.slane %v3984, 5
        %v4055 = vrot.slane %v4054, 4
        %v4056 = vrot.slane %v3233, 5
        %v4057 = vsel %vm2408, %v4055, %v4056
        %v4058 = vrot.slane %v4056, 4
        %v4059 = vrot.slane %v3234, 5
        %v4060 = vsel %vm2408, %v4058, %v4059
        %v4061 = vrot.slane %v3985, 5
        %v4062 = vrot.slane %v4061, 4
        %v4063 = vrot.slane %v3236, 5
        %v4064 = vsel %vm2408, %v4062, %v4063
        %v4065 = vrot.slane %v4063, 4
        %v4066 = vrot.slane %v3237, 5
        %v4067 = vsel %vm2408, %v4065, %v4066
        %v4068 = vrot.slane %v3986, 5
        %v4069 = vrot.slane %v4068, 4
        %v4070 = vrot.slane %v3239, 5
        %v4071 = vsel %vm2408, %v4069, %v4070
        %v4072 = vrot.slane %v4070, 4
        %v4073 = vrot.slane %v3240, 5
        %v4074 = vsel %vm2408, %v4072, %v4073
        %v4075 = vrot.slane %v3987, 5
        %v4076 = vrot.slane %v4075, 4
        %v4077 = vrot.slane %v3242, 5
        %v4078 = vsel %vm2408, %v4076, %v4077
        %v4079 = vrot.slane %v4077, 4
        %v4080 = vrot.slane %v3243, 5
        %v4081 = vsel %vm2408, %v4079, %v4080
        %v4082 = vrot.slane %v3988, 5
        %v4083 = vrot.slane %v4082, 4
        %v4084 = vrot.slane %v3245, 5
        %v4085 = vsel %vm2408, %v4083, %v4084
        %v4086 = vrot.slane %v4084, 4
        %v4087 = vrot.slane %v3246, 5
        %v4088 = vsel %vm2408, %v4086, %v4087
        %v4089 = vrot.slane %v3989, 5
        %v4090 = vrot.slane %v4089, 4
        %v4091 = vrot.slane %v3248, 5
        %v4092 = vsel %vm2408, %v4090, %v4091
        %v4093 = vrot.slane %v4091, 4
        %v4094 = vrot.slane %v3249, 5
        %v4095 = vsel %vm2408, %v4093, %v4094
        %v4096 = vrot.slane %v3990, 5
        %v4097 = vrot.slane %v4096, 4
        %v4098 = vrot.slane %v3251, 5
        %v4099 = vsel %vm2408, %v4097, %v4098
        %v4100 = vrot.slane %v4098, 4
        %v4101 = vrot.slane %v3252, 5
        %v4102 = vsel %vm2408, %v4100, %v4101
        %v4103 = vrot.slane %v3991, 5
        %v4104 = vrot.slane %v4103, 4
        %v4105 = vrot.slane %v3254, 5
        %v4106 = vsel %vm2408, %v4104, %v4105
        %v4107 = vrot.slane %v4105, 4
        %v4108 = vrot.slane %v3255, 5
        %v4109 = vsel %vm2408, %v4107, %v4108
        %v4110 = vrot.slane %v3992, 5
        %v4111 = vrot.slane %v4110, 4
        %v4112 = vrot.slane %v3257, 5
        %v4113 = vsel %vm2408, %v4111, %v4112
        %v4114 = vrot.slane %v4112, 4
        %v4115 = vrot.slane %v3258, 5
        %v4116 = vsel %vm2408, %v4114, %v4115
        %v4117 = vrot.slane %v3993, 5
        %v4118 = vrot.slane %v4117, 4
        %v4119 = vrot.slane %v3260, 5
        %v4120 = vsel %vm2408, %v4118, %v4119
        %v4121 = vrot.slane %v4119, 4
        %v4122 = vrot.slane %v3261, 5
        %v4123 = vsel %vm2408, %v4121, %v4122
        %v4124 = vrot.slane %v3994, 5
        %v4125 = vrot.slane %v4124, 4
        %v4126 = vrot.slane %v3263, 5
        %v4127 = vsel %vm2408, %v4125, %v4126
        %v4128 = vrot.slane %v4126, 4
        %v4129 = vrot.slane %v3264, 5
        %v4130 = vsel %vm2408, %v4128, %v4129
        %v4131 = vrot.slane %v3995, 5
        %v4132 = vrot.slane %v4131, 4
        %v4133 = vrot.slane %v3266, 5
        %v4134 = vsel %vm2408, %v4132, %v4133
        %v4135 = vrot.slane %v4133, 4
        %v4136 = vrot.slane %v3267, 5
        %v4137 = vsel %vm2408, %v4135, %v4136
        %v4138 = vrot.slane %v3996, 5
        %v4139 = vrot.slane %v4138, 4
        %v4140 = vrot.slane %v3269, 5
        %v4141 = vsel %vm2408, %v4139, %v4140
        %v4142 = vrot.slane %v4140, 4
        %v4143 = vrot.slane %v3270, 5
        %v4144 = vsel %vm2408, %v4142, %v4143
        %v4145 = vrot.slane %v3997, 5
        %v4146 = vrot.slane %v4145, 4
        %v4147 = vrot.slane %v3272, 5
        %v4148 = vsel %vm2408, %v4146, %v4147
        %v4149 = vrot.slane %v4147, 4
        %v4150 = vrot.slane %v3273, 5
        %v4151 = vsel %vm2408, %v4149, %v4150
        %v4152 = vrot.slane %v3998, 5
        %v4153 = vrot.slane %v4152, 4
        %v4154 = vrot.slane %v3275, 5
        %v4155 = vsel %vm2408, %v4153, %v4154
        %v4156 = vrot.slane %v4154, 4
        %v4157 = vrot.slane %v3276, 5
        %v4158 = vsel %vm2408, %v4156, %v4157
        %s4159 = scalar_lea.vmem [#allocation8], 320
        %v4160 = vld [vmem:[%s4159] sm:$0xf]
        %v4161 = vld [vmem:[%s4159 + $0x4] sm:$0xf]
        %v4162 = vld [vmem:[%s4159 + $0x8] sm:$0xf]
        %v4163 = vld [vmem:[%s4159 + $0xc] sm:$0xf]
        %v4164 = vld [vmem:[%s4159 + $0x10] sm:$0xf]
        %v4165 = vld [vmem:[%s4159 + $0x14] sm:$0xf]
        %v4166 = vld [vmem:[%s4159 + $0x18] sm:$0xf]
        %v4167 = vld [vmem:[%s4159 + $0x1c] sm:$0xf]
        %v4168 = vld [vmem:[%s4159 + $0x20] sm:$0xf]
        %v4169 = vld [vmem:[%s4159 + $0x24] sm:$0xf]
        %v4170 = vld [vmem:[%s4159 + $0x28] sm:$0xf]
        %v4171 = vld [vmem:[%s4159 + $0x2c] sm:$0xf]
        %v4172 = vld [vmem:[%s4159 + $0x30] sm:$0xf]
        %v4173 = vld [vmem:[%s4159 + $0x34] sm:$0xf]
        %v4174 = vld [vmem:[%s4159 + $0x38] sm:$0xf]
        %v4175 = vld [vmem:[%s4159 + $0x3c] sm:$0xf]
        %v4176 = vunpack.c.l.b16 %v4050
        %v4177 = vunpack.c.l.b16 %v4053
        %v4178 = vunpack.c.l.b16 %v4057
        %v4179 = vunpack.c.l.b16 %v4060
        %v4180 = vunpack.c.l.b16 %v4064
        %v4181 = vunpack.c.l.b16 %v4067
        %v4182 = vunpack.c.l.b16 %v4071
        %v4183 = vunpack.c.l.b16 %v4074
        %v4184 = vunpack.c.l.b16 %v4078
        %v4185 = vunpack.c.l.b16 %v4081
        %v4186 = vunpack.c.l.b16 %v4085
        %v4187 = vunpack.c.l.b16 %v4088
        %v4188 = vunpack.c.l.b16 %v4092
        %v4189 = vunpack.c.l.b16 %v4095
        %v4190 = vunpack.c.l.b16 %v4099
        %v4191 = vunpack.c.l.b16 %v4102
        %v4192 = vunpack.c.l.b16 %v4106
        %v4193 = vunpack.c.l.b16 %v4109
        %v4194 = vunpack.c.l.b16 %v4113
        %v4195 = vunpack.c.l.b16 %v4116
        %v4196 = vunpack.c.l.b16 %v4120
        %v4197 = vunpack.c.l.b16 %v4123
        %v4198 = vunpack.c.l.b16 %v4127
        %v4199 = vunpack.c.l.b16 %v4130
        %v4200 = vunpack.c.l.b16 %v4134
        %v4201 = vunpack.c.l.b16 %v4137
        %v4202 = vunpack.c.l.b16 %v4141
        %v4203 = vunpack.c.l.b16 %v4144
        %v4204 = vunpack.c.l.b16 %v4148
        %v4205 = vunpack.c.l.b16 %v4151
        %v4206 = vunpack.c.l.b16 %v4155
        %v4207 = vunpack.c.l.b16 %v4158
        %v4208 = vpack.c.b16 %v4177, %v4176
        %v4209 = vpack.c.b16 %v4179, %v4178
        %v4210 = vpack.c.b16 %v4181, %v4180
        %v4211 = vpack.c.b16 %v4183, %v4182
        %v4212 = vpack.c.b16 %v4185, %v4184
        %v4213 = vpack.c.b16 %v4187, %v4186
        %v4214 = vpack.c.b16 %v4189, %v4188
        %v4215 = vpack.c.b16 %v4191, %v4190
        %v4216 = vpack.c.b16 %v4193, %v4192
        %v4217 = vpack.c.b16 %v4195, %v4194
        %v4218 = vpack.c.b16 %v4197, %v4196
        %v4219 = vpack.c.b16 %v4199, %v4198
        %v4220 = vpack.c.b16 %v4201, %v4200
        %v4221 = vpack.c.b16 %v4203, %v4202
        %v4222 = vpack.c.b16 %v4205, %v4204
        %v4223 = vpack.c.b16 %v4207, %v4206
        %v4256 = vunpack.c.l.b16 %v4160
        %v4257 = vunpack.c.l.b16 %v4161
        %v4258 = vunpack.c.l.b16 %v4162
        %v4259 = vunpack.c.l.b16 %v4163
        %v4260 = vunpack.c.l.b16 %v4164
        %v4261 = vunpack.c.l.b16 %v4165
        %v4262 = vunpack.c.l.b16 %v4166
        %v4263 = vunpack.c.l.b16 %v4167
        %v4264 = vunpack.c.l.b16 %v4168
        %v4265 = vunpack.c.l.b16 %v4169
        %v4266 = vunpack.c.l.b16 %v4170
        %v4267 = vunpack.c.l.b16 %v4171
        %v4268 = vunpack.c.l.b16 %v4172
        %v4269 = vunpack.c.l.b16 %v4173
        %v4270 = vunpack.c.l.b16 %v4174
        %v4271 = vunpack.c.l.b16 %v4175
        %v4272 = vpack.c.b16 %v4257, %v4256
        %v4273 = vpack.c.b16 %v4259, %v4258
        %v4274 = vpack.c.b16 %v4261, %v4260
        %v4275 = vpack.c.b16 %v4263, %v4262
        %v4276 = vpack.c.b16 %v4265, %v4264
        %v4277 = vpack.c.b16 %v4267, %v4266
        %v4278 = vpack.c.b16 %v4269, %v4268
        %v4279 = vpack.c.b16 %v4271, %v4270
        %4288 = vmatprep.subr.bf16.mxu0 0
        %4289 = vmatpush1.bf16.msra.mxu0 %v4272
        %4290 = vmatprep.subr.bf16.mxu0 0
        %4291 = vmatpush1.bf16.msra.mxu0 %v4273
        %4292 = vmatprep.subr.bf16.mxu0 0
        %4293 = vmatpush1.bf16.msra.mxu0 %v4274
        %4294 = vmatprep.subr.bf16.mxu0 0
        %4295 = vmatpush1.bf16.msra.mxu0 %v4275
        %4296 = vmatprep.subr.bf16.mxu0 0
        %4297 = vmatpush1.bf16.msra.mxu0 %v4276
        %4298 = vmatprep.subr.bf16.mxu0 0
        %4299 = vmatpush1.bf16.msra.mxu0 %v4277
        %4300 = vmatprep.subr.bf16.mxu0 0
        %4301 = vmatpush1.bf16.msra.mxu0 %v4278
        %4302 = vmatprep.subr.bf16.mxu0 0
        %4303 = vmatpush1.bf16.msra.mxu0 %v4279
        %4304 = vmatprep.subr.bf16.mxu0 0
        %4305 = vmatpush1.bf16.msra.mxu0 0
        %4306 = vmatprep.subr.bf16.mxu0 0
        %4307 = vmatpush1.bf16.msra.mxu0 0
        %4308 = vmatprep.subr.bf16.mxu0 0
        %4309 = vmatpush1.bf16.msra.mxu0 0
        %4310 = vmatprep.subr.bf16.mxu0 0
        %4311 = vmatpush1.bf16.msra.mxu0 0
        %4312 = vmatprep.subr.bf16.mxu0 0
        %4313 = vmatpush1.bf16.msra.mxu0 0
        %4314 = vmatprep.subr.bf16.mxu0 0
        %4315 = vmatpush1.bf16.msra.mxu0 0
        %4316 = vmatprep.subr.bf16.mxu0 0
        %4317 = vmatpush1.bf16.msra.mxu0 0
        %4318 = vmatprep.subr.bf16.mxu0 0
        %4319 = vmatpush1.bf16.msra.mxu0 0
        %4320 = vmatprep.mubr.bf16.mxu0 0
        %4321 = vmatmul.mubr.bf16.gmra.mrb[0].mxu0 %v4208
        %v4322 = vpop.f32.mrb[0].mxu0
        %v4323 = vadd.f32 0.0, %v4322
        %v4324 = vpop.f32.mrb[0].mxu0
        %v4325 = vpop.f32.mrb[0].mxu0
        %v4326 = vadd.f32 0.0, %v4325
        %v4327 = vpop.f32.mrb[0].mxu0
        %4328 = vmatprep.mubr.bf16.mxu0 0
        %4329 = vmatmul.mubr.bf16.gmra.mrb[0].mxu0 %v4209
        %v4330 = vpop.f32.mrb[0].mxu0
        %v4331 = vadd.f32 0.0, %v4330
        %v4332 = vpop.f32.mrb[0].mxu0
        %v4333 = vpop.f32.mrb[0].mxu0
        %v4334 = vadd.f32 0.0, %v4333
        %v4335 = vpop.f32.mrb[0].mxu0
        %4336 = vmatprep.mubr.bf16.mxu0 0
        %4337 = vmatmul.mubr.bf16.gmra.mrb[0].mxu0 %v4210
        %v4338 = vpop.f32.mrb[0].mxu0
        %v4339 = vadd.f32 0.0, %v4338
        %v4340 = vpop.f32.mrb[0].mxu0
        %v4341 = vpop.f32.mrb[0].mxu0
        %v4342 = vadd.f32 0.0, %v4341
        %v4343 = vpop.f32.mrb[0].mxu0
        %4344 = vmatprep.mubr.bf16.mxu0 0
        %4345 = vmatmul.mubr.bf16.gmra.mrb[0].mxu0 %v4211
        %v4346 = vpop.f32.mrb[0].mxu0
        %v4347 = vadd.f32 0.0, %v4346
        %v4348 = vpop.f32.mrb[0].mxu0
        %v4349 = vpop.f32.mrb[0].mxu0
        %v4350 = vadd.f32 0.0, %v4349
        %v4351 = vpop.f32.mrb[0].mxu0
        %4352 = vmatprep.mubr.bf16.mxu0 0
        %4353 = vmatmul.mubr.bf16.gmra.mrb[0].mxu0 %v4212
        %v4354 = vpop.f32.mrb[0].mxu0
        %v4355 = vadd.f32 0.0, %v4354
        %v4356 = vpop.f32.mrb[0].mxu0
        %v4357 = vpop.f32.mrb[0].mxu0
        %v4358 = vadd.f32 0.0, %v4357
        %v4359 = vpop.f32.mrb[0].mxu0
        %4360 = vmatprep.mubr.bf16.mxu0 0
        %4361 = vmatmul.mubr.bf16.gmra.mrb[0].mxu0 %v4213
        %v4362 = vpop.f32.mrb[0].mxu0
        %v4363 = vadd.f32 0.0, %v4362
        %v4364 = vpop.f32.mrb[0].mxu0
        %v4365 = vpop.f32.mrb[0].mxu0
        %v4366 = vadd.f32 0.0, %v4365
        %v4367 = vpop.f32.mrb[0].mxu0
        %4368 = vmatprep.mubr.bf16.mxu0 0
        %4369 = vmatmul.mubr.bf16.gmra.mrb[0].mxu0 %v4214
        %v4370 = vpop.f32.mrb[0].mxu0
        %v4371 = vadd.f32 0.0, %v4370
        %v4372 = vpop.f32.mrb[0].mxu0
        %v4373 = vpop.f32.mrb[0].mxu0
        %v4374 = vadd.f32 0.0, %v4373
        %v4375 = vpop.f32.mrb[0].mxu0
        %4376 = vmatprep.mubr.bf16.mxu0 0
        %4377 = vmatmul.mubr.bf16.gmra.mrb[0].mxu0 %v4215
        %v4378 = vpop.f32.mrb[0].mxu0
        %v4379 = vadd.f32 0.0, %v4378
        %v4380 = vpop.f32.mrb[0].mxu0
        %v4381 = vpop.f32.mrb[0].mxu0
        %v4382 = vadd.f32 0.0, %v4381
        %v4383 = vpop.f32.mrb[0].mxu0
        %4384 = vmatprep.mubr.bf16.mxu0 0
        %4385 = vmatmul.mubr.bf16.gmra.mrb[0].mxu0 %v4216
        %v4386 = vpop.f32.mrb[0].mxu0
        %v4387 = vadd.f32 0.0, %v4386
        %v4388 = vpop.f32.mrb[0].mxu0
        %v4389 = vpop.f32.mrb[0].mxu0
        %v4390 = vadd.f32 0.0, %v4389
        %v4391 = vpop.f32.mrb[0].mxu0
        %4392 = vmatprep.mubr.bf16.mxu0 0
        %4393 = vmatmul.mubr.bf16.gmra.mrb[0].mxu0 %v4217
        %v4394 = vpop.f32.mrb[0].mxu0
        %v4395 = vadd.f32 0.0, %v4394
        %v4396 = vpop.f32.mrb[0].mxu0
        %v4397 = vpop.f32.mrb[0].mxu0
        %v4398 = vadd.f32 0.0, %v4397
        %v4399 = vpop.f32.mrb[0].mxu0
        %4400 = vmatprep.mubr.bf16.mxu0 0
        %4401 = vmatmul.mubr.bf16.gmra.mrb[0].mxu0 %v4218
        %v4402 = vpop.f32.mrb[0].mxu0
        %v4403 = vadd.f32 0.0, %v4402
        %v4404 = vpop.f32.mrb[0].mxu0
        %v4405 = vpop.f32.mrb[0].mxu0
        %v4406 = vadd.f32 0.0, %v4405
        %v4407 = vpop.f32.mrb[0].mxu0
        %4408 = vmatprep.mubr.bf16.mxu0 0
        %4409 = vmatmul.mubr.bf16.gmra.mrb[0].mxu0 %v4219
        %v4410 = vpop.f32.mrb[0].mxu0
        %v4411 = vadd.f32 0.0, %v4410
        %v4412 = vpop.f32.mrb[0].mxu0
        %v4413 = vpop.f32.mrb[0].mxu0
        %v4414 = vadd.f32 0.0, %v4413
        %v4415 = vpop.f32.mrb[0].mxu0
        %4416 = vmatprep.mubr.bf16.mxu0 0
        %4417 = vmatmul.mubr.bf16.gmra.mrb[0].mxu0 %v4220
        %v4418 = vpop.f32.mrb[0].mxu0
        %v4419 = vadd.f32 0.0, %v4418
        %v4420 = vpop.f32.mrb[0].mxu0
        %v4421 = vpop.f32.mrb[0].mxu0
        %v4422 = vadd.f32 0.0, %v4421
        %v4423 = vpop.f32.mrb[0].mxu0
        %4424 = vmatprep.mubr.bf16.mxu0 0
        %4425 = vmatmul.mubr.bf16.gmra.mrb[0].mxu0 %v4221
        %v4426 = vpop.f32.mrb[0].mxu0
        %v4427 = vadd.f32 0.0, %v4426
        %v4428 = vpop.f32.mrb[0].mxu0
        %v4429 = vpop.f32.mrb[0].mxu0
        %v4430 = vadd.f32 0.0, %v4429
        %v4431 = vpop.f32.mrb[0].mxu0
        %4432 = vmatprep.mubr.bf16.mxu0 0
        %4433 = vmatmul.mubr.bf16.gmra.mrb[0].mxu0 %v4222
        %v4434 = vpop.f32.mrb[0].mxu0
        %v4435 = vadd.f32 0.0, %v4434
        %v4436 = vpop.f32.mrb[0].mxu0
        %v4437 = vpop.f32.mrb[0].mxu0
        %v4438 = vadd.f32 0.0, %v4437
        %v4439 = vpop.f32.mrb[0].mxu0
        %4440 = vmatprep.mubr.bf16.mxu0 0
        %4441 = vmatmul.mubr.bf16.gmra.mrb[0].mxu0 %v4223
        %v4442 = vpop.f32.mrb[0].mxu0
        %v4443 = vadd.f32 0.0, %v4442
        %v4444 = vpop.f32.mrb[0].mxu0
        %v4445 = vpop.f32.mrb[0].mxu0
        %v4446 = vadd.f32 0.0, %v4445
        %v4447 = vpop.f32.mrb[0].mxu0
        %4448 = vdwg.mxu0
        %v4449 = vadd.f32 %v3951, %v4323
        %v4450 = vadd.f32 %v3952, %v4326
        %v4451 = vadd.f32 %v3953, %v4331
        %v4452 = vadd.f32 %v3954, %v4334
        %v4453 = vadd.f32 %v3955, %v4339
        %v4454 = vadd.f32 %v3956, %v4342
        %v4455 = vadd.f32 %v3957, %v4347
        %v4456 = vadd.f32 %v3958, %v4350
        %v4457 = vadd.f32 %v3959, %v4355
        %v4458 = vadd.f32 %v3960, %v4358
        %v4459 = vadd.f32 %v3961, %v4363
        %v4460 = vadd.f32 %v3962, %v4366
        %v4461 = vadd.f32 %v3963, %v4371
        %v4462 = vadd.f32 %v3964, %v4374
        %v4463 = vadd.f32 %v3965, %v4379
        %v4464 = vadd.f32 %v3966, %v4382
        %v4465 = vadd.f32 %v3967, %v4387
        %v4466 = vadd.f32 %v3968, %v4390
        %v4467 = vadd.f32 %v3969, %v4395
        %v4468 = vadd.f32 %v3970, %v4398
        %v4469 = vadd.f32 %v3971, %v4403
        %v4470 = vadd.f32 %v3972, %v4406
        %v4471 = vadd.f32 %v3973, %v4411
        %v4472 = vadd.f32 %v3974, %v4414
        %v4473 = vadd.f32 %v3975, %v4419
        %v4474 = vadd.f32 %v3976, %v4422
        %v4475 = vadd.f32 %v3977, %v4427
        %v4476 = vadd.f32 %v3978, %v4430
        %v4477 = vadd.f32 %v3979, %v4435
        %v4478 = vadd.f32 %v3980, %v4438
        %v4479 = vadd.f32 %v3981, %v4443
        %v4480 = vadd.f32 %v3982, %v4446
        %s4481 = scalar_lea.vmem [#allocation2], 24
        %v4482 = vld [vmem:[%s4481] sm:$0xf]
        %v4483 = vld [vmem:[%s4481 + $0x4] sm:$0xf]
        %v4484 = vld [vmem:[%s4481 + $0xc] sm:$0xf]
        %v4485 = vld [vmem:[%s4481 + $0x10] sm:$0xf]
        %v4486 = vld [vmem:[%s4481 + $0x18] sm:$0xf]
        %v4487 = vld [vmem:[%s4481 + $0x1c] sm:$0xf]
        %v4488 = vld [vmem:[%s4481 + $0x24] sm:$0xf]
        %v4489 = vld [vmem:[%s4481 + $0x28] sm:$0xf]
        %v4490 = vld [vmem:[%s4481 + $0x30] sm:$0xf]
        %v4491 = vld [vmem:[%s4481 + $0x34] sm:$0xf]
        %v4492 = vld [vmem:[%s4481 + $0x3c] sm:$0xf]
        %v4493 = vld [vmem:[%s4481 + $0x40] sm:$0xf]
        %v4494 = vld [vmem:[%s4481 + $0x48] sm:$0xf]
        %v4495 = vld [vmem:[%s4481 + $0x4c] sm:$0xf]
        %v4496 = vld [vmem:[%s4481 + $0x54] sm:$0xf]
        %v4497 = vld [vmem:[%s4481 + $0x58] sm:$0xf]
        %v4498 = vld [vmem:[%s4481 + $0x60] sm:$0xf]
        %v4499 = vld [vmem:[%s4481 + $0x64] sm:$0xf]
        %v4500 = vld [vmem:[%s4481 + $0x6c] sm:$0xf]
        %v4501 = vld [vmem:[%s4481 + $0x70] sm:$0xf]
        %v4502 = vld [vmem:[%s4481 + $0x78] sm:$0xf]
        %v4503 = vld [vmem:[%s4481 + $0x7c] sm:$0xf]
        %v4504 = vld [vmem:[%s4481 + $0x84] sm:$0xf]
        %v4505 = vld [vmem:[%s4481 + $0x88] sm:$0xf]
        %v4506 = vld [vmem:[%s4481 + $0x90] sm:$0xf]
        %v4507 = vld [vmem:[%s4481 + $0x94] sm:$0xf]
        %v4508 = vld [vmem:[%s4481 + $0x9c] sm:$0xf]
        %v4509 = vld [vmem:[%s4481 + $0xa0] sm:$0xf]
        %v4510 = vld [vmem:[%s4481 + $0xa8] sm:$0xf]
        %v4511 = vld [vmem:[%s4481 + $0xac] sm:$0xf]
        %v4512 = vld [vmem:[%s4481 + $0xb4] sm:$0xf]
        %v4513 = vld [vmem:[%s4481 + $0xb8] sm:$0xf]
        %s4514 = scalar_lea.vmem [#allocation8], 384
        %v4515 = vld [vmem:[%s4514] sm:$0xf]
        %v4516 = vld [vmem:[%s4514 + $0x4] sm:$0xf]
        %v4517 = vld [vmem:[%s4514 + $0x8] sm:$0xf]
        %v4518 = vld [vmem:[%s4514 + $0xc] sm:$0xf]
        %v4519 = vld [vmem:[%s4514 + $0x10] sm:$0xf]
        %v4520 = vld [vmem:[%s4514 + $0x14] sm:$0xf]
        %v4521 = vld [vmem:[%s4514 + $0x18] sm:$0xf]
        %v4522 = vld [vmem:[%s4514 + $0x1c] sm:$0xf]
        %v4523 = vld [vmem:[%s4514 + $0x20] sm:$0xf]
        %v4524 = vld [vmem:[%s4514 + $0x24] sm:$0xf]
        %v4525 = vld [vmem:[%s4514 + $0x28] sm:$0xf]
        %v4526 = vld [vmem:[%s4514 + $0x2c] sm:$0xf]
        %v4527 = vld [vmem:[%s4514 + $0x30] sm:$0xf]
        %v4528 = vld [vmem:[%s4514 + $0x34] sm:$0xf]
        %v4529 = vld [vmem:[%s4514 + $0x38] sm:$0xf]
        %v4530 = vld [vmem:[%s4514 + $0x3c] sm:$0xf]
        %v4563 = vunpack.c.l.b16 %v4482
        %v4564 = vunpack.c.l.b16 %v4483
        %v4565 = vunpack.c.l.b16 %v4484
        %v4566 = vunpack.c.l.b16 %v4485
        %v4567 = vunpack.c.l.b16 %v4486
        %v4568 = vunpack.c.l.b16 %v4487
        %v4569 = vunpack.c.l.b16 %v4488
        %v4570 = vunpack.c.l.b16 %v4489
        %v4571 = vunpack.c.l.b16 %v4490
        %v4572 = vunpack.c.l.b16 %v4491
        %v4573 = vunpack.c.l.b16 %v4492
        %v4574 = vunpack.c.l.b16 %v4493
        %v4575 = vunpack.c.l.b16 %v4494
        %v4576 = vunpack.c.l.b16 %v4495
        %v4577 = vunpack.c.l.b16 %v4496
        %v4578 = vunpack.c.l.b16 %v4497
        %v4579 = vunpack.c.l.b16 %v4498
        %v4580 = vunpack.c.l.b16 %v4499
        %v4581 = vunpack.c.l.b16 %v4500
        %v4582 = vunpack.c.l.b16 %v4501
        %v4583 = vunpack.c.l.b16 %v4502
        %v4584 = vunpack.c.l.b16 %v4503
        %v4585 = vunpack.c.l.b16 %v4504
        %v4586 = vunpack.c.l.b16 %v4505
        %v4587 = vunpack.c.l.b16 %v4506
        %v4588 = vunpack.c.l.b16 %v4507
        %v4589 = vunpack.c.l.b16 %v4508
        %v4590 = vunpack.c.l.b16 %v4509
        %v4591 = vunpack.c.l.b16 %v4510
        %v4592 = vunpack.c.l.b16 %v4511
        %v4593 = vunpack.c.l.b16 %v4512
        %v4594 = vunpack.c.l.b16 %v4513
        %v4595 = vpack.c.b16 %v4564, %v4563
        %v4596 = vpack.c.b16 %v4566, %v4565
        %v4597 = vpack.c.b16 %v4568, %v4567
        %v4598 = vpack.c.b16 %v4570, %v4569
        %v4599 = vpack.c.b16 %v4572, %v4571
        %v4600 = vpack.c.b16 %v4574, %v4573
        %v4601 = vpack.c.b16 %v4576, %v4575
        %v4602 = vpack.c.b16 %v4578, %v4577
        %v4603 = vpack.c.b16 %v4580, %v4579
        %v4604 = vpack.c.b16 %v4582, %v4581
        %v4605 = vpack.c.b16 %v4584, %v4583
        %v4606 = vpack.c.b16 %v4586, %v4585
        %v4607 = vpack.c.b16 %v4588, %v4587
        %v4608 = vpack.c.b16 %v4590, %v4589
        %v4609 = vpack.c.b16 %v4592, %v4591
        %v4610 = vpack.c.b16 %v4594, %v4593
        %v4643 = vunpack.c.l.b16 %v4515
        %v4644 = vunpack.c.l.b16 %v4516
        %v4645 = vunpack.c.l.b16 %v4517
        %v4646 = vunpack.c.l.b16 %v4518
        %v4647 = vunpack.c.l.b16 %v4519
        %v4648 = vunpack.c.l.b16 %v4520
        %v4649 = vunpack.c.l.b16 %v4521
        %v4650 = vunpack.c.l.b16 %v4522
        %v4651 = vunpack.c.l.b16 %v4523
        %v4652 = vunpack.c.l.b16 %v4524
        %v4653 = vunpack.c.l.b16 %v4525
        %v4654 = vunpack.c.l.b16 %v4526
        %v4655 = vunpack.c.l.b16 %v4527
        %v4656 = vunpack.c.l.b16 %v4528
        %v4657 = vunpack.c.l.b16 %v4529
        %v4658 = vunpack.c.l.b16 %v4530
        %v4659 = vpack.c.b16 %v4644, %v4643
        %v4660 = vpack.c.b16 %v4646, %v4645
        %v4661 = vpack.c.b16 %v4648, %v4647
        %v4662 = vpack.c.b16 %v4650, %v4649
        %v4663 = vpack.c.b16 %v4652, %v4651
        %v4664 = vpack.c.b16 %v4654, %v4653
        %v4665 = vpack.c.b16 %v4656, %v4655
        %v4666 = vpack.c.b16 %v4658, %v4657
        %4675 = vmatprep.subr.bf16.mxu0 0
        %4676 = vmatpush1.bf16.msra.mxu0 %v4659
        %4677 = vmatprep.subr.bf16.mxu0 0
        %4678 = vmatpush1.bf16.msra.mxu0 %v4660
        %4679 = vmatprep.subr.bf16.mxu0 0
        %4680 = vmatpush1.bf16.msra.mxu0 %v4661
        %4681 = vmatprep.subr.bf16.mxu0 0
        %4682 = vmatpush1.bf16.msra.mxu0 %v4662
        %4683 = vmatprep.subr.bf16.mxu0 0
        %4684 = vmatpush1.bf16.msra.mxu0 %v4663
        %4685 = vmatprep.subr.bf16.mxu0 0
        %4686 = vmatpush1.bf16.msra.mxu0 %v4664
        %4687 = vmatprep.subr.bf16.mxu0 0
        %4688 = vmatpush1.bf16.msra.mxu0 %v4665
        %4689 = vmatprep.subr.bf16.mxu0 0
        %4690 = vmatpush1.bf16.msra.mxu0 %v4666
        %4691 = vmatprep.subr.bf16.mxu0 0
        %4692 = vmatpush1.bf16.msra.mxu0 0
        %4693 = vmatprep.subr.bf16.mxu0 0
        %4694 = vmatpush1.bf16.msra.mxu0 0
        %4695 = vmatprep.subr.bf16.mxu0 0
        %4696 = vmatpush1.bf16.msra.mxu0 0
        %4697 = vmatprep.subr.bf16.mxu0 0
        %4698 = vmatpush1.bf16.msra.mxu0 0
        %4699 = vmatprep.subr.bf16.mxu0 0
        %4700 = vmatpush1.bf16.msra.mxu0 0
        %4701 = vmatprep.subr.bf16.mxu0 0
        %4702 = vmatpush1.bf16.msra.mxu0 0
        %4703 = vmatprep.subr.bf16.mxu0 0
        %4704 = vmatpush1.bf16.msra.mxu0 0
        %4705 = vmatprep.subr.bf16.mxu0 0
        %4706 = vmatpush1.bf16.msra.mxu0 0
        %4707 = vmatprep.mubr.bf16.mxu0 0
        %4708 = vmatmul.mubr.bf16.gmra.mrb[0].mxu0 %v4595
        %v4709 = vpop.f32.mrb[0].mxu0
        %v4710 = vadd.f32 0.0, %v4709
        %v4711 = vpop.f32.mrb[0].mxu0
        %v4712 = vpop.f32.mrb[0].mxu0
        %v4713 = vadd.f32 0.0, %v4712
        %v4714 = vpop.f32.mrb[0].mxu0
        %4715 = vmatprep.mubr.bf16.mxu0 0
        %4716 = vmatmul.mubr.bf16.gmra.mrb[0].mxu0 %v4596
        %v4717 = vpop.f32.mrb[0].mxu0
        %v4718 = vadd.f32 0.0, %v4717
        %v4719 = vpop.f32.mrb[0].mxu0
        %v4720 = vpop.f32.mrb[0].mxu0
        %v4721 = vadd.f32 0.0, %v4720
        %v4722 = vpop.f32.mrb[0].mxu0
        %4723 = vmatprep.mubr.bf16.mxu0 0
        %4724 = vmatmul.mubr.bf16.gmra.mrb[0].mxu0 %v4597
        %v4725 = vpop.f32.mrb[0].mxu0
        %v4726 = vadd.f32 0.0, %v4725
        %v4727 = vpop.f32.mrb[0].mxu0
        %v4728 = vpop.f32.mrb[0].mxu0
        %v4729 = vadd.f32 0.0, %v4728
        %v4730 = vpop.f32.mrb[0].mxu0
        %4731 = vmatprep.mubr.bf16.mxu0 0
        %4732 = vmatmul.mubr.bf16.gmra.mrb[0].mxu0 %v4598
        %v4733 = vpop.f32.mrb[0].mxu0
        %v4734 = vadd.f32 0.0, %v4733
        %v4735 = vpop.f32.mrb[0].mxu0
        %v4736 = vpop.f32.mrb[0].mxu0
        %v4737 = vadd.f32 0.0, %v4736
        %v4738 = vpop.f32.mrb[0].mxu0
        %4739 = vmatprep.mubr.bf16.mxu0 0
        %4740 = vmatmul.mubr.bf16.gmra.mrb[0].mxu0 %v4599
        %v4741 = vpop.f32.mrb[0].mxu0
        %v4742 = vadd.f32 0.0, %v4741
        %v4743 = vpop.f32.mrb[0].mxu0
        %v4744 = vpop.f32.mrb[0].mxu0
        %v4745 = vadd.f32 0.0, %v4744
        %v4746 = vpop.f32.mrb[0].mxu0
        %4747 = vmatprep.mubr.bf16.mxu0 0
        %4748 = vmatmul.mubr.bf16.gmra.mrb[0].mxu0 %v4600
        %v4749 = vpop.f32.mrb[0].mxu0
        %v4750 = vadd.f32 0.0, %v4749
        %v4751 = vpop.f32.mrb[0].mxu0
        %v4752 = vpop.f32.mrb[0].mxu0
        %v4753 = vadd.f32 0.0, %v4752
        %v4754 = vpop.f32.mrb[0].mxu0
        %4755 = vmatprep.mubr.bf16.mxu0 0
        %4756 = vmatmul.mubr.bf16.gmra.mrb[0].mxu0 %v4601
        %v4757 = vpop.f32.mrb[0].mxu0
        %v4758 = vadd.f32 0.0, %v4757
        %v4759 = vpop.f32.mrb[0].mxu0
        %v4760 = vpop.f32.mrb[0].mxu0
        %v4761 = vadd.f32 0.0, %v4760
        %v4762 = vpop.f32.mrb[0].mxu0
        %4763 = vmatprep.mubr.bf16.mxu0 0
        %4764 = vmatmul.mubr.bf16.gmra.mrb[0].mxu0 %v4602
        %v4765 = vpop.f32.mrb[0].mxu0
        %v4766 = vadd.f32 0.0, %v4765
        %v4767 = vpop.f32.mrb[0].mxu0
        %v4768 = vpop.f32.mrb[0].mxu0
        %v4769 = vadd.f32 0.0, %v4768
        %v4770 = vpop.f32.mrb[0].mxu0
        %4771 = vmatprep.mubr.bf16.mxu0 0
        %4772 = vmatmul.mubr.bf16.gmra.mrb[0].mxu0 %v4603
        %v4773 = vpop.f32.mrb[0].mxu0
        %v4774 = vadd.f32 0.0, %v4773
        %v4775 = vpop.f32.mrb[0].mxu0
        %v4776 = vpop.f32.mrb[0].mxu0
        %v4777 = vadd.f32 0.0, %v4776
        %v4778 = vpop.f32.mrb[0].mxu0
        %4779 = vmatprep.mubr.bf16.mxu0 0
        %4780 = vmatmul.mubr.bf16.gmra.mrb[0].mxu0 %v4604
        %v4781 = vpop.f32.mrb[0].mxu0
        %v4782 = vadd.f32 0.0, %v4781
        %v4783 = vpop.f32.mrb[0].mxu0
        %v4784 = vpop.f32.mrb[0].mxu0
        %v4785 = vadd.f32 0.0, %v4784
        %v4786 = vpop.f32.mrb[0].mxu0
        %4787 = vmatprep.mubr.bf16.mxu0 0
        %4788 = vmatmul.mubr.bf16.gmra.mrb[0].mxu0 %v4605
        %v4789 = vpop.f32.mrb[0].mxu0
        %v4790 = vadd.f32 0.0, %v4789
        %v4791 = vpop.f32.mrb[0].mxu0
        %v4792 = vpop.f32.mrb[0].mxu0
        %v4793 = vadd.f32 0.0, %v4792
        %v4794 = vpop.f32.mrb[0].mxu0
        %4795 = vmatprep.mubr.bf16.mxu0 0
        %4796 = vmatmul.mubr.bf16.gmra.mrb[0].mxu0 %v4606
        %v4797 = vpop.f32.mrb[0].mxu0
        %v4798 = vadd.f32 0.0, %v4797
        %v4799 = vpop.f32.mrb[0].mxu0
        %v4800 = vpop.f32.mrb[0].mxu0
        %v4801 = vadd.f32 0.0, %v4800
        %v4802 = vpop.f32.mrb[0].mxu0
        %4803 = vmatprep.mubr.bf16.mxu0 0
        %4804 = vmatmul.mubr.bf16.gmra.mrb[0].mxu0 %v4607
        %v4805 = vpop.f32.mrb[0].mxu0
        %v4806 = vadd.f32 0.0, %v4805
        %v4807 = vpop.f32.mrb[0].mxu0
        %v4808 = vpop.f32.mrb[0].mxu0
        %v4809 = vadd.f32 0.0, %v4808
        %v4810 = vpop.f32.mrb[0].mxu0
        %4811 = vmatprep.mubr.bf16.mxu0 0
        %4812 = vmatmul.mubr.bf16.gmra.mrb[0].mxu0 %v4608
        %v4813 = vpop.f32.mrb[0].mxu0
        %v4814 = vadd.f32 0.0, %v4813
        %v4815 = vpop.f32.mrb[0].mxu0
        %v4816 = vpop.f32.mrb[0].mxu0
        %v4817 = vadd.f32 0.0, %v4816
        %v4818 = vpop.f32.mrb[0].mxu0
        %4819 = vmatprep.mubr.bf16.mxu0 0
        %4820 = vmatmul.mubr.bf16.gmra.mrb[0].mxu0 %v4609
        %v4821 = vpop.f32.mrb[0].mxu0
        %v4822 = vadd.f32 0.0, %v4821
        %v4823 = vpop.f32.mrb[0].mxu0
        %v4824 = vpop.f32.mrb[0].mxu0
        %v4825 = vadd.f32 0.0, %v4824
        %v4826 = vpop.f32.mrb[0].mxu0
        %4827 = vmatprep.mubr.bf16.mxu0 0
        %4828 = vmatmul.mubr.bf16.gmra.mrb[0].mxu0 %v4610
        %v4829 = vpop.f32.mrb[0].mxu0
        %v4830 = vadd.f32 0.0, %v4829
        %v4831 = vpop.f32.mrb[0].mxu0
        %v4832 = vpop.f32.mrb[0].mxu0
        %v4833 = vadd.f32 0.0, %v4832
        %v4834 = vpop.f32.mrb[0].mxu0
        %4835 = vdwg.mxu0
        %v4836 = vadd.f32 %v4449, %v4710
        %v4837 = vadd.f32 %v4450, %v4713
        %v4838 = vadd.f32 %v4451, %v4718
        %v4839 = vadd.f32 %v4452, %v4721
        %v4840 = vadd.f32 %v4453, %v4726
        %v4841 = vadd.f32 %v4454, %v4729
        %v4842 = vadd.f32 %v4455, %v4734
        %v4843 = vadd.f32 %v4456, %v4737
        %v4844 = vadd.f32 %v4457, %v4742
        %v4845 = vadd.f32 %v4458, %v4745
        %v4846 = vadd.f32 %v4459, %v4750
        %v4847 = vadd.f32 %v4460, %v4753
        %v4848 = vadd.f32 %v4461, %v4758
        %v4849 = vadd.f32 %v4462, %v4761
        %v4850 = vadd.f32 %v4463, %v4766
        %v4851 = vadd.f32 %v4464, %v4769
        %v4852 = vadd.f32 %v4465, %v4774
        %v4853 = vadd.f32 %v4466, %v4777
        %v4854 = vadd.f32 %v4467, %v4782
        %v4855 = vadd.f32 %v4468, %v4785
        %v4856 = vadd.f32 %v4469, %v4790
        %v4857 = vadd.f32 %v4470, %v4793
        %v4858 = vadd.f32 %v4471, %v4798
        %v4859 = vadd.f32 %v4472, %v4801
        %v4860 = vadd.f32 %v4473, %v4806
        %v4861 = vadd.f32 %v4474, %v4809
        %v4862 = vadd.f32 %v4475, %v4814
        %v4863 = vadd.f32 %v4476, %v4817
        %v4864 = vadd.f32 %v4477, %v4822
        %v4865 = vadd.f32 %v4478, %v4825
        %v4866 = vadd.f32 %v4479, %v4830
        %v4867 = vadd.f32 %v4480, %v4833
        %v4868 = vld [vmem:[%s4481] sm:$0xf]
        %v4869 = vld [vmem:[%s4481 + $0x4] sm:$0xf]
        %v4870 = vld [vmem:[%s4481 + $0x8] sm:$0x1]
        %v4871 = vld [vmem:[%s4481 + $0xc] sm:$0xf]
        %v4872 = vld [vmem:[%s4481 + $0x10] sm:$0xf]
        %v4873 = vld [vmem:[%s4481 + $0x14] sm:$0x1]
        %v4874 = vld [vmem:[%s4481 + $0x18] sm:$0xf]
        %v4875 = vld [vmem:[%s4481 + $0x1c] sm:$0xf]
        %v4876 = vld [vmem:[%s4481 + $0x20] sm:$0x1]
        %v4877 = vld [vmem:[%s4481 + $0x24] sm:$0xf]
        %v4878 = vld [vmem:[%s4481 + $0x28] sm:$0xf]
        %v4879 = vld [vmem:[%s4481 + $0x2c] sm:$0x1]
        %v4880 = vld [vmem:[%s4481 + $0x30] sm:$0xf]
        %v4881 = vld [vmem:[%s4481 + $0x34] sm:$0xf]
        %v4882 = vld [vmem:[%s4481 + $0x38] sm:$0x1]
        %v4883 = vld [vmem:[%s4481 + $0x3c] sm:$0xf]
        %v4884 = vld [vmem:[%s4481 + $0x40] sm:$0xf]
        %v4885 = vld [vmem:[%s4481 + $0x44] sm:$0x1]
        %v4886 = vld [vmem:[%s4481 + $0x48] sm:$0xf]
        %v4887 = vld [vmem:[%s4481 + $0x4c] sm:$0xf]
        %v4888 = vld [vmem:[%s4481 + $0x50] sm:$0x1]
        %v4889 = vld [vmem:[%s4481 + $0x54] sm:$0xf]
        %v4890 = vld [vmem:[%s4481 + $0x58] sm:$0xf]
        %v4891 = vld [vmem:[%s4481 + $0x5c] sm:$0x1]
        %v4892 = vld [vmem:[%s4481 + $0x60] sm:$0xf]
        %v4893 = vld [vmem:[%s4481 + $0x64] sm:$0xf]
        %v4894 = vld [vmem:[%s4481 + $0x68] sm:$0x1]
        %v4895 = vld [vmem:[%s4481 + $0x6c] sm:$0xf]
        %v4896 = vld [vmem:[%s4481 + $0x70] sm:$0xf]
        %v4897 = vld [vmem:[%s4481 + $0x74] sm:$0x1]
        %v4898 = vld [vmem:[%s4481 + $0x78] sm:$0xf]
        %v4899 = vld [vmem:[%s4481 + $0x7c] sm:$0xf]
        %v4900 = vld [vmem:[%s4481 + $0x80] sm:$0x1]
        %v4901 = vld [vmem:[%s4481 + $0x84] sm:$0xf]
        %v4902 = vld [vmem:[%s4481 + $0x88] sm:$0xf]
        %v4903 = vld [vmem:[%s4481 + $0x8c] sm:$0x1]
        %v4904 = vld [vmem:[%s4481 + $0x90] sm:$0xf]
        %v4905 = vld [vmem:[%s4481 + $0x94] sm:$0xf]
        %v4906 = vld [vmem:[%s4481 + $0x98] sm:$0x1]
        %v4907 = vld [vmem:[%s4481 + $0x9c] sm:$0xf]
        %v4908 = vld [vmem:[%s4481 + $0xa0] sm:$0xf]
        %v4909 = vld [vmem:[%s4481 + $0xa4] sm:$0x1]
        %v4910 = vld [vmem:[%s4481 + $0xa8] sm:$0xf]
        %v4911 = vld [vmem:[%s4481 + $0xac] sm:$0xf]
        %v4912 = vld [vmem:[%s4481 + $0xb0] sm:$0x1]
        %v4913 = vld [vmem:[%s4481 + $0xb4] sm:$0xf]
        %v4914 = vld [vmem:[%s4481 + $0xb8] sm:$0xf]
        %v4915 = vld [vmem:[%s4481 + $0xbc] sm:$0x1]
        %v4917 = vshrl.u32 %v4868, 16
        %v4919 = vrot.slane %v4917, 4
        %v4920 = vshll.u32 %v4868, 16
        %v4922 = vrot.slane %v4920, 5
        %v4923 = vor.u32 %v4919, %v4922
        %v4924 = vrot.slane %v4923, 4
        %v4926 = vshll.u32 %v4869, 16
        %v4928 = vrot.slane %v4926, 5
        %v4929 = vsel %vm1378, %v4924, %v4928
        %v4930 = vshrl.u32 %v4869, 16
        %v4932 = vrot.slane %v4930, 4
        %v4933 = vor.u32 %v4932, %v4928
        %v4934 = vrot.slane %v4933, 4
        %v4936 = vshll.u32 %v4870, 16
        %v4938 = vrot.slane %v4936, 5
        %v4939 = vsel %vm1378, %v4934, %v4938
        %v4941 = vshrl.u32 %v4871, 16
        %v4943 = vrot.slane %v4941, 4
        %v4944 = vshll.u32 %v4871, 16
        %v4946 = vrot.slane %v4944, 5
        %v4947 = vor.u32 %v4943, %v4946
        %v4948 = vrot.slane %v4947, 4
        %v4950 = vshll.u32 %v4872, 16
        %v4952 = vrot.slane %v4950, 5
        %v4953 = vsel %vm1378, %v4948, %v4952
        %v4954 = vshrl.u32 %v4872, 16
        %v4956 = vrot.slane %v4954, 4
        %v4957 = vor.u32 %v4956, %v4952
        %v4958 = vrot.slane %v4957, 4
        %v4960 = vshll.u32 %v4873, 16
        %v4962 = vrot.slane %v4960, 5
        %v4963 = vsel %vm1378, %v4958, %v4962
        %v4965 = vshrl.u32 %v4874, 16
        %v4967 = vrot.slane %v4965, 4
        %v4968 = vshll.u32 %v4874, 16
        %v4970 = vrot.slane %v4968, 5
        %v4971 = vor.u32 %v4967, %v4970
        %v4972 = vrot.slane %v4971, 4
        %v4974 = vshll.u32 %v4875, 16
        %v4976 = vrot.slane %v4974, 5
        %v4977 = vsel %vm1378, %v4972, %v4976
        %v4978 = vshrl.u32 %v4875, 16
        %v4980 = vrot.slane %v4978, 4
        %v4981 = vor.u32 %v4980, %v4976
        %v4982 = vrot.slane %v4981, 4
        %v4984 = vshll.u32 %v4876, 16
        %v4986 = vrot.slane %v4984, 5
        %v4987 = vsel %vm1378, %v4982, %v4986
        %v4989 = vshrl.u32 %v4877, 16
        %v4991 = vrot.slane %v4989, 4
        %v4992 = vshll.u32 %v4877, 16
        %v4994 = vrot.slane %v4992, 5
        %v4995 = vor.u32 %v4991, %v4994
        %v4996 = vrot.slane %v4995, 4
        %v4998 = vshll.u32 %v4878, 16
        %v5000 = vrot.slane %v4998, 5
        %v5001 = vsel %vm1378, %v4996, %v5000
        %v5002 = vshrl.u32 %v4878, 16
        %v5004 = vrot.slane %v5002, 4
        %v5005 = vor.u32 %v5004, %v5000
        %v5006 = vrot.slane %v5005, 4
        %v5008 = vshll.u32 %v4879, 16
        %v5010 = vrot.slane %v5008, 5
        %v5011 = vsel %vm1378, %v5006, %v5010
        %v5013 = vshrl.u32 %v4880, 16
        %v5015 = vrot.slane %v5013, 4
        %v5016 = vshll.u32 %v4880, 16
        %v5018 = vrot.slane %v5016, 5
        %v5019 = vor.u32 %v5015, %v5018
        %v5020 = vrot.slane %v5019, 4
        %v5022 = vshll.u32 %v4881, 16
        %v5024 = vrot.slane %v5022, 5
        %v5025 = vsel %vm1378, %v5020, %v5024
        %v5026 = vshrl.u32 %v4881, 16
        %v5028 = vrot.slane %v5026, 4
        %v5029 = vor.u32 %v5028, %v5024
        %v5030 = vrot.slane %v5029, 4
        %v5032 = vshll.u32 %v4882, 16
        %v5034 = vrot.slane %v5032, 5
        %v5035 = vsel %vm1378, %v5030, %v5034
        %v5037 = vshrl.u32 %v4883, 16
        %v5039 = vrot.slane %v5037, 4
        %v5040 = vshll.u32 %v4883, 16
        %v5042 = vrot.slane %v5040, 5
        %v5043 = vor.u32 %v5039, %v5042
        %v5044 = vrot.slane %v5043, 4
        %v5046 = vshll.u32 %v4884, 16
        %v5048 = vrot.slane %v5046, 5
        %v5049 = vsel %vm1378, %v5044, %v5048
        %v5050 = vshrl.u32 %v4884, 16
        %v5052 = vrot.slane %v5050, 4
        %v5053 = vor.u32 %v5052, %v5048
        %v5054 = vrot.slane %v5053, 4
        %v5056 = vshll.u32 %v4885, 16
        %v5058 = vrot.slane %v5056, 5
        %v5059 = vsel %vm1378, %v5054, %v5058
        %v5061 = vshrl.u32 %v4886, 16
        %v5063 = vrot.slane %v5061, 4
        %v5064 = vshll.u32 %v4886, 16
        %v5066 = vrot.slane %v5064, 5
        %v5067 = vor.u32 %v5063, %v5066
        %v5068 = vrot.slane %v5067, 4
        %v5070 = vshll.u32 %v4887, 16
        %v5072 = vrot.slane %v5070, 5
        %v5073 = vsel %vm1378, %v5068, %v5072
        %v5074 = vshrl.u32 %v4887, 16
        %v5076 = vrot.slane %v5074, 4
        %v5077 = vor.u32 %v5076, %v5072
        %v5078 = vrot.slane %v5077, 4
        %v5080 = vshll.u32 %v4888, 16
        %v5082 = vrot.slane %v5080, 5
        %v5083 = vsel %vm1378, %v5078, %v5082
        %v5085 = vshrl.u32 %v4889, 16
        %v5087 = vrot.slane %v5085, 4
        %v5088 = vshll.u32 %v4889, 16
        %v5090 = vrot.slane %v5088, 5
        %v5091 = vor.u32 %v5087, %v5090
        %v5092 = vrot.slane %v5091, 4
        %v5094 = vshll.u32 %v4890, 16
        %v5096 = vrot.slane %v5094, 5
        %v5097 = vsel %vm1378, %v5092, %v5096
        %v5098 = vshrl.u32 %v4890, 16
        %v5100 = vrot.slane %v5098, 4
        %v5101 = vor.u32 %v5100, %v5096
        %v5102 = vrot.slane %v5101, 4
        %v5104 = vshll.u32 %v4891, 16
        %v5106 = vrot.slane %v5104, 5
        %v5107 = vsel %vm1378, %v5102, %v5106
        %v5109 = vshrl.u32 %v4892, 16
        %v5111 = vrot.slane %v5109, 4
        %v5112 = vshll.u32 %v4892, 16
        %v5114 = vrot.slane %v5112, 5
        %v5115 = vor.u32 %v5111, %v5114
        %v5116 = vrot.slane %v5115, 4
        %v5118 = vshll.u32 %v4893, 16
        %v5120 = vrot.slane %v5118, 5
        %v5121 = vsel %vm1378, %v5116, %v5120
        %v5122 = vshrl.u32 %v4893, 16
        %v5124 = vrot.slane %v5122, 4
        %v5125 = vor.u32 %v5124, %v5120
        %v5126 = vrot.slane %v5125, 4
        %v5128 = vshll.u32 %v4894, 16
        %v5130 = vrot.slane %v5128, 5
        %v5131 = vsel %vm1378, %v5126, %v5130
        %v5133 = vshrl.u32 %v4895, 16
        %v5135 = vrot.slane %v5133, 4
        %v5136 = vshll.u32 %v4895, 16
        %v5138 = vrot.slane %v5136, 5
        %v5139 = vor.u32 %v5135, %v5138
        %v5140 = vrot.slane %v5139, 4
        %v5142 = vshll.u32 %v4896, 16
        %v5144 = vrot.slane %v5142, 5
        %v5145 = vsel %vm1378, %v5140, %v5144
        %v5146 = vshrl.u32 %v4896, 16
        %v5148 = vrot.slane %v5146, 4
        %v5149 = vor.u32 %v5148, %v5144
        %v5150 = vrot.slane %v5149, 4
        %v5152 = vshll.u32 %v4897, 16
        %v5154 = vrot.slane %v5152, 5
        %v5155 = vsel %vm1378, %v5150, %v5154
        %v5157 = vshrl.u32 %v4898, 16
        %v5159 = vrot.slane %v5157, 4
        %v5160 = vshll.u32 %v4898, 16
        %v5162 = vrot.slane %v5160, 5
        %v5163 = vor.u32 %v5159, %v5162
        %v5164 = vrot.slane %v5163, 4
        %v5166 = vshll.u32 %v4899, 16
        %v5168 = vrot.slane %v5166, 5
        %v5169 = vsel %vm1378, %v5164, %v5168
        %v5170 = vshrl.u32 %v4899, 16
        %v5172 = vrot.slane %v5170, 4
        %v5173 = vor.u32 %v5172, %v5168
        %v5174 = vrot.slane %v5173, 4
        %v5176 = vshll.u32 %v4900, 16
        %v5178 = vrot.slane %v5176, 5
        %v5179 = vsel %vm1378, %v5174, %v5178
        %v5181 = vshrl.u32 %v4901, 16
        %v5183 = vrot.slane %v5181, 4
        %v5184 = vshll.u32 %v4901, 16
        %v5186 = vrot.slane %v5184, 5
        %v5187 = vor.u32 %v5183, %v5186
        %v5188 = vrot.slane %v5187, 4
        %v5190 = vshll.u32 %v4902, 16
        %v5192 = vrot.slane %v5190, 5
        %v5193 = vsel %vm1378, %v5188, %v5192
        %v5194 = vshrl.u32 %v4902, 16
        %v5196 = vrot.slane %v5194, 4
        %v5197 = vor.u32 %v5196, %v5192
        %v5198 = vrot.slane %v5197, 4
        %v5200 = vshll.u32 %v4903, 16
        %v5202 = vrot.slane %v5200, 5
        %v5203 = vsel %vm1378, %v5198, %v5202
        %v5205 = vshrl.u32 %v4904, 16
        %v5207 = vrot.slane %v5205, 4
        %v5208 = vshll.u32 %v4904, 16
        %v5210 = vrot.slane %v5208, 5
        %v5211 = vor.u32 %v5207, %v5210
        %v5212 = vrot.slane %v5211, 4
        %v5214 = vshll.u32 %v4905, 16
        %v5216 = vrot.slane %v5214, 5
        %v5217 = vsel %vm1378, %v5212, %v5216
        %v5218 = vshrl.u32 %v4905, 16
        %v5220 = vrot.slane %v5218, 4
        %v5221 = vor.u32 %v5220, %v5216
        %v5222 = vrot.slane %v5221, 4
        %v5224 = vshll.u32 %v4906, 16
        %v5226 = vrot.slane %v5224, 5
        %v5227 = vsel %vm1378, %v5222, %v5226
        %v5229 = vshrl.u32 %v4907, 16
        %v5231 = vrot.slane %v5229, 4
        %v5232 = vshll.u32 %v4907, 16
        %v5234 = vrot.slane %v5232, 5
        %v5235 = vor.u32 %v5231, %v5234
        %v5236 = vrot.slane %v5235, 4
        %v5238 = vshll.u32 %v4908, 16
        %v5240 = vrot.slane %v5238, 5
        %v5241 = vsel %vm1378, %v5236, %v5240
        %v5242 = vshrl.u32 %v4908, 16
        %v5244 = vrot.slane %v5242, 4
        %v5245 = vor.u32 %v5244, %v5240
        %v5246 = vrot.slane %v5245, 4
        %v5248 = vshll.u32 %v4909, 16
        %v5250 = vrot.slane %v5248, 5
        %v5251 = vsel %vm1378, %v5246, %v5250
        %v5253 = vshrl.u32 %v4910, 16
        %v5255 = vrot.slane %v5253, 4
        %v5256 = vshll.u32 %v4910, 16
        %v5258 = vrot.slane %v5256, 5
        %v5259 = vor.u32 %v5255, %v5258
        %v5260 = vrot.slane %v5259, 4
        %v5262 = vshll.u32 %v4911, 16
        %v5264 = vrot.slane %v5262, 5
        %v5265 = vsel %vm1378, %v5260, %v5264
        %v5266 = vshrl.u32 %v4911, 16
        %v5268 = vrot.slane %v5266, 4
        %v5269 = vor.u32 %v5268, %v5264
        %v5270 = vrot.slane %v5269, 4
        %v5272 = vshll.u32 %v4912, 16
        %v5274 = vrot.slane %v5272, 5
        %v5275 = vsel %vm1378, %v5270, %v5274
        %v5277 = vshrl.u32 %v4913, 16
        %v5279 = vrot.slane %v5277, 4
        %v5280 = vshll.u32 %v4913, 16
        %v5282 = vrot.slane %v5280, 5
        %v5283 = vor.u32 %v5279, %v5282
        %v5284 = vrot.slane %v5283, 4
        %v5286 = vshll.u32 %v4914, 16
        %v5288 = vrot.slane %v5286, 5
        %v5289 = vsel %vm1378, %v5284, %v5288
        %v5290 = vshrl.u32 %v4914, 16
        %v5292 = vrot.slane %v5290, 4
        %v5293 = vor.u32 %v5292, %v5288
        %v5294 = vrot.slane %v5293, 4
        %v5296 = vshll.u32 %v4915, 16
        %v5298 = vrot.slane %v5296, 5
        %v5299 = vsel %vm1378, %v5294, %v5298
        %s5300 = scalar_lea.vmem [#allocation8], 448
        %v5301 = vld [vmem:[%s5300] sm:$0xf]
        %v5302 = vld [vmem:[%s5300 + $0x4] sm:$0xf]
        %v5303 = vld [vmem:[%s5300 + $0x8] sm:$0xf]
        %v5304 = vld [vmem:[%s5300 + $0xc] sm:$0xf]
        %v5305 = vld [vmem:[%s5300 + $0x10] sm:$0xf]
        %v5306 = vld [vmem:[%s5300 + $0x14] sm:$0xf]
        %v5307 = vld [vmem:[%s5300 + $0x18] sm:$0xf]
        %v5308 = vld [vmem:[%s5300 + $0x1c] sm:$0xf]
        %v5309 = vld [vmem:[%s5300 + $0x20] sm:$0xf]
        %v5310 = vld [vmem:[%s5300 + $0x24] sm:$0xf]
        %v5311 = vld [vmem:[%s5300 + $0x28] sm:$0xf]
        %v5312 = vld [vmem:[%s5300 + $0x2c] sm:$0xf]
        %v5313 = vld [vmem:[%s5300 + $0x30] sm:$0xf]
        %v5314 = vld [vmem:[%s5300 + $0x34] sm:$0xf]
        %v5315 = vld [vmem:[%s5300 + $0x38] sm:$0xf]
        %v5316 = vld [vmem:[%s5300 + $0x3c] sm:$0xf]
        %v5317 = vunpack.c.l.b16 %v4929
        %v5318 = vunpack.c.l.b16 %v4939
        %v5319 = vunpack.c.l.b16 %v4953
        %v5320 = vunpack.c.l.b16 %v4963
        %v5321 = vunpack.c.l.b16 %v4977
        %v5322 = vunpack.c.l.b16 %v4987
        %v5323 = vunpack.c.l.b16 %v5001
        %v5324 = vunpack.c.l.b16 %v5011
        %v5325 = vunpack.c.l.b16 %v5025
        %v5326 = vunpack.c.l.b16 %v5035
        %v5327 = vunpack.c.l.b16 %v5049
        %v5328 = vunpack.c.l.b16 %v5059
        %v5329 = vunpack.c.l.b16 %v5073
        %v5330 = vunpack.c.l.b16 %v5083
        %v5331 = vunpack.c.l.b16 %v5097
        %v5332 = vunpack.c.l.b16 %v5107
        %v5333 = vunpack.c.l.b16 %v5121
        %v5334 = vunpack.c.l.b16 %v5131
        %v5335 = vunpack.c.l.b16 %v5145
        %v5336 = vunpack.c.l.b16 %v5155
        %v5337 = vunpack.c.l.b16 %v5169
        %v5338 = vunpack.c.l.b16 %v5179
        %v5339 = vunpack.c.l.b16 %v5193
        %v5340 = vunpack.c.l.b16 %v5203
        %v5341 = vunpack.c.l.b16 %v5217
        %v5342 = vunpack.c.l.b16 %v5227
        %v5343 = vunpack.c.l.b16 %v5241
        %v5344 = vunpack.c.l.b16 %v5251
        %v5345 = vunpack.c.l.b16 %v5265
        %v5346 = vunpack.c.l.b16 %v5275
        %v5347 = vunpack.c.l.b16 %v5289
        %v5348 = vunpack.c.l.b16 %v5299
        %v5349 = vpack.c.b16 %v5318, %v5317
        %v5350 = vpack.c.b16 %v5320, %v5319
        %v5351 = vpack.c.b16 %v5322, %v5321
        %v5352 = vpack.c.b16 %v5324, %v5323
        %v5353 = vpack.c.b16 %v5326, %v5325
        %v5354 = vpack.c.b16 %v5328, %v5327
        %v5355 = vpack.c.b16 %v5330, %v5329
        %v5356 = vpack.c.b16 %v5332, %v5331
        %v5357 = vpack.c.b16 %v5334, %v5333
        %v5358 = vpack.c.b16 %v5336, %v5335
        %v5359 = vpack.c.b16 %v5338, %v5337
        %v5360 = vpack.c.b16 %v5340, %v5339
        %v5361 = vpack.c.b16 %v5342, %v5341
        %v5362 = vpack.c.b16 %v5344, %v5343
        %v5363 = vpack.c.b16 %v5346, %v5345
        %v5364 = vpack.c.b16 %v5348, %v5347
        %v5397 = vunpack.c.l.b16 %v5301
        %v5398 = vunpack.c.l.b16 %v5302
        %v5399 = vunpack.c.l.b16 %v5303
        %v5400 = vunpack.c.l.b16 %v5304
        %v5401 = vunpack.c.l.b16 %v5305
        %v5402 = vunpack.c.l.b16 %v5306
        %v5403 = vunpack.c.l.b16 %v5307
        %v5404 = vunpack.c.l.b16 %v5308
        %v5405 = vunpack.c.l.b16 %v5309
        %v5406 = vunpack.c.l.b16 %v5310
        %v5407 = vunpack.c.l.b16 %v5311
        %v5408 = vunpack.c.l.b16 %v5312
        %v5409 = vunpack.c.l.b16 %v5313
        %v5410 = vunpack.c.l.b16 %v5314
        %v5411 = vunpack.c.l.b16 %v5315
        %v5412 = vunpack.c.l.b16 %v5316
        %v5413 = vpack.c.b16 %v5398, %v5397
        %v5414 = vpack.c.b16 %v5400, %v5399
        %v5415 = vpack.c.b16 %v5402, %v5401
        %v5416 = vpack.c.b16 %v5404, %v5403
        %v5417 = vpack.c.b16 %v5406, %v5405
        %v5418 = vpack.c.b16 %v5408, %v5407
        %v5419 = vpack.c.b16 %v5410, %v5409
        %v5420 = vpack.c.b16 %v5412, %v5411
        %5429 = vmatprep.subr.bf16.mxu0 0
        %5430 = vmatpush1.bf16.msra.mxu0 %v5413
        %5431 = vmatprep.subr.bf16.mxu0 0
        %5432 = vmatpush1.bf16.msra.mxu0 %v5414
        %5433 = vmatprep.subr.bf16.mxu0 0
        %5434 = vmatpush1.bf16.msra.mxu0 %v5415
        %5435 = vmatprep.subr.bf16.mxu0 0
        %5436 = vmatpush1.bf16.msra.mxu0 %v5416
        %5437 = vmatprep.subr.bf16.mxu0 0
        %5438 = vmatpush1.bf16.msra.mxu0 %v5417
        %5439 = vmatprep.subr.bf16.mxu0 0
        %5440 = vmatpush1.bf16.msra.mxu0 %v5418
        %5441 = vmatprep.subr.bf16.mxu0 0
        %5442 = vmatpush1.bf16.msra.mxu0 %v5419
        %5443 = vmatprep.subr.bf16.mxu0 0
        %5444 = vmatpush1.bf16.msra.mxu0 %v5420
        %5445 = vmatprep.subr.bf16.mxu0 0
        %5446 = vmatpush1.bf16.msra.mxu0 0
        %5447 = vmatprep.subr.bf16.mxu0 0
        %5448 = vmatpush1.bf16.msra.mxu0 0
        %5449 = vmatprep.subr.bf16.mxu0 0
        %5450 = vmatpush1.bf16.msra.mxu0 0
        %5451 = vmatprep.subr.bf16.mxu0 0
        %5452 = vmatpush1.bf16.msra.mxu0 0
        %5453 = vmatprep.subr.bf16.mxu0 0
        %5454 = vmatpush1.bf16.msra.mxu0 0
        %5455 = vmatprep.subr.bf16.mxu0 0
        %5456 = vmatpush1.bf16.msra.mxu0 0
        %5457 = vmatprep.subr.bf16.mxu0 0
        %5458 = vmatpush1.bf16.msra.mxu0 0
        %5459 = vmatprep.subr.bf16.mxu0 0
        %5460 = vmatpush1.bf16.msra.mxu0 0
        %5461 = vmatprep.mubr.bf16.mxu0 0
        %5462 = vmatmul.mubr.bf16.gmra.mrb[0].mxu0 %v5349
        %v5463 = vpop.f32.mrb[0].mxu0
        %v5464 = vadd.f32 0.0, %v5463
        %v5465 = vpop.f32.mrb[0].mxu0
        %v5466 = vpop.f32.mrb[0].mxu0
        %v5467 = vadd.f32 0.0, %v5466
        %v5468 = vpop.f32.mrb[0].mxu0
        %5469 = vmatprep.mubr.bf16.mxu0 0
        %5470 = vmatmul.mubr.bf16.gmra.mrb[0].mxu0 %v5350
        %v5471 = vpop.f32.mrb[0].mxu0
        %v5472 = vadd.f32 0.0, %v5471
        %v5473 = vpop.f32.mrb[0].mxu0
        %v5474 = vpop.f32.mrb[0].mxu0
        %v5475 = vadd.f32 0.0, %v5474
        %v5476 = vpop.f32.mrb[0].mxu0
        %5477 = vmatprep.mubr.bf16.mxu0 0
        %5478 = vmatmul.mubr.bf16.gmra.mrb[0].mxu0 %v5351
        %v5479 = vpop.f32.mrb[0].mxu0
        %v5480 = vadd.f32 0.0, %v5479
        %v5481 = vpop.f32.mrb[0].mxu0
        %v5482 = vpop.f32.mrb[0].mxu0
        %v5483 = vadd.f32 0.0, %v5482
        %v5484 = vpop.f32.mrb[0].mxu0
        %5485 = vmatprep.mubr.bf16.mxu0 0
        %5486 = vmatmul.mubr.bf16.gmra.mrb[0].mxu0 %v5352
        %v5487 = vpop.f32.mrb[0].mxu0
        %v5488 = vadd.f32 0.0, %v5487
        %v5489 = vpop.f32.mrb[0].mxu0
        %v5490 = vpop.f32.mrb[0].mxu0
        %v5491 = vadd.f32 0.0, %v5490
        %v5492 = vpop.f32.mrb[0].mxu0
        %5493 = vmatprep.mubr.bf16.mxu0 0
        %5494 = vmatmul.mubr.bf16.gmra.mrb[0].mxu0 %v5353
        %v5495 = vpop.f32.mrb[0].mxu0
        %v5496 = vadd.f32 0.0, %v5495
        %v5497 = vpop.f32.mrb[0].mxu0
        %v5498 = vpop.f32.mrb[0].mxu0
        %v5499 = vadd.f32 0.0, %v5498
        %v5500 = vpop.f32.mrb[0].mxu0
        %5501 = vmatprep.mubr.bf16.mxu0 0
        %5502 = vmatmul.mubr.bf16.gmra.mrb[0].mxu0 %v5354
        %v5503 = vpop.f32.mrb[0].mxu0
        %v5504 = vadd.f32 0.0, %v5503
        %v5505 = vpop.f32.mrb[0].mxu0
        %v5506 = vpop.f32.mrb[0].mxu0
        %v5507 = vadd.f32 0.0, %v5506
        %v5508 = vpop.f32.mrb[0].mxu0
        %5509 = vmatprep.mubr.bf16.mxu0 0
        %5510 = vmatmul.mubr.bf16.gmra.mrb[0].mxu0 %v5355
        %v5511 = vpop.f32.mrb[0].mxu0
        %v5512 = vadd.f32 0.0, %v5511
        %v5513 = vpop.f32.mrb[0].mxu0
        %v5514 = vpop.f32.mrb[0].mxu0
        %v5515 = vadd.f32 0.0, %v5514
        %v5516 = vpop.f32.mrb[0].mxu0
        %5517 = vmatprep.mubr.bf16.mxu0 0
        %5518 = vmatmul.mubr.bf16.gmra.mrb[0].mxu0 %v5356
        %v5519 = vpop.f32.mrb[0].mxu0
        %v5520 = vadd.f32 0.0, %v5519
        %v5521 = vpop.f32.mrb[0].mxu0
        %v5522 = vpop.f32.mrb[0].mxu0
        %v5523 = vadd.f32 0.0, %v5522
        %v5524 = vpop.f32.mrb[0].mxu0
        %5525 = vmatprep.mubr.bf16.mxu0 0
        %5526 = vmatmul.mubr.bf16.gmra.mrb[0].mxu0 %v5357
        %v5527 = vpop.f32.mrb[0].mxu0
        %v5528 = vadd.f32 0.0, %v5527
        %v5529 = vpop.f32.mrb[0].mxu0
        %v5530 = vpop.f32.mrb[0].mxu0
        %v5531 = vadd.f32 0.0, %v5530
        %v5532 = vpop.f32.mrb[0].mxu0
        %5533 = vmatprep.mubr.bf16.mxu0 0
        %5534 = vmatmul.mubr.bf16.gmra.mrb[0].mxu0 %v5358
        %v5535 = vpop.f32.mrb[0].mxu0
        %v5536 = vadd.f32 0.0, %v5535
        %v5537 = vpop.f32.mrb[0].mxu0
        %v5538 = vpop.f32.mrb[0].mxu0
        %v5539 = vadd.f32 0.0, %v5538
        %v5540 = vpop.f32.mrb[0].mxu0
        %5541 = vmatprep.mubr.bf16.mxu0 0
        %5542 = vmatmul.mubr.bf16.gmra.mrb[0].mxu0 %v5359
        %v5543 = vpop.f32.mrb[0].mxu0
        %v5544 = vadd.f32 0.0, %v5543
        %v5545 = vpop.f32.mrb[0].mxu0
        %v5546 = vpop.f32.mrb[0].mxu0
        %v5547 = vadd.f32 0.0, %v5546
        %v5548 = vpop.f32.mrb[0].mxu0
        %5549 = vmatprep.mubr.bf16.mxu0 0
        %5550 = vmatmul.mubr.bf16.gmra.mrb[0].mxu0 %v5360
        %v5551 = vpop.f32.mrb[0].mxu0
        %v5552 = vadd.f32 0.0, %v5551
        %v5553 = vpop.f32.mrb[0].mxu0
        %v5554 = vpop.f32.mrb[0].mxu0
        %v5555 = vadd.f32 0.0, %v5554
        %v5556 = vpop.f32.mrb[0].mxu0
        %5557 = vmatprep.mubr.bf16.mxu0 0
        %5558 = vmatmul.mubr.bf16.gmra.mrb[0].mxu0 %v5361
        %v5559 = vpop.f32.mrb[0].mxu0
        %v5560 = vadd.f32 0.0, %v5559
        %v5561 = vpop.f32.mrb[0].mxu0
        %v5562 = vpop.f32.mrb[0].mxu0
        %v5563 = vadd.f32 0.0, %v5562
        %v5564 = vpop.f32.mrb[0].mxu0
        %5565 = vmatprep.mubr.bf16.mxu0 0
        %5566 = vmatmul.mubr.bf16.gmra.mrb[0].mxu0 %v5362
        %v5567 = vpop.f32.mrb[0].mxu0
        %v5568 = vadd.f32 0.0, %v5567
        %v5569 = vpop.f32.mrb[0].mxu0
        %v5570 = vpop.f32.mrb[0].mxu0
        %v5571 = vadd.f32 0.0, %v5570
        %v5572 = vpop.f32.mrb[0].mxu0
        %5573 = vmatprep.mubr.bf16.mxu0 0
        %5574 = vmatmul.mubr.bf16.gmra.mrb[0].mxu0 %v5363
        %v5575 = vpop.f32.mrb[0].mxu0
        %v5576 = vadd.f32 0.0, %v5575
        %v5577 = vpop.f32.mrb[0].mxu0
        %v5578 = vpop.f32.mrb[0].mxu0
        %v5579 = vadd.f32 0.0, %v5578
        %v5580 = vpop.f32.mrb[0].mxu0
        %5581 = vmatprep.mubr.bf16.mxu0 0
        %5582 = vmatmul.mubr.bf16.gmra.mrb[0].mxu0 %v5364
        %v5583 = vpop.f32.mrb[0].mxu0
        %v5584 = vadd.f32 0.0, %v5583
        %v5585 = vpop.f32.mrb[0].mxu0
        %v5586 = vpop.f32.mrb[0].mxu0
        %v5587 = vadd.f32 0.0, %v5586
        %v5588 = vpop.f32.mrb[0].mxu0
        %5589 = vdwg.mxu0
        %v5590 = vadd.f32 %v4836, %v5464
        %v5591 = vadd.f32 %v4837, %v5467
        %v5592 = vadd.f32 %v4838, %v5472
        %v5593 = vadd.f32 %v4839, %v5475
        %v5594 = vadd.f32 %v4840, %v5480
        %v5595 = vadd.f32 %v4841, %v5483
        %v5596 = vadd.f32 %v4842, %v5488
        %v5597 = vadd.f32 %v4843, %v5491
        %v5598 = vadd.f32 %v4844, %v5496
        %v5599 = vadd.f32 %v4845, %v5499
        %v5600 = vadd.f32 %v4846, %v5504
        %v5601 = vadd.f32 %v4847, %v5507
        %v5602 = vadd.f32 %v4848, %v5512
        %v5603 = vadd.f32 %v4849, %v5515
        %v5604 = vadd.f32 %v4850, %v5520
        %v5605 = vadd.f32 %v4851, %v5523
        %v5606 = vadd.f32 %v4852, %v5528
        %v5607 = vadd.f32 %v4853, %v5531
        %v5608 = vadd.f32 %v4854, %v5536
        %v5609 = vadd.f32 %v4855, %v5539
        %v5610 = vadd.f32 %v4856, %v5544
        %v5611 = vadd.f32 %v4857, %v5547
        %v5612 = vadd.f32 %v4858, %v5552
        %v5613 = vadd.f32 %v4859, %v5555
        %v5614 = vadd.f32 %v4860, %v5560
        %v5615 = vadd.f32 %v4861, %v5563
        %v5616 = vadd.f32 %v4862, %v5568
        %v5617 = vadd.f32 %v4863, %v5571
        %v5618 = vadd.f32 %v4864, %v5576
        %v5619 = vadd.f32 %v4865, %v5579
        %v5620 = vadd.f32 %v4866, %v5584
        %v5621 = vadd.f32 %v4867, %v5587
        %v5622 = vld [vmem:[%s4481] sm:$0xe]
        %v5623 = vld [vmem:[%s4481 + $0xc] sm:$0xe]
        %v5624 = vld [vmem:[%s4481 + $0x18] sm:$0xe]
        %v5625 = vld [vmem:[%s4481 + $0x24] sm:$0xe]
        %v5626 = vld [vmem:[%s4481 + $0x30] sm:$0xe]
        %v5627 = vld [vmem:[%s4481 + $0x3c] sm:$0xe]
        %v5628 = vld [vmem:[%s4481 + $0x48] sm:$0xe]
        %v5629 = vld [vmem:[%s4481 + $0x54] sm:$0xe]
        %v5630 = vld [vmem:[%s4481 + $0x60] sm:$0xe]
        %v5631 = vld [vmem:[%s4481 + $0x6c] sm:$0xe]
        %v5632 = vld [vmem:[%s4481 + $0x78] sm:$0xe]
        %v5633 = vld [vmem:[%s4481 + $0x84] sm:$0xe]
        %v5634 = vld [vmem:[%s4481 + $0x90] sm:$0xe]
        %v5635 = vld [vmem:[%s4481 + $0x9c] sm:$0xe]
        %v5636 = vld [vmem:[%s4481 + $0xa8] sm:$0xe]
        %v5637 = vld [vmem:[%s4481 + $0xb4] sm:$0xe]
        %v5686 = vrot.slane %v5622, 5
        %v5687 = vrot.slane %v5686, 4
        %v5688 = vrot.slane %v4869, 5
        %v5689 = vsel %vm2408, %v5687, %v5688
        %v5690 = vrot.slane %v5688, 4
        %v5691 = vrot.slane %v4870, 5
        %v5692 = vsel %vm2408, %v5690, %v5691
        %v5693 = vrot.slane %v5623, 5
        %v5694 = vrot.slane %v5693, 4
        %v5695 = vrot.slane %v4872, 5
        %v5696 = vsel %vm2408, %v5694, %v5695
        %v5697 = vrot.slane %v5695, 4
        %v5698 = vrot.slane %v4873, 5
        %v5699 = vsel %vm2408, %v5697, %v5698
        %v5700 = vrot.slane %v5624, 5
        %v5701 = vrot.slane %v5700, 4
        %v5702 = vrot.slane %v4875, 5
        %v5703 = vsel %vm2408, %v5701, %v5702
        %v5704 = vrot.slane %v5702, 4
        %v5705 = vrot.slane %v4876, 5
        %v5706 = vsel %vm2408, %v5704, %v5705
        %v5707 = vrot.slane %v5625, 5
        %v5708 = vrot.slane %v5707, 4
        %v5709 = vrot.slane %v4878, 5
        %v5710 = vsel %vm2408, %v5708, %v5709
        %v5711 = vrot.slane %v5709, 4
        %v5712 = vrot.slane %v4879, 5
        %v5713 = vsel %vm2408, %v5711, %v5712
        %v5714 = vrot.slane %v5626, 5
        %v5715 = vrot.slane %v5714, 4
        %v5716 = vrot.slane %v4881, 5
        %v5717 = vsel %vm2408, %v5715, %v5716
        %v5718 = vrot.slane %v5716, 4
        %v5719 = vrot.slane %v4882, 5
        %v5720 = vsel %vm2408, %v5718, %v5719
        %v5721 = vrot.slane %v5627, 5
        %v5722 = vrot.slane %v5721, 4
        %v5723 = vrot.slane %v4884, 5
        %v5724 = vsel %vm2408, %v5722, %v5723
        %v5725 = vrot.slane %v5723, 4
        %v5726 = vrot.slane %v4885, 5
        %v5727 = vsel %vm2408, %v5725, %v5726
        %v5728 = vrot.slane %v5628, 5
        %v5729 = vrot.slane %v5728, 4
        %v5730 = vrot.slane %v4887, 5
        %v5731 = vsel %vm2408, %v5729, %v5730
        %v5732 = vrot.slane %v5730, 4
        %v5733 = vrot.slane %v4888, 5
        %v5734 = vsel %vm2408, %v5732, %v5733
        %v5735 = vrot.slane %v5629, 5
        %v5736 = vrot.slane %v5735, 4
        %v5737 = vrot.slane %v4890, 5
        %v5738 = vsel %vm2408, %v5736, %v5737
        %v5739 = vrot.slane %v5737, 4
        %v5740 = vrot.slane %v4891, 5
        %v5741 = vsel %vm2408, %v5739, %v5740
        %v5742 = vrot.slane %v5630, 5
        %v5743 = vrot.slane %v5742, 4
        %v5744 = vrot.slane %v4893, 5
        %v5745 = vsel %vm2408, %v5743, %v5744
        %v5746 = vrot.slane %v5744, 4
        %v5747 = vrot.slane %v4894, 5
        %v5748 = vsel %vm2408, %v5746, %v5747
        %v5749 = vrot.slane %v5631, 5
        %v5750 = vrot.slane %v5749, 4
        %v5751 = vrot.slane %v4896, 5
        %v5752 = vsel %vm2408, %v5750, %v5751
        %v5753 = vrot.slane %v5751, 4
        %v5754 = vrot.slane %v4897, 5
        %v5755 = vsel %vm2408, %v5753, %v5754
        %v5756 = vrot.slane %v5632, 5
        %v5757 = vrot.slane %v5756, 4
        %v5758 = vrot.slane %v4899, 5
        %v5759 = vsel %vm2408, %v5757, %v5758
        %v5760 = vrot.slane %v5758, 4
        %v5761 = vrot.slane %v4900, 5
        %v5762 = vsel %vm2408, %v5760, %v5761
        %v5763 = vrot.slane %v5633, 5
        %v5764 = vrot.slane %v5763, 4
        %v5765 = vrot.slane %v4902, 5
        %v5766 = vsel %vm2408, %v5764, %v5765
        %v5767 = vrot.slane %v5765, 4
        %v5768 = vrot.slane %v4903, 5
        %v5769 = vsel %vm2408, %v5767, %v5768
        %v5770 = vrot.slane %v5634, 5
        %v5771 = vrot.slane %v5770, 4
        %v5772 = vrot.slane %v4905, 5
        %v5773 = vsel %vm2408, %v5771, %v5772
        %v5774 = vrot.slane %v5772, 4
        %v5775 = vrot.slane %v4906, 5
        %v5776 = vsel %vm2408, %v5774, %v5775
        %v5777 = vrot.slane %v5635, 5
        %v5778 = vrot.slane %v5777, 4
        %v5779 = vrot.slane %v4908, 5
        %v5780 = vsel %vm2408, %v5778, %v5779
        %v5781 = vrot.slane %v5779, 4
        %v5782 = vrot.slane %v4909, 5
        %v5783 = vsel %vm2408, %v5781, %v5782
        %v5784 = vrot.slane %v5636, 5
        %v5785 = vrot.slane %v5784, 4
        %v5786 = vrot.slane %v4911, 5
        %v5787 = vsel %vm2408, %v5785, %v5786
        %v5788 = vrot.slane %v5786, 4
        %v5789 = vrot.slane %v4912, 5
        %v5790 = vsel %vm2408, %v5788, %v5789
        %v5791 = vrot.slane %v5637, 5
        %v5792 = vrot.slane %v5791, 4
        %v5793 = vrot.slane %v4914, 5
        %v5794 = vsel %vm2408, %v5792, %v5793
        %v5795 = vrot.slane %v5793, 4
        %v5796 = vrot.slane %v4915, 5
        %v5797 = vsel %vm2408, %v5795, %v5796
        %s5798 = scalar_lea.vmem [#allocation8], 512
        %v5799 = vld [vmem:[%s5798] sm:$0xf]
        %v5800 = vld [vmem:[%s5798 + $0x4] sm:$0xf]
        %v5801 = vld [vmem:[%s5798 + $0x8] sm:$0xf]
        %v5802 = vld [vmem:[%s5798 + $0xc] sm:$0xf]
        %v5803 = vld [vmem:[%s5798 + $0x10] sm:$0xf]
        %v5804 = vld [vmem:[%s5798 + $0x14] sm:$0xf]
        %v5805 = vld [vmem:[%s5798 + $0x18] sm:$0xf]
        %v5806 = vld [vmem:[%s5798 + $0x1c] sm:$0xf]
        %v5807 = vld [vmem:[%s5798 + $0x20] sm:$0xf]
        %v5808 = vld [vmem:[%s5798 + $0x24] sm:$0xf]
        %v5809 = vld [vmem:[%s5798 + $0x28] sm:$0xf]
        %v5810 = vld [vmem:[%s5798 + $0x2c] sm:$0xf]
        %v5811 = vld [vmem:[%s5798 + $0x30] sm:$0xf]
        %v5812 = vld [vmem:[%s5798 + $0x34] sm:$0xf]
        %v5813 = vld [vmem:[%s5798 + $0x38] sm:$0xf]
        %v5814 = vld [vmem:[%s5798 + $0x3c] sm:$0xf]
        %v5815 = vunpack.c.l.b16 %v5689
        %v5816 = vunpack.c.l.b16 %v5692
        %v5817 = vunpack.c.l.b16 %v5696
        %v5818 = vunpack.c.l.b16 %v5699
        %v5819 = vunpack.c.l.b16 %v5703
        %v5820 = vunpack.c.l.b16 %v5706
        %v5821 = vunpack.c.l.b16 %v5710
        %v5822 = vunpack.c.l.b16 %v5713
        %v5823 = vunpack.c.l.b16 %v5717
        %v5824 = vunpack.c.l.b16 %v5720
        %v5825 = vunpack.c.l.b16 %v5724
        %v5826 = vunpack.c.l.b16 %v5727
        %v5827 = vunpack.c.l.b16 %v5731
        %v5828 = vunpack.c.l.b16 %v5734
        %v5829 = vunpack.c.l.b16 %v5738
        %v5830 = vunpack.c.l.b16 %v5741
        %v5831 = vunpack.c.l.b16 %v5745
        %v5832 = vunpack.c.l.b16 %v5748
        %v5833 = vunpack.c.l.b16 %v5752
        %v5834 = vunpack.c.l.b16 %v5755
        %v5835 = vunpack.c.l.b16 %v5759
        %v5836 = vunpack.c.l.b16 %v5762
        %v5837 = vunpack.c.l.b16 %v5766
        %v5838 = vunpack.c.l.b16 %v5769
        %v5839 = vunpack.c.l.b16 %v5773
        %v5840 = vunpack.c.l.b16 %v5776
        %v5841 = vunpack.c.l.b16 %v5780
        %v5842 = vunpack.c.l.b16 %v5783
        %v5843 = vunpack.c.l.b16 %v5787
        %v5844 = vunpack.c.l.b16 %v5790
        %v5845 = vunpack.c.l.b16 %v5794
        %v5846 = vunpack.c.l.b16 %v5797
        %v5847 = vpack.c.b16 %v5816, %v5815
        %v5848 = vpack.c.b16 %v5818, %v5817
        %v5849 = vpack.c.b16 %v5820, %v5819
        %v5850 = vpack.c.b16 %v5822, %v5821
        %v5851 = vpack.c.b16 %v5824, %v5823
        %v5852 = vpack.c.b16 %v5826, %v5825
        %v5853 = vpack.c.b16 %v5828, %v5827
        %v5854 = vpack.c.b16 %v5830, %v5829
        %v5855 = vpack.c.b16 %v5832, %v5831
        %v5856 = vpack.c.b16 %v5834, %v5833
        %v5857 = vpack.c.b16 %v5836, %v5835
        %v5858 = vpack.c.b16 %v5838, %v5837
        %v5859 = vpack.c.b16 %v5840, %v5839
        %v5860 = vpack.c.b16 %v5842, %v5841
        %v5861 = vpack.c.b16 %v5844, %v5843
        %v5862 = vpack.c.b16 %v5846, %v5845
        %v5895 = vunpack.c.l.b16 %v5799
        %v5896 = vunpack.c.l.b16 %v5800
        %v5897 = vunpack.c.l.b16 %v5801
        %v5898 = vunpack.c.l.b16 %v5802
        %v5899 = vunpack.c.l.b16 %v5803
        %v5900 = vunpack.c.l.b16 %v5804
        %v5901 = vunpack.c.l.b16 %v5805
        %v5902 = vunpack.c.l.b16 %v5806
        %v5903 = vunpack.c.l.b16 %v5807
        %v5904 = vunpack.c.l.b16 %v5808
        %v5905 = vunpack.c.l.b16 %v5809
        %v5906 = vunpack.c.l.b16 %v5810
        %v5907 = vunpack.c.l.b16 %v5811
        %v5908 = vunpack.c.l.b16 %v5812
        %v5909 = vunpack.c.l.b16 %v5813
        %v5910 = vunpack.c.l.b16 %v5814
        %v5911 = vpack.c.b16 %v5896, %v5895
        %v5912 = vpack.c.b16 %v5898, %v5897
        %v5913 = vpack.c.b16 %v5900, %v5899
        %v5914 = vpack.c.b16 %v5902, %v5901
        %v5915 = vpack.c.b16 %v5904, %v5903
        %v5916 = vpack.c.b16 %v5906, %v5905
        %v5917 = vpack.c.b16 %v5908, %v5907
        %v5918 = vpack.c.b16 %v5910, %v5909
        %5927 = vmatprep.subr.bf16.mxu0 0
        %5928 = vmatpush1.bf16.msra.mxu0 %v5911
        %5929 = vmatprep.subr.bf16.mxu0 0
        %5930 = vmatpush1.bf16.msra.mxu0 %v5912
        %5931 = vmatprep.subr.bf16.mxu0 0
        %5932 = vmatpush1.bf16.msra.mxu0 %v5913
        %5933 = vmatprep.subr.bf16.mxu0 0
        %5934 = vmatpush1.bf16.msra.mxu0 %v5914
        %5935 = vmatprep.subr.bf16.mxu0 0
        %5936 = vmatpush1.bf16.msra.mxu0 %v5915
        %5937 = vmatprep.subr.bf16.mxu0 0
        %5938 = vmatpush1.bf16.msra.mxu0 %v5916
        %5939 = vmatprep.subr.bf16.mxu0 0
        %5940 = vmatpush1.bf16.msra.mxu0 %v5917
        %5941 = vmatprep.subr.bf16.mxu0 0
        %5942 = vmatpush1.bf16.msra.mxu0 %v5918
        %5943 = vmatprep.subr.bf16.mxu0 0
        %5944 = vmatpush1.bf16.msra.mxu0 0
        %5945 = vmatprep.subr.bf16.mxu0 0
        %5946 = vmatpush1.bf16.msra.mxu0 0
        %5947 = vmatprep.subr.bf16.mxu0 0
        %5948 = vmatpush1.bf16.msra.mxu0 0
        %5949 = vmatprep.subr.bf16.mxu0 0
        %5950 = vmatpush1.bf16.msra.mxu0 0
        %5951 = vmatprep.subr.bf16.mxu0 0
        %5952 = vmatpush1.bf16.msra.mxu0 0
        %5953 = vmatprep.subr.bf16.mxu0 0
        %5954 = vmatpush1.bf16.msra.mxu0 0
        %5955 = vmatprep.subr.bf16.mxu0 0
        %5956 = vmatpush1.bf16.msra.mxu0 0
        %5957 = vmatprep.subr.bf16.mxu0 0
        %5958 = vmatpush1.bf16.msra.mxu0 0
        %5959 = vmatprep.mubr.bf16.mxu0 0
        %5960 = vmatmul.mubr.bf16.gmra.mrb[0].mxu0 %v5847
        %v5961 = vpop.f32.mrb[0].mxu0
        %v5962 = vadd.f32 0.0, %v5961
        %v5963 = vpop.f32.mrb[0].mxu0
        %v5964 = vpop.f32.mrb[0].mxu0
        %v5965 = vadd.f32 0.0, %v5964
        %v5966 = vpop.f32.mrb[0].mxu0
        %5967 = vmatprep.mubr.bf16.mxu0 0
        %5968 = vmatmul.mubr.bf16.gmra.mrb[0].mxu0 %v5848
        %v5969 = vpop.f32.mrb[0].mxu0
        %v5970 = vadd.f32 0.0, %v5969
        %v5971 = vpop.f32.mrb[0].mxu0
        %v5972 = vpop.f32.mrb[0].mxu0
        %v5973 = vadd.f32 0.0, %v5972
        %v5974 = vpop.f32.mrb[0].mxu0
        %5975 = vmatprep.mubr.bf16.mxu0 0
        %5976 = vmatmul.mubr.bf16.gmra.mrb[0].mxu0 %v5849
        %v5977 = vpop.f32.mrb[0].mxu0
        %v5978 = vadd.f32 0.0, %v5977
        %v5979 = vpop.f32.mrb[0].mxu0
        %v5980 = vpop.f32.mrb[0].mxu0
        %v5981 = vadd.f32 0.0, %v5980
        %v5982 = vpop.f32.mrb[0].mxu0
        %5983 = vmatprep.mubr.bf16.mxu0 0
        %5984 = vmatmul.mubr.bf16.gmra.mrb[0].mxu0 %v5850
        %v5985 = vpop.f32.mrb[0].mxu0
        %v5986 = vadd.f32 0.0, %v5985
        %v5987 = vpop.f32.mrb[0].mxu0
        %v5988 = vpop.f32.mrb[0].mxu0
        %v5989 = vadd.f32 0.0, %v5988
        %v5990 = vpop.f32.mrb[0].mxu0
        %5991 = vmatprep.mubr.bf16.mxu0 0
        %5992 = vmatmul.mubr.bf16.gmra.mrb[0].mxu0 %v5851
        %v5993 = vpop.f32.mrb[0].mxu0
        %v5994 = vadd.f32 0.0, %v5993
        %v5995 = vpop.f32.mrb[0].mxu0
        %v5996 = vpop.f32.mrb[0].mxu0
        %v5997 = vadd.f32 0.0, %v5996
        %v5998 = vpop.f32.mrb[0].mxu0
        %5999 = vmatprep.mubr.bf16.mxu0 0
        %6000 = vmatmul.mubr.bf16.gmra.mrb[0].mxu0 %v5852
        %v6001 = vpop.f32.mrb[0].mxu0
        %v6002 = vadd.f32 0.0, %v6001
        %v6003 = vpop.f32.mrb[0].mxu0
        %v6004 = vpop.f32.mrb[0].mxu0
        %v6005 = vadd.f32 0.0, %v6004
        %v6006 = vpop.f32.mrb[0].mxu0
        %6007 = vmatprep.mubr.bf16.mxu0 0
        %6008 = vmatmul.mubr.bf16.gmra.mrb[0].mxu0 %v5853
        %v6009 = vpop.f32.mrb[0].mxu0
        %v6010 = vadd.f32 0.0, %v6009
        %v6011 = vpop.f32.mrb[0].mxu0
        %v6012 = vpop.f32.mrb[0].mxu0
        %v6013 = vadd.f32 0.0, %v6012
        %v6014 = vpop.f32.mrb[0].mxu0
        %6015 = vmatprep.mubr.bf16.mxu0 0
        %6016 = vmatmul.mubr.bf16.gmra.mrb[0].mxu0 %v5854
        %v6017 = vpop.f32.mrb[0].mxu0
        %v6018 = vadd.f32 0.0, %v6017
        %v6019 = vpop.f32.mrb[0].mxu0
        %v6020 = vpop.f32.mrb[0].mxu0
        %v6021 = vadd.f32 0.0, %v6020
        %v6022 = vpop.f32.mrb[0].mxu0
        %6023 = vmatprep.mubr.bf16.mxu0 0
        %6024 = vmatmul.mubr.bf16.gmra.mrb[0].mxu0 %v5855
        %v6025 = vpop.f32.mrb[0].mxu0
        %v6026 = vadd.f32 0.0, %v6025
        %v6027 = vpop.f32.mrb[0].mxu0
        %v6028 = vpop.f32.mrb[0].mxu0
        %v6029 = vadd.f32 0.0, %v6028
        %v6030 = vpop.f32.mrb[0].mxu0
        %6031 = vmatprep.mubr.bf16.mxu0 0
        %6032 = vmatmul.mubr.bf16.gmra.mrb[0].mxu0 %v5856
        %v6033 = vpop.f32.mrb[0].mxu0
        %v6034 = vadd.f32 0.0, %v6033
        %v6035 = vpop.f32.mrb[0].mxu0
        %v6036 = vpop.f32.mrb[0].mxu0
        %v6037 = vadd.f32 0.0, %v6036
        %v6038 = vpop.f32.mrb[0].mxu0
        %6039 = vmatprep.mubr.bf16.mxu0 0
        %6040 = vmatmul.mubr.bf16.gmra.mrb[0].mxu0 %v5857
        %v6041 = vpop.f32.mrb[0].mxu0
        %v6042 = vadd.f32 0.0, %v6041
        %v6043 = vpop.f32.mrb[0].mxu0
        %v6044 = vpop.f32.mrb[0].mxu0
        %v6045 = vadd.f32 0.0, %v6044
        %v6046 = vpop.f32.mrb[0].mxu0
        %6047 = vmatprep.mubr.bf16.mxu0 0
        %6048 = vmatmul.mubr.bf16.gmra.mrb[0].mxu0 %v5858
        %v6049 = vpop.f32.mrb[0].mxu0
        %v6050 = vadd.f32 0.0, %v6049
        %v6051 = vpop.f32.mrb[0].mxu0
        %v6052 = vpop.f32.mrb[0].mxu0
        %v6053 = vadd.f32 0.0, %v6052
        %v6054 = vpop.f32.mrb[0].mxu0
        %6055 = vmatprep.mubr.bf16.mxu0 0
        %6056 = vmatmul.mubr.bf16.gmra.mrb[0].mxu0 %v5859
        %v6057 = vpop.f32.mrb[0].mxu0
        %v6058 = vadd.f32 0.0, %v6057
        %v6059 = vpop.f32.mrb[0].mxu0
        %v6060 = vpop.f32.mrb[0].mxu0
        %v6061 = vadd.f32 0.0, %v6060
        %v6062 = vpop.f32.mrb[0].mxu0
        %6063 = vmatprep.mubr.bf16.mxu0 0
        %6064 = vmatmul.mubr.bf16.gmra.mrb[0].mxu0 %v5860
        %v6065 = vpop.f32.mrb[0].mxu0
        %v6066 = vadd.f32 0.0, %v6065
        %v6067 = vpop.f32.mrb[0].mxu0
        %v6068 = vpop.f32.mrb[0].mxu0
        %v6069 = vadd.f32 0.0, %v6068
        %v6070 = vpop.f32.mrb[0].mxu0
        %6071 = vmatprep.mubr.bf16.mxu0 0
        %6072 = vmatmul.mubr.bf16.gmra.mrb[0].mxu0 %v5861
        %v6073 = vpop.f32.mrb[0].mxu0
        %v6074 = vadd.f32 0.0, %v6073
        %v6075 = vpop.f32.mrb[0].mxu0
        %v6076 = vpop.f32.mrb[0].mxu0
        %v6077 = vadd.f32 0.0, %v6076
        %v6078 = vpop.f32.mrb[0].mxu0
        %6079 = vmatprep.mubr.bf16.mxu0 0
        %6080 = vmatmul.mubr.bf16.gmra.mrb[0].mxu0 %v5862
        %v6081 = vpop.f32.mrb[0].mxu0
        %v6082 = vadd.f32 0.0, %v6081
        %v6083 = vpop.f32.mrb[0].mxu0
        %v6084 = vpop.f32.mrb[0].mxu0
        %v6085 = vadd.f32 0.0, %v6084
        %v6086 = vpop.f32.mrb[0].mxu0
        %6087 = vdwg.mxu0
        %v6088 = vadd.f32 %v5590, %v5962
        %v6089 = vadd.f32 %v5591, %v5965
        %v6090 = vadd.f32 %v5592, %v5970
        %v6091 = vadd.f32 %v5593, %v5973
        %v6092 = vadd.f32 %v5594, %v5978
        %v6093 = vadd.f32 %v5595, %v5981
        %v6094 = vadd.f32 %v5596, %v5986
        %v6095 = vadd.f32 %v5597, %v5989
        %v6096 = vadd.f32 %v5598, %v5994
        %v6097 = vadd.f32 %v5599, %v5997
        %v6098 = vadd.f32 %v5600, %v6002
        %v6099 = vadd.f32 %v5601, %v6005
        %v6100 = vadd.f32 %v5602, %v6010
        %v6101 = vadd.f32 %v5603, %v6013
        %v6102 = vadd.f32 %v5604, %v6018
        %v6103 = vadd.f32 %v5605, %v6021
        %v6104 = vadd.f32 %v5606, %v6026
        %v6105 = vadd.f32 %v5607, %v6029
        %v6106 = vadd.f32 %v5608, %v6034
        %v6107 = vadd.f32 %v5609, %v6037
        %v6108 = vadd.f32 %v5610, %v6042
        %v6109 = vadd.f32 %v5611, %v6045
        %v6110 = vadd.f32 %v5612, %v6050
        %v6111 = vadd.f32 %v5613, %v6053
        %v6112 = vadd.f32 %v5614, %v6058
        %v6113 = vadd.f32 %v5615, %v6061
        %v6114 = vadd.f32 %v5616, %v6066
        %v6115 = vadd.f32 %v5617, %v6069
        %v6116 = vadd.f32 %v5618, %v6074
        %v6117 = vadd.f32 %v5619, %v6077
        %v6118 = vadd.f32 %v5620, %v6082
        %v6119 = vadd.f32 %v5621, %v6085
        %v6120 = vld [vmem:[%s4] sm:$0x1]
        %v6121 = vlaneseq
        %v6122 = vshrl.u32 %v6121, 7
        %v6123 = vsub.s32 0, %v6122
        %v6124 = vrot.slane %v6120, %v6123
        %v6125 = vmul.f32 %v6088, %v6124
        %v6126 = vmul.f32 %v6089, %v6124
        %v6127 = vmul.f32 %v6090, %v6124
        %v6128 = vmul.f32 %v6091, %v6124
        %v6129 = vmul.f32 %v6092, %v6124
        %v6130 = vmul.f32 %v6093, %v6124
        %v6131 = vmul.f32 %v6094, %v6124
        %v6132 = vmul.f32 %v6095, %v6124
        %v6133 = vmul.f32 %v6096, %v6124
        %v6134 = vmul.f32 %v6097, %v6124
        %v6135 = vmul.f32 %v6098, %v6124
        %v6136 = vmul.f32 %v6099, %v6124
        %v6137 = vmul.f32 %v6100, %v6124
        %v6138 = vmul.f32 %v6101, %v6124
        %v6139 = vmul.f32 %v6102, %v6124
        %v6140 = vmul.f32 %v6103, %v6124
        %v6141 = vmul.f32 %v6104, %v6124
        %v6142 = vmul.f32 %v6105, %v6124
        %v6143 = vmul.f32 %v6106, %v6124
        %v6144 = vmul.f32 %v6107, %v6124
        %v6145 = vmul.f32 %v6108, %v6124
        %v6146 = vmul.f32 %v6109, %v6124
        %v6147 = vmul.f32 %v6110, %v6124
        %v6148 = vmul.f32 %v6111, %v6124
        %v6149 = vmul.f32 %v6112, %v6124
        %v6150 = vmul.f32 %v6113, %v6124
        %v6151 = vmul.f32 %v6114, %v6124
        %v6152 = vmul.f32 %v6115, %v6124
        %v6153 = vmul.f32 %v6116, %v6124
        %v6154 = vmul.f32 %v6117, %v6124
        %v6155 = vmul.f32 %v6118, %v6124
        %v6156 = vmul.f32 %v6119, %v6124
        %v6157 = vld [vmem:[%s4 + $0x1] sm:$0x1]
        %v6158 = vlaneseq
        %v6159 = vshrl.u32 %v6158, 7
        %v6160 = vsub.s32 0, %v6159
        %v6161 = vrot.slane %v6157, %v6160
        %v6162 = vadd.f32 %v6125, %v6161
        %v6163 = vadd.f32 %v6126, %v6161
        %v6164 = vadd.f32 %v6127, %v6161
        %v6165 = vadd.f32 %v6128, %v6161
        %v6166 = vadd.f32 %v6129, %v6161
        %v6167 = vadd.f32 %v6130, %v6161
        %v6168 = vadd.f32 %v6131, %v6161
        %v6169 = vadd.f32 %v6132, %v6161
        %v6170 = vadd.f32 %v6133, %v6161
        %v6171 = vadd.f32 %v6134, %v6161
        %v6172 = vadd.f32 %v6135, %v6161
        %v6173 = vadd.f32 %v6136, %v6161
        %v6174 = vadd.f32 %v6137, %v6161
        %v6175 = vadd.f32 %v6138, %v6161
        %v6176 = vadd.f32 %v6139, %v6161
        %v6177 = vadd.f32 %v6140, %v6161
        %v6178 = vadd.f32 %v6141, %v6161
        %v6179 = vadd.f32 %v6142, %v6161
        %v6180 = vadd.f32 %v6143, %v6161
        %v6181 = vadd.f32 %v6144, %v6161
        %v6182 = vadd.f32 %v6145, %v6161
        %v6183 = vadd.f32 %v6146, %v6161
        %v6184 = vadd.f32 %v6147, %v6161
        %v6185 = vadd.f32 %v6148, %v6161
        %v6186 = vadd.f32 %v6149, %v6161
        %v6187 = vadd.f32 %v6150, %v6161
        %v6188 = vadd.f32 %v6151, %v6161
        %v6189 = vadd.f32 %v6152, %v6161
        %v6190 = vadd.f32 %v6153, %v6161
        %v6191 = vadd.f32 %v6154, %v6161
        %v6192 = vadd.f32 %v6155, %v6161
        %v6193 = vadd.f32 %v6156, %v6161
        %v6194 = vmax.f32 %v6162, 0.0
        %v6195 = vmax.f32 %v6163, 0.0
        %v6196 = vmax.f32 %v6164, 0.0
        %v6197 = vmax.f32 %v6165, 0.0
        %v6198 = vmax.f32 %v6166, 0.0
        %v6199 = vmax.f32 %v6167, 0.0
        %v6200 = vmax.f32 %v6168, 0.0
        %v6201 = vmax.f32 %v6169, 0.0
        %v6202 = vmax.f32 %v6170, 0.0
        %v6203 = vmax.f32 %v6171, 0.0
        %v6204 = vmax.f32 %v6172, 0.0
        %v6205 = vmax.f32 %v6173, 0.0
        %v6206 = vmax.f32 %v6174, 0.0
        %v6207 = vmax.f32 %v6175, 0.0
        %v6208 = vmax.f32 %v6176, 0.0
        %v6209 = vmax.f32 %v6177, 0.0
        %v6210 = vmax.f32 %v6178, 0.0
        %v6211 = vmax.f32 %v6179, 0.0
        %v6212 = vmax.f32 %v6180, 0.0
        %v6213 = vmax.f32 %v6181, 0.0
        %v6214 = vmax.f32 %v6182, 0.0
        %v6215 = vmax.f32 %v6183, 0.0
        %v6216 = vmax.f32 %v6184, 0.0
        %v6217 = vmax.f32 %v6185, 0.0
        %v6218 = vmax.f32 %v6186, 0.0
        %v6219 = vmax.f32 %v6187, 0.0
        %v6220 = vmax.f32 %v6188, 0.0
        %v6221 = vmax.f32 %v6189, 0.0
        %v6222 = vmax.f32 %v6190, 0.0
        %v6223 = vmax.f32 %v6191, 0.0
        %v6224 = vmax.f32 %v6192, 0.0
        %v6225 = vmax.f32 %v6193, 0.0
        %v6226 = vpack.c.bf16 %v6195, %v6194
        %v6227 = vpack.c.bf16 %v6197, %v6196
        %v6228 = vpack.c.bf16 %v6199, %v6198
        %v6229 = vpack.c.bf16 %v6201, %v6200
        %v6230 = vpack.c.bf16 %v6203, %v6202
        %v6231 = vpack.c.bf16 %v6205, %v6204
        %v6232 = vpack.c.bf16 %v6207, %v6206
        %v6233 = vpack.c.bf16 %v6209, %v6208
        %v6234 = vpack.c.bf16 %v6211, %v6210
        %v6235 = vpack.c.bf16 %v6213, %v6212
        %v6236 = vpack.c.bf16 %v6215, %v6214
        %v6237 = vpack.c.bf16 %v6217, %v6216
        %v6238 = vpack.c.bf16 %v6219, %v6218
        %v6239 = vpack.c.bf16 %v6221, %v6220
        %v6240 = vpack.c.bf16 %v6223, %v6222
        %v6241 = vpack.c.bf16 %v6225, %v6224
        %v6242 = vld [vmem:[#allocation9] sm:$0xf]
        %v6243 = vld [vmem:[#allocation9 + $0x4] sm:$0xf]
        %v6244 = vld [vmem:[#allocation9 + $0x8] sm:$0xf]
        %v6245 = vld [vmem:[#allocation9 + $0xc] sm:$0xf]
        %v6246 = vld [vmem:[#allocation9 + $0x10] sm:$0xf]
        %v6247 = vld [vmem:[#allocation9 + $0x14] sm:$0xf]
        %v6248 = vld [vmem:[#allocation9 + $0x18] sm:$0xf]
        %v6249 = vld [vmem:[#allocation9 + $0x1c] sm:$0xf]
        %v6250 = vld [vmem:[#allocation9 + $0x20] sm:$0xf]
        %v6251 = vld [vmem:[#allocation9 + $0x24] sm:$0xf]
        %v6252 = vld [vmem:[#allocation9 + $0x28] sm:$0xf]
        %v6253 = vld [vmem:[#allocation9 + $0x2c] sm:$0xf]
        %v6254 = vld [vmem:[#allocation9 + $0x30] sm:$0xf]
        %v6255 = vld [vmem:[#allocation9 + $0x34] sm:$0xf]
        %v6256 = vld [vmem:[#allocation9 + $0x38] sm:$0xf]
        %v6257 = vld [vmem:[#allocation9 + $0x3c] sm:$0xf]
        %v6274 = vunpack.c.l.b16 %v6242
        %v6275 = vunpack.c.l.b16 %v6243
        %v6276 = vunpack.c.l.b16 %v6244
        %v6277 = vunpack.c.l.b16 %v6245
        %v6278 = vunpack.c.l.b16 %v6246
        %v6279 = vunpack.c.l.b16 %v6247
        %v6280 = vunpack.c.l.b16 %v6248
        %v6281 = vunpack.c.l.b16 %v6249
        %v6282 = vunpack.c.l.b16 %v6250
        %v6283 = vunpack.c.l.b16 %v6251
        %v6284 = vunpack.c.l.b16 %v6252
        %v6285 = vunpack.c.l.b16 %v6253
        %v6286 = vunpack.c.l.b16 %v6254
        %v6287 = vunpack.c.l.b16 %v6255
        %v6288 = vunpack.c.l.b16 %v6256
        %v6289 = vunpack.c.l.b16 %v6257
        %v6290 = vpack.c.b16 %v6275, %v6274
        %v6291 = vpack.c.b16 %v6277, %v6276
        %v6292 = vpack.c.b16 %v6279, %v6278
        %v6293 = vpack.c.b16 %v6281, %v6280
        %v6294 = vpack.c.b16 %v6283, %v6282
        %v6295 = vpack.c.b16 %v6285, %v6284
        %v6296 = vpack.c.b16 %v6287, %v6286
        %v6297 = vpack.c.b16 %v6289, %v6288
        %6306 = vmatprep.subr.bf16.mxu0 0
        %6307 = vmatpush1.bf16.msra.mxu0 %v6290
        %6308 = vmatprep.subr.bf16.mxu0 0
        %6309 = vmatpush1.bf16.msra.mxu0 %v6291
        %6310 = vmatprep.subr.bf16.mxu0 0
        %6311 = vmatpush1.bf16.msra.mxu0 %v6292
        %6312 = vmatprep.subr.bf16.mxu0 0
        %6313 = vmatpush1.bf16.msra.mxu0 %v6293
        %6314 = vmatprep.subr.bf16.mxu0 0
        %6315 = vmatpush1.bf16.msra.mxu0 %v6294
        %6316 = vmatprep.subr.bf16.mxu0 0
        %6317 = vmatpush1.bf16.msra.mxu0 %v6295
        %6318 = vmatprep.subr.bf16.mxu0 0
        %6319 = vmatpush1.bf16.msra.mxu0 %v6296
        %6320 = vmatprep.subr.bf16.mxu0 0
        %6321 = vmatpush1.bf16.msra.mxu0 %v6297
        %6322 = vmatprep.subr.bf16.mxu0 0
        %6323 = vmatpush1.bf16.msra.mxu0 0
        %6324 = vmatprep.subr.bf16.mxu0 0
        %6325 = vmatpush1.bf16.msra.mxu0 0
        %6326 = vmatprep.subr.bf16.mxu0 0
        %6327 = vmatpush1.bf16.msra.mxu0 0
        %6328 = vmatprep.subr.bf16.mxu0 0
        %6329 = vmatpush1.bf16.msra.mxu0 0
        %6330 = vmatprep.subr.bf16.mxu0 0
        %6331 = vmatpush1.bf16.msra.mxu0 0
        %6332 = vmatprep.subr.bf16.mxu0 0
        %6333 = vmatpush1.bf16.msra.mxu0 0
        %6334 = vmatprep.subr.bf16.mxu0 0
        %6335 = vmatpush1.bf16.msra.mxu0 0
        %6336 = vmatprep.subr.bf16.mxu0 0
        %6337 = vmatpush1.bf16.msra.mxu0 0
        %6338 = vmatprep.mubr.bf16.mxu0 0
        %6339 = vmatmul.mubr.bf16.gmra.mrb[0].mxu0 %v6226
        %v6340 = vpop.f32.mrb[0].mxu0
        %v6341 = vadd.f32 0.0, %v6340
        %v6342 = vpop.f32.mrb[0].mxu0
        %v6343 = vpop.f32.mrb[0].mxu0
        %v6344 = vadd.f32 0.0, %v6343
        %v6345 = vpop.f32.mrb[0].mxu0
        %6346 = vmatprep.mubr.bf16.mxu0 0
        %6347 = vmatmul.mubr.bf16.gmra.mrb[0].mxu0 %v6227
        %v6348 = vpop.f32.mrb[0].mxu0
        %v6349 = vadd.f32 0.0, %v6348
        %v6350 = vpop.f32.mrb[0].mxu0
        %v6351 = vpop.f32.mrb[0].mxu0
        %v6352 = vadd.f32 0.0, %v6351
        %v6353 = vpop.f32.mrb[0].mxu0
        %6354 = vmatprep.mubr.bf16.mxu0 0
        %6355 = vmatmul.mubr.bf16.gmra.mrb[0].mxu0 %v6228
        %v6356 = vpop.f32.mrb[0].mxu0
        %v6357 = vadd.f32 0.0, %v6356
        %v6358 = vpop.f32.mrb[0].mxu0
        %v6359 = vpop.f32.mrb[0].mxu0
        %v6360 = vadd.f32 0.0, %v6359
        %v6361 = vpop.f32.mrb[0].mxu0
        %6362 = vmatprep.mubr.bf16.mxu0 0
        %6363 = vmatmul.mubr.bf16.gmra.mrb[0].mxu0 %v6229
        %v6364 = vpop.f32.mrb[0].mxu0
        %v6365 = vadd.f32 0.0, %v6364
        %v6366 = vpop.f32.mrb[0].mxu0
        %v6367 = vpop.f32.mrb[0].mxu0
        %v6368 = vadd.f32 0.0, %v6367
        %v6369 = vpop.f32.mrb[0].mxu0
        %6370 = vmatprep.mubr.bf16.mxu0 0
        %6371 = vmatmul.mubr.bf16.gmra.mrb[0].mxu0 %v6230
        %v6372 = vpop.f32.mrb[0].mxu0
        %v6373 = vadd.f32 0.0, %v6372
        %v6374 = vpop.f32.mrb[0].mxu0
        %v6375 = vpop.f32.mrb[0].mxu0
        %v6376 = vadd.f32 0.0, %v6375
        %v6377 = vpop.f32.mrb[0].mxu0
        %6378 = vmatprep.mubr.bf16.mxu0 0
        %6379 = vmatmul.mubr.bf16.gmra.mrb[0].mxu0 %v6231
        %v6380 = vpop.f32.mrb[0].mxu0
        %v6381 = vadd.f32 0.0, %v6380
        %v6382 = vpop.f32.mrb[0].mxu0
        %v6383 = vpop.f32.mrb[0].mxu0
        %v6384 = vadd.f32 0.0, %v6383
        %v6385 = vpop.f32.mrb[0].mxu0
        %6386 = vmatprep.mubr.bf16.mxu0 0
        %6387 = vmatmul.mubr.bf16.gmra.mrb[0].mxu0 %v6232
        %v6388 = vpop.f32.mrb[0].mxu0
        %v6389 = vadd.f32 0.0, %v6388
        %v6390 = vpop.f32.mrb[0].mxu0
        %v6391 = vpop.f32.mrb[0].mxu0
        %v6392 = vadd.f32 0.0, %v6391
        %v6393 = vpop.f32.mrb[0].mxu0
        %6394 = vmatprep.mubr.bf16.mxu0 0
        %6395 = vmatmul.mubr.bf16.gmra.mrb[0].mxu0 %v6233
        %v6396 = vpop.f32.mrb[0].mxu0
        %v6397 = vadd.f32 0.0, %v6396
        %v6398 = vpop.f32.mrb[0].mxu0
        %v6399 = vpop.f32.mrb[0].mxu0
        %v6400 = vadd.f32 0.0, %v6399
        %v6401 = vpop.f32.mrb[0].mxu0
        %6402 = vmatprep.mubr.bf16.mxu0 0
        %6403 = vmatmul.mubr.bf16.gmra.mrb[0].mxu0 %v6234
        %v6404 = vpop.f32.mrb[0].mxu0
        %v6405 = vadd.f32 0.0, %v6404
        %v6406 = vpop.f32.mrb[0].mxu0
        %v6407 = vpop.f32.mrb[0].mxu0
        %v6408 = vadd.f32 0.0, %v6407
        %v6409 = vpop.f32.mrb[0].mxu0
        %6410 = vmatprep.mubr.bf16.mxu0 0
        %6411 = vmatmul.mubr.bf16.gmra.mrb[0].mxu0 %v6235
        %v6412 = vpop.f32.mrb[0].mxu0
        %v6413 = vadd.f32 0.0, %v6412
        %v6414 = vpop.f32.mrb[0].mxu0
        %v6415 = vpop.f32.mrb[0].mxu0
        %v6416 = vadd.f32 0.0, %v6415
        %v6417 = vpop.f32.mrb[0].mxu0
        %6418 = vmatprep.mubr.bf16.mxu0 0
        %6419 = vmatmul.mubr.bf16.gmra.mrb[0].mxu0 %v6236
        %v6420 = vpop.f32.mrb[0].mxu0
        %v6421 = vadd.f32 0.0, %v6420
        %v6422 = vpop.f32.mrb[0].mxu0
        %v6423 = vpop.f32.mrb[0].mxu0
        %v6424 = vadd.f32 0.0, %v6423
        %v6425 = vpop.f32.mrb[0].mxu0
        %6426 = vmatprep.mubr.bf16.mxu0 0
        %6427 = vmatmul.mubr.bf16.gmra.mrb[0].mxu0 %v6237
        %v6428 = vpop.f32.mrb[0].mxu0
        %v6429 = vadd.f32 0.0, %v6428
        %v6430 = vpop.f32.mrb[0].mxu0
        %v6431 = vpop.f32.mrb[0].mxu0
        %v6432 = vadd.f32 0.0, %v6431
        %v6433 = vpop.f32.mrb[0].mxu0
        %6434 = vmatprep.mubr.bf16.mxu0 0
        %6435 = vmatmul.mubr.bf16.gmra.mrb[0].mxu0 %v6238
        %v6436 = vpop.f32.mrb[0].mxu0
        %v6437 = vadd.f32 0.0, %v6436
        %v6438 = vpop.f32.mrb[0].mxu0
        %v6439 = vpop.f32.mrb[0].mxu0
        %v6440 = vadd.f32 0.0, %v6439
        %v6441 = vpop.f32.mrb[0].mxu0
        %6442 = vmatprep.mubr.bf16.mxu0 0
        %6443 = vmatmul.mubr.bf16.gmra.mrb[0].mxu0 %v6239
        %v6444 = vpop.f32.mrb[0].mxu0
        %v6445 = vadd.f32 0.0, %v6444
        %v6446 = vpop.f32.mrb[0].mxu0
        %v6447 = vpop.f32.mrb[0].mxu0
        %v6448 = vadd.f32 0.0, %v6447
        %v6449 = vpop.f32.mrb[0].mxu0
        %6450 = vmatprep.mubr.bf16.mxu0 0
        %6451 = vmatmul.mubr.bf16.gmra.mrb[0].mxu0 %v6240
        %v6452 = vpop.f32.mrb[0].mxu0
        %v6453 = vadd.f32 0.0, %v6452
        %v6454 = vpop.f32.mrb[0].mxu0
        %v6455 = vpop.f32.mrb[0].mxu0
        %v6456 = vadd.f32 0.0, %v6455
        %v6457 = vpop.f32.mrb[0].mxu0
        %6458 = vmatprep.mubr.bf16.mxu0 0
        %6459 = vmatmul.mubr.bf16.gmra.mrb[0].mxu0 %v6241
        %v6460 = vpop.f32.mrb[0].mxu0
        %v6461 = vadd.f32 0.0, %v6460
        %v6462 = vpop.f32.mrb[0].mxu0
        %v6463 = vpop.f32.mrb[0].mxu0
        %v6464 = vadd.f32 0.0, %v6463
        %v6465 = vpop.f32.mrb[0].mxu0
        %6466 = vdwg.mxu0
        %v6467 = vld [vmem:[%s6] sm:$0x1]
        %v6468 = vlaneseq
        %v6469 = vshrl.u32 %v6468, 7
        %v6470 = vsub.s32 0, %v6469
        %v6471 = vrot.slane %v6467, %v6470
        %v6472 = vmul.f32 %v6341, %v6471
        %v6473 = vmul.f32 %v6344, %v6471
        %v6474 = vmul.f32 %v6349, %v6471
        %v6475 = vmul.f32 %v6352, %v6471
        %v6476 = vmul.f32 %v6357, %v6471
        %v6477 = vmul.f32 %v6360, %v6471
        %v6478 = vmul.f32 %v6365, %v6471
        %v6479 = vmul.f32 %v6368, %v6471
        %v6480 = vmul.f32 %v6373, %v6471
        %v6481 = vmul.f32 %v6376, %v6471
        %v6482 = vmul.f32 %v6381, %v6471
        %v6483 = vmul.f32 %v6384, %v6471
        %v6484 = vmul.f32 %v6389, %v6471
        %v6485 = vmul.f32 %v6392, %v6471
        %v6486 = vmul.f32 %v6397, %v6471
        %v6487 = vmul.f32 %v6400, %v6471
        %v6488 = vmul.f32 %v6405, %v6471
        %v6489 = vmul.f32 %v6408, %v6471
        %v6490 = vmul.f32 %v6413, %v6471
        %v6491 = vmul.f32 %v6416, %v6471
        %v6492 = vmul.f32 %v6421, %v6471
        %v6493 = vmul.f32 %v6424, %v6471
        %v6494 = vmul.f32 %v6429, %v6471
        %v6495 = vmul.f32 %v6432, %v6471
        %v6496 = vmul.f32 %v6437, %v6471
        %v6497 = vmul.f32 %v6440, %v6471
        %v6498 = vmul.f32 %v6445, %v6471
        %v6499 = vmul.f32 %v6448, %v6471
        %v6500 = vmul.f32 %v6453, %v6471
        %v6501 = vmul.f32 %v6456, %v6471
        %v6502 = vmul.f32 %v6461, %v6471
        %v6503 = vmul.f32 %v6464, %v6471
        %v6504 = vld [vmem:[%s6 + $0x1] sm:$0x1]
        %v6505 = vlaneseq
        %v6506 = vshrl.u32 %v6505, 7
        %v6507 = vsub.s32 0, %v6506
        %v6508 = vrot.slane %v6504, %v6507
        %v6509 = vadd.f32 %v6472, %v6508
        %v6510 = vadd.f32 %v6473, %v6508
        %v6511 = vadd.f32 %v6474, %v6508
        %v6512 = vadd.f32 %v6475, %v6508
        %v6513 = vadd.f32 %v6476, %v6508
        %v6514 = vadd.f32 %v6477, %v6508
        %v6515 = vadd.f32 %v6478, %v6508
        %v6516 = vadd.f32 %v6479, %v6508
        %v6517 = vadd.f32 %v6480, %v6508
        %v6518 = vadd.f32 %v6481, %v6508
        %v6519 = vadd.f32 %v6482, %v6508
        %v6520 = vadd.f32 %v6483, %v6508
        %v6521 = vadd.f32 %v6484, %v6508
        %v6522 = vadd.f32 %v6485, %v6508
        %v6523 = vadd.f32 %v6486, %v6508
        %v6524 = vadd.f32 %v6487, %v6508
        %v6525 = vadd.f32 %v6488, %v6508
        %v6526 = vadd.f32 %v6489, %v6508
        %v6527 = vadd.f32 %v6490, %v6508
        %v6528 = vadd.f32 %v6491, %v6508
        %v6529 = vadd.f32 %v6492, %v6508
        %v6530 = vadd.f32 %v6493, %v6508
        %v6531 = vadd.f32 %v6494, %v6508
        %v6532 = vadd.f32 %v6495, %v6508
        %v6533 = vadd.f32 %v6496, %v6508
        %v6534 = vadd.f32 %v6497, %v6508
        %v6535 = vadd.f32 %v6498, %v6508
        %v6536 = vadd.f32 %v6499, %v6508
        %v6537 = vadd.f32 %v6500, %v6508
        %v6538 = vadd.f32 %v6501, %v6508
        %v6539 = vadd.f32 %v6502, %v6508
        %v6540 = vadd.f32 %v6503, %v6508
        %v6541 = vadd.f32 %v6509, %v342
        %v6542 = vadd.f32 %v6510, %v343
        %v6543 = vadd.f32 %v6511, %v344
        %v6544 = vadd.f32 %v6512, %v345
        %v6545 = vadd.f32 %v6513, %v346
        %v6546 = vadd.f32 %v6514, %v347
        %v6547 = vadd.f32 %v6515, %v348
        %v6548 = vadd.f32 %v6516, %v349
        %v6549 = vadd.f32 %v6517, %v350
        %v6550 = vadd.f32 %v6518, %v351
        %v6551 = vadd.f32 %v6519, %v352
        %v6552 = vadd.f32 %v6520, %v353
        %v6553 = vadd.f32 %v6521, %v354
        %v6554 = vadd.f32 %v6522, %v355
        %v6555 = vadd.f32 %v6523, %v356
        %v6556 = vadd.f32 %v6524, %v357
        %v6557 = vadd.f32 %v6525, %v358
        %v6558 = vadd.f32 %v6526, %v359
        %v6559 = vadd.f32 %v6527, %v360
        %v6560 = vadd.f32 %v6528, %v361
        %v6561 = vadd.f32 %v6529, %v362
        %v6562 = vadd.f32 %v6530, %v363
        %v6563 = vadd.f32 %v6531, %v364
        %v6564 = vadd.f32 %v6532, %v365
        %v6565 = vadd.f32 %v6533, %v366
        %v6566 = vadd.f32 %v6534, %v367
        %v6567 = vadd.f32 %v6535, %v368
        %v6568 = vadd.f32 %v6536, %v369
        %v6569 = vadd.f32 %v6537, %v370
        %v6570 = vadd.f32 %v6538, %v371
        %v6571 = vadd.f32 %v6539, %v372
        %v6572 = vadd.f32 %v6540, %v373
        %v6573 = vmax.f32 %v6541, 0.0
        %v6574 = vmax.f32 %v6542, 0.0
        %v6575 = vmax.f32 %v6543, 0.0
        %v6576 = vmax.f32 %v6544, 0.0
        %v6577 = vmax.f32 %v6545, 0.0
        %v6578 = vmax.f32 %v6546, 0.0
        %v6579 = vmax.f32 %v6547, 0.0
        %v6580 = vmax.f32 %v6548, 0.0
        %v6581 = vmax.f32 %v6549, 0.0
        %v6582 = vmax.f32 %v6550, 0.0
        %v6583 = vmax.f32 %v6551, 0.0
        %v6584 = vmax.f32 %v6552, 0.0
        %v6585 = vmax.f32 %v6553, 0.0
        %v6586 = vmax.f32 %v6554, 0.0
        %v6587 = vmax.f32 %v6555, 0.0
        %v6588 = vmax.f32 %v6556, 0.0
        %v6589 = vmax.f32 %v6557, 0.0
        %v6590 = vmax.f32 %v6558, 0.0
        %v6591 = vmax.f32 %v6559, 0.0
        %v6592 = vmax.f32 %v6560, 0.0
        %v6593 = vmax.f32 %v6561, 0.0
        %v6594 = vmax.f32 %v6562, 0.0
        %v6595 = vmax.f32 %v6563, 0.0
        %v6596 = vmax.f32 %v6564, 0.0
        %v6597 = vmax.f32 %v6565, 0.0
        %v6598 = vmax.f32 %v6566, 0.0
        %v6599 = vmax.f32 %v6567, 0.0
        %v6600 = vmax.f32 %v6568, 0.0
        %v6601 = vmax.f32 %v6569, 0.0
        %v6602 = vmax.f32 %v6570, 0.0
        %v6603 = vmax.f32 %v6571, 0.0
        %v6604 = vmax.f32 %v6572, 0.0
        %6605 = vst [vmem:[%s340] sm:$0xff] %v6573
        %6606 = vst [vmem:[%s340 + $0x8] sm:$0xff] %v6574
        %6607 = vst [vmem:[%s340 + $0x10] sm:$0xff] %v6575
        %6608 = vst [vmem:[%s340 + $0x18] sm:$0xff] %v6576
        %6609 = vst [vmem:[%s340 + $0x20] sm:$0xff] %v6577
        %6610 = vst [vmem:[%s340 + $0x28] sm:$0xff] %v6578
        %6611 = vst [vmem:[%s340 + $0x30] sm:$0xff] %v6579
        %6612 = vst [vmem:[%s340 + $0x38] sm:$0xff] %v6580
        %6613 = vst [vmem:[%s340 + $0x40] sm:$0xff] %v6581
        %6614 = vst [vmem:[%s340 + $0x48] sm:$0xff] %v6582
        %6615 = vst [vmem:[%s340 + $0x50] sm:$0xff] %v6583
        %6616 = vst [vmem:[%s340 + $0x58] sm:$0xff] %v6584
        %6617 = vst [vmem:[%s340 + $0x60] sm:$0xff] %v6585
        %6618 = vst [vmem:[%s340 + $0x68] sm:$0xff] %v6586
        %6619 = vst [vmem:[%s340 + $0x70] sm:$0xff] %v6587
        %6620 = vst [vmem:[%s340 + $0x78] sm:$0xff] %v6588
        %6621 = vst [vmem:[%s340 + $0x80] sm:$0xff] %v6589
        %6622 = vst [vmem:[%s340 + $0x88] sm:$0xff] %v6590
        %6623 = vst [vmem:[%s340 + $0x90] sm:$0xff] %v6591
        %6624 = vst [vmem:[%s340 + $0x98] sm:$0xff] %v6592
        %6625 = vst [vmem:[%s340 + $0xa0] sm:$0xff] %v6593
        %6626 = vst [vmem:[%s340 + $0xa8] sm:$0xff] %v6594
        %6627 = vst [vmem:[%s340 + $0xb0] sm:$0xff] %v6595
        %6628 = vst [vmem:[%s340 + $0xb8] sm:$0xff] %v6596
        %6629 = vst [vmem:[%s340 + $0xc0] sm:$0xff] %v6597
        %6630 = vst [vmem:[%s340 + $0xc8] sm:$0xff] %v6598
        %6631 = vst [vmem:[%s340 + $0xd0] sm:$0xff] %v6599
        %6632 = vst [vmem:[%s340 + $0xd8] sm:$0xff] %v6600
        %6633 = vst [vmem:[%s340 + $0xe0] sm:$0xff] %v6601
        %6634 = vst [vmem:[%s340 + $0xe8] sm:$0xff] %v6602
        %6635 = vst [vmem:[%s340 + $0xf0] sm:$0xff] %v6603
        %6636 = vst [vmem:[%s340 + $0xf8] sm:$0xff] %v6604
        %s6637 = sand.u32 %s186, 1
        %s6638 = scalar_lea.sflag [#allocation5], %s6637
        %s6639 = sand.u32 %s186, 1
        %s6640 = smul.addr %s6639, 256
        %s6641 = scalar_lea.vmem [#allocation11], %s6640
        // Predicated region
        $region65: #{tpu_custom_call.1} parent=47 // pred_check
          %p6642 = pneg %p196
        $region66: #{tpu_custom_call.1} parent=47 // pred_check_branch
          %6644 = sbr.rel (%p6642) target = $region68
        $region67: #{tpu_custom_call.1} parent=47 // pred_region
          %s6646 = ssub.s32 4096, 4096
          %6647 = vsyncadd %s6638, %s6646
          %s6648 = smul.addr %s26, 32
          %s6649 = smul.addr %s6648, 128
          %s6650 = scalar_lea.hbm %s7, %s6649
          %s6651 = sshll.u32 %s6641, 4
          %s6652 = int_to_ptr.vmem [resolvable:$true] %s6651
          %6657 = dma.vmem_to_hbm [thread:$0]  %s6652, 4096, %s6650, %s6638, 128, 128, 8
        $region68: #{tpu_custom_call.1} parent=47 // pred_fallthru
          _
      $region48: #{tpu_custom_call.1} parent=5 // pred_fallthru
        _
      %p6658 = scmp.le.s32.totalorder 2, %s21
      // Predicated region
      $region69: #{tpu_custom_call.1} parent=5 // pred_check
        %p6659 = pneg %p6658
      $region70: #{tpu_custom_call.1} parent=5 // pred_check_branch
        %6661 = sbr.rel (%p6659) target = $region72
      $region71: #{tpu_custom_call.1} parent=5 // pred_region
        %s6662 = ssub.s32 %s21, 2
        // Predicated region
        $region73: #{tpu_custom_call.1} parent=71 // pred_check
          %p6663 = pneg %p202
        $region74: #{tpu_custom_call.1} parent=71 // pred_check_branch
          %6665 = sbr.rel (%p6663) target = $region76
        $region75: #{tpu_custom_call.1} parent=71 // pred_region
          %s6666 = sand.u32 %s187, 1
          %s6667 = scalar_lea.sflag [#allocation5], %s6666
          %s6668 = sand.u32 %s187, 1
          %s6669 = smul.addr %s6668, 256
          %s6670 = scalar_lea.vmem [#allocation11], %s6669
          %6671 = dma.done %s6667, 4096
        $region76: #{tpu_custom_call.1} parent=71 // pred_fallthru
          _
      $region72: #{tpu_custom_call.1} parent=5 // pred_fallthru
        _
    $region6: #{tpu_custom_call.1} parent=1 // loop_footer
      %s25 = sadd.s32 1, %s21
    $region7: #{tpu_custom_call.1} parent=1 // loop_footer_branch
      %20 = sbr.rel target = $region3
    $region8: #{tpu_custom_call.1} parent=1 // loop_exit
      _
    %6672 = vsyncpa [#allocation4], 1
    %s6673 = scalar_lea.sflag [#allocation4], 1
    %6674 = vsyncpa %s6673, 1
    %6675 = vsyncpa [#allocation7], 1
    %6676 = vsyncpa [#allocation10], 1
    %6677 = vsyncpa [#allocation5], 1
    %s6678 = scalar_lea.sflag [#allocation5], 1
    %6679 = vsyncpa %s6678, 1

</llo_original>
